<compile_context>
chip_gen: v6e
topology: v6e:2x2x1
jax: 0.10.0
libtpu: 0.0.40
codegen_flags: <defaults>
</compile_context>

<pallas_src>
import jax
import jax.numpy as jnp
from jax import lax
from jax.experimental import pallas as pl
from jax.experimental.pallas import tpu as pltpu

EPS = 1e-5  # nn.LayerNorm default eps


def _norm(x, axis):
    """Single-pass LayerNorm core (no affine): (x - mean) * rsqrt(var + eps)."""
    mu = jnp.mean(x, axis=axis, keepdims=True)
    ex2 = jnp.mean(x * x, axis=axis, keepdims=True)
    return (x - mu) * lax.rsqrt(ex2 - mu * mu + EPS)


def mixer_block_kernel(x_ref,
                       w1t_ref, b1t_ref, w2t_ref, b2t_ref,
                       w1c_ref, b1c_ref, w2c_ref, b2c_ref,
                       o_ref):
    Bb, P, H = x_ref.shape
    bf16 = jnp.bfloat16

    for b in range(Bb):          # static unroll over the (small) batch block
        xb = x_ref[b]                                                 # [P, H] f32

        # ---------------- token mixing ----------------
        # LayerNorm over the patch axis (== last dim of the transposed tensor
        # in the PyTorch module; valid because P == H).  gamma/beta are folded
        # into w1t / b1t in the wrapper, so only the normalization runs here.
        xn = _norm(xb, axis=0).astype(bf16)                           # [P, H]
        h1 = jnp.dot(w1t_ref[...], xn,
                     preferred_element_type=jnp.float32) + b1t_ref[...]  # [T8, H]
        g1 = jax.nn.gelu(h1, approximate=True).astype(bf16)
        t2 = jnp.dot(w2t_ref[...], g1,
                     preferred_element_type=jnp.float32) + b2t_ref[...]  # [P, H]
        x1 = xb + t2                                                  # residual, f32

        # ---------------- channel mixing ----------------
        cn = _norm(x1, axis=1).astype(bf16)                           # [P, H]
        h2 = jnp.dot(cn, w1c_ref[...],
                     preferred_element_type=jnp.float32) + b1c_ref[...]  # [P, Cp]
        g2 = jax.nn.gelu(h2, approximate=True).astype(bf16)
        c2 = jnp.dot(g2, w2c_ref[...],
                     preferred_element_type=jnp.float32) + b2c_ref[...]  # [P, H]

        o_ref[b] = (x1 + c2).astype(o_ref.dtype)       # single output write


def _round_up(n, m):
    return ((n + m - 1) // m) * m


def _prep_params(params):
    """Fold the LayerNorm affines into the MLP weights/biases, pre-transpose
    for the kernel's matmul layouts, zero-pad hidden dims, cast to bf16."""
    (g_tok, b_tok, w1t, b1t, w2t, b2t,
     g_ch, b_ch, w1c, b1c, w2c, b2c) = [p.astype(jnp.float32) for p in params]
    T = w1t.shape[0]
    C = w1c.shape[0]
    T8 = _round_up(T, 8)      # T is an M/K dim in-kernel -> sublane multiple only
    Cp = _round_up(C, 128)    # lane dim of the channel-MLP intermediate
    bf16 = jnp.bfloat16

    # token MLP (weights are the LHS of the in-kernel matmuls)
    w1t_k = jnp.pad(w1t * g_tok, ((0, T8 - T), (0, 0))).astype(bf16)      # [T8, P]
    b1t_k = jnp.pad((b1t + b_tok @ w1t.T).T, ((0, T8 - T), (0, 0)))       # [T8, 1]
    w2t_k = jnp.pad(w2t, ((0, 0), (0, T8 - T))).astype(bf16)              # [P, T8]
    b2t_k = b2t.T                                                         # [P, 1]

    # channel MLP (weights are the RHS)
    w1c_k = jnp.pad((w1c * g_ch).T, ((0, 0), (0, Cp - C))).astype(bf16)   # [H, Cp]
    b1c_k = jnp.pad(b1c + b_ch @ w1c.T, ((0, 0), (0, Cp - C)))            # [1, Cp]
    w2c_k = jnp.pad(w2c.T, ((0, Cp - C), (0, 0))).astype(bf16)            # [Cp, H]
    b2c_k = b2c                                                           # [1, H]

    return [w1t_k, b1t_k, w2t_k, b2t_k, w1c_k, b1c_k, w2c_k, b2c_k]


def _pick_block_b(B, cap=16):
    """Largest divisor of B (<= cap) that still leaves >= 4 grid steps
    (>= 2 pipelined steps per TensorCore on v7x); relax if B is small."""
    divisors = [d for d in range(1, min(B, cap) + 1) if B % d == 0]
    for min_steps in (4, 2, 1):
        cands = [d for d in divisors if B // d >= min_steps]
        if cands:
            return max(cands)
    return 1


def mixer_block(x, params, *, block_b=None):
    """x: [B, P, H] float32; params: 12 arrays in PyTorch layout (see __main__)."""
    B, P, H = x.shape
    assert P == H, ("Faithful PyTorch semantics: the token-mixing LayerNorm(hidden_dim) "
                    "is applied to the transposed tensor, which requires "
                    "num_patches == hidden_dim")

    if block_b is None:
        block_b = _pick_block_b(B)
    assert B % block_b == 0
    grid = (B // block_b,)

    kparams = _prep_params(params)
    T = params[2].shape[0]   # unpadded tokens_mlp_dim
    C = params[8].shape[0]   # unpadded channels_mlp_dim

    def const_spec(shape):
        nd = len(shape)
        idx = lambda i: (0,) * nd
        try:   # single-buffer the grid-invariant weights/biases (VMEM savings)
            return pl.BlockSpec(shape, idx, pipeline_mode=pl.Buffered(1))
        except (TypeError, AttributeError):   # older jax without pipeline_mode
            return pl.BlockSpec(shape, idx)

    in_specs = [pl.BlockSpec((block_b, P, H), lambda i: (i, 0, 0))]
    in_specs += [const_spec(p.shape) for p in kparams]

    # Cost estimate with *unpadded* dims (2 flops per MAC, 2 matmuls per MLP).
    flops = 4 * B * P * H * (T + C)
    transcendentals = B * (T * H + P * C)           # GELU evaluations
    pbytes = sum(int(p.size) * p.dtype.itemsize for p in kparams)
    bytes_accessed = 2 * int(x.size) * x.dtype.itemsize + pbytes

    # VMEM budget: double-buffered x in/out blocks + weights + headroom for
    # intermediates / compiler temporaries; clamped for v7x's 64 MiB VMEM.
    xblk = block_b * P * H * 4
    vmem_limit = min(max(4 * xblk + 2 * pbytes + (8 << 20), 16 << 20), 64 << 20)

    return pl.pallas_call(
        mixer_block_kernel,
        out_shape=jax.ShapeDtypeStruct((B, P, H), jnp.float32),
        grid=grid,
        in_specs=in_specs,
        out_specs=pl.BlockSpec((block_b, P, H), lambda i: (i, 0, 0)),
        compiler_params=pltpu.CompilerParams(
            dimension_semantics=("parallel",),
            vmem_limit_bytes=vmem_limit),
        cost_estimate=pl.CostEstimate(flops=flops,
                                      transcendentals=transcendentals,
                                      bytes_accessed=bytes_accessed),
    )(x, *kparams)


def ref_forward(x, params):
    """Pure-JAX f32 / exact-erf reference mirroring the PyTorch forward exactly."""
    (g_tok, b_tok, w1t, b1t, w2t, b2t,
     g_ch, b_ch, w1c, b1c, w2c, b2c) = params

    def ln(v, g, b):
        mu = jnp.mean(v, axis=-1, keepdims=True)
        var = jnp.mean(jnp.square(v - mu), axis=-1, keepdims=True)
        return (v - mu) * lax.rsqrt(var + EPS) * g + b

    t = jnp.swapaxes(x, 1, 2)
    t = ln(t, g_tok, b_tok)
    h = jax.nn.gelu(t @ w1t.T + b1t, approximate=False)
    t2 = h @ w2t.T + b2t
    x1 = x + jnp.swapaxes(t2, 1, 2)
    c = ln(x1, g_ch, b_ch)
    h2 = jax.nn.gelu(c @ w1c.T + b1c, approximate=False)
    c2 = h2 @ w2c.T + b2c
    return x1 + c2


if __name__ == "__main__":
    # Shapes: num_patches P must equal hidden_dim H (module quirk, see note).
    # B=8 -> block_b=2 -> grid=(4,): >= 2 pipelined steps per TensorCore.
    B, P, H = 8, 128, 128
    T = 64     # tokens_mlp_dim   (only rounded up to a sublane multiple of 8)
    C = 256    # channels_mlp_dim

    key = jax.random.PRNGKey(0)
    ks = jax.random.split(key, 16)

    x = jax.random.normal(ks[0], (B, P, H), dtype=jnp.float32)

    def w(k, shape, scale=0.02):
        return (scale * jax.random.normal(k, shape)).astype(jnp.float32)

    params = [
        # token-mixing LayerNorm(hidden_dim) gamma/beta          (1, H)
        jnp.ones((1, H), jnp.float32) + w(ks[1], (1, H)),
        w(ks[2], (1, H)),
        # token-mixing MlpBlock: fc1 Linear(P -> T), fc2 Linear(T -> P)
        w(ks[3], (T, P)), w(ks[4], (1, T)),
        w(ks[5], (P, T)), w(ks[6], (1, P)),
        # channel-mixing LayerNorm(hidden_dim) gamma/beta        (1, H)
        jnp.ones((1, H), jnp.float32) + w(ks[7], (1, H)),
        w(ks[8], (1, H)),
        # channel-mixing MlpBlock: fc1 Linear(H -> C), fc2 Linear(C -> H)
        w(ks[9], (C, H)), w(ks[10], (1, C)),
        w(ks[11], (H, C)), w(ks[12], (1, H)),
    ]

    out = jax.block_until_ready(mixer_block(x, params))

    ref = ref_forward(x, params)
    max_err = float(jnp.max(jnp.abs(out - ref)))
    assert out.shape == (B, P, H) and out.dtype == jnp.float32
    # bf16 matmuls + tanh GELU + folded LN affine vs the f32/erf reference ->
    # small intentional deviation.
    assert max_err < 2e-2, f"mismatch vs reference: {max_err}"

    print("KERNEL_OK")
</pallas_src>

<mosaic_0001>
module attributes {stable_mosaic.version = 11 : i64} {
  func.func @mixer_block_kernel(%arg0: i32, %arg1: memref<2x128x128xf32, #tpu.memory_space<vmem>>, %arg2: memref<64x128xbf16, #tpu.memory_space<vmem>>, %arg3: memref<64x1xf32, #tpu.memory_space<vmem>>, %arg4: memref<128x64xbf16, #tpu.memory_space<vmem>>, %arg5: memref<128x1xf32, #tpu.memory_space<vmem>>, %arg6: memref<128x256xbf16, #tpu.memory_space<vmem>>, %arg7: memref<1x256xf32, #tpu.memory_space<vmem>>, %arg8: memref<256x128xbf16, #tpu.memory_space<vmem>>, %arg9: memref<1x128xf32, #tpu.memory_space<vmem>>, %arg10: memref<2x128x128xf32, #tpu.memory_space<vmem>>) attributes {dimension_semantics = [#tpu.dimension_semantics<parallel>], iteration_bounds = array<i64: 4>, scalar_prefetch = 0 : i64, scratch_operands = 0 : i64, tpu.core_type = #tpu.core_type<tc>, window_params = [{transform_indices = @transform_0, window_bounds = array<i64: 2, 128, 128>}, {pipeline_mode = #tpu.pipeline_mode<synchronous>, transform_indices = @transform_1, window_bounds = array<i64: 64, 128>}, {pipeline_mode = #tpu.pipeline_mode<synchronous>, transform_indices = @transform_2, window_bounds = array<i64: 64, 1>}, {pipeline_mode = #tpu.pipeline_mode<synchronous>, transform_indices = @transform_3, window_bounds = array<i64: 128, 64>}, {pipeline_mode = #tpu.pipeline_mode<synchronous>, transform_indices = @transform_4, window_bounds = array<i64: 128, 1>}, {pipeline_mode = #tpu.pipeline_mode<synchronous>, transform_indices = @transform_5, window_bounds = array<i64: 128, 256>}, {pipeline_mode = #tpu.pipeline_mode<synchronous>, transform_indices = @transform_6, window_bounds = array<i64: 1, 256>}, {pipeline_mode = #tpu.pipeline_mode<synchronous>, transform_indices = @transform_7, window_bounds = array<i64: 256, 128>}, {pipeline_mode = #tpu.pipeline_mode<synchronous>, transform_indices = @transform_8, window_bounds = array<i64: 1, 128>}, {transform_indices = @transform_9, window_bounds = array<i64: 2, 128, 128>}]} {
    %c0 = arith.constant 0 : index
    %c0_0 = arith.constant 0 : index
    %c0_1 = arith.constant 0 : index
    %0 = vector.load %arg1[%c0, %c0_0, %c0_1] : memref<2x128x128xf32, #tpu.memory_space<vmem>>, vector<1x128x128xf32>
    %1 = vector.shape_cast %0 : vector<1x128x128xf32> to vector<128x128xf32>
    %cst = arith.constant dense<0.000000e+00> : vector<128xf32>
    %2 = vector.multi_reduction <add>, %1, %cst [0] : vector<128x128xf32> to vector<128xf32>
    %3 = vector.shape_cast %2 : vector<128xf32> to vector<1x128xf32>
    %cst_2 = arith.constant 1.280000e+02 : f32
    %4 = vector.broadcast %cst_2 : f32 to vector<1x128xf32>
    %5 = arith.divf %3, %4 : vector<1x128xf32>
    %6 = arith.mulf %1, %1 : vector<128x128xf32>
    %cst_3 = arith.constant dense<0.000000e+00> : vector<128xf32>
    %7 = vector.multi_reduction <add>, %6, %cst_3 [0] : vector<128x128xf32> to vector<128xf32>
    %8 = vector.shape_cast %7 : vector<128xf32> to vector<1x128xf32>
    %cst_4 = arith.constant 1.280000e+02 : f32
    %9 = vector.broadcast %cst_4 : f32 to vector<1x128xf32>
    %10 = arith.divf %8, %9 : vector<1x128xf32>
    %11 = vector.broadcast %5 : vector<1x128xf32> to vector<128x128xf32>
    %12 = arith.subf %1, %11 : vector<128x128xf32>
    %13 = arith.mulf %5, %5 : vector<1x128xf32>
    %14 = arith.subf %10, %13 : vector<1x128xf32>
    %cst_5 = arith.constant 9.99999974E-6 : f32
    %15 = vector.broadcast %cst_5 : f32 to vector<1x128xf32>
    %16 = arith.addf %14, %15 : vector<1x128xf32>
    %17 = math.rsqrt %16 : vector<1x128xf32>
    %18 = vector.broadcast %17 : vector<1x128xf32> to vector<128x128xf32>
    %19 = arith.mulf %12, %18 : vector<128x128xf32>
    %20 = arith.truncf %19 : vector<128x128xf32> to vector<128x128xbf16>
    %c0_6 = arith.constant 0 : index
    %c0_7 = arith.constant 0 : index
    %21 = vector.load %arg2[%c0_6, %c0_7] : memref<64x128xbf16, #tpu.memory_space<vmem>>, vector<64x128xbf16>
    %cst_8 = arith.constant dense<0.000000e+00> : vector<64x128xf32>
    %22 = tpu.matmul %21, %20, %cst_8 {dimension_numbers = #tpu.dot_dimension_numbers<[1], [0], [0], [1], [0, 0, 1, 1], [], []>} : vector<64x128xbf16>, vector<128x128xbf16>, vector<64x128xf32> -> vector<64x128xf32>
    %c0_9 = arith.constant 0 : index
    %c0_10 = arith.constant 0 : index
    %23 = vector.load %arg3[%c0_9, %c0_10] : memref<64x1xf32, #tpu.memory_space<vmem>>, vector<64x1xf32>
    %24 = vector.broadcast %23 : vector<64x1xf32> to vector<64x128xf32>
    %25 = arith.addf %22, %24 : vector<64x128xf32>
    %26 = arith.mulf %25, %25 : vector<64x128xf32>
    %27 = arith.mulf %25, %26 : vector<64x128xf32>
    %cst_11 = arith.constant 4.471500e-02 : f32
    %28 = vector.broadcast %cst_11 : f32 to vector<64x128xf32>
    %29 = arith.mulf %28, %27 : vector<64x128xf32>
    %30 = arith.addf %25, %29 : vector<64x128xf32>
    %cst_12 = arith.constant 0.797884583 : f32
    %31 = vector.broadcast %cst_12 : f32 to vector<64x128xf32>
    %32 = arith.mulf %31, %30 : vector<64x128xf32>
    %33 = math.tanh %32 : vector<64x128xf32>
    %cst_13 = arith.constant 1.000000e+00 : f32
    %34 = vector.broadcast %cst_13 : f32 to vector<64x128xf32>
    %35 = arith.addf %34, %33 : vector<64x128xf32>
    %cst_14 = arith.constant 5.000000e-01 : f32
    %36 = vector.broadcast %cst_14 : f32 to vector<64x128xf32>
    %37 = arith.mulf %36, %35 : vector<64x128xf32>
    %38 = arith.mulf %25, %37 : vector<64x128xf32>
    %39 = arith.truncf %38 : vector<64x128xf32> to vector<64x128xbf16>
    %c0_15 = arith.constant 0 : index
    %c0_16 = arith.constant 0 : index
    %40 = vector.load %arg4[%c0_15, %c0_16] : memref<128x64xbf16, #tpu.memory_space<vmem>>, vector<128x64xbf16>
    %cst_17 = arith.constant dense<0.000000e+00> : vector<128x128xf32>
    %41 = tpu.matmul %40, %39, %cst_17 {dimension_numbers = #tpu.dot_dimension_numbers<[1], [0], [0], [1], [0, 0, 1, 1], [], []>} : vector<128x64xbf16>, vector<64x128xbf16>, vector<128x128xf32> -> vector<128x128xf32>
    %c0_18 = arith.constant 0 : index
    %c0_19 = arith.constant 0 : index
    %42 = vector.load %arg5[%c0_18, %c0_19] : memref<128x1xf32, #tpu.memory_space<vmem>>, vector<128x1xf32>
    %43 = vector.broadcast %42 : vector<128x1xf32> to vector<128x128xf32>
    %44 = arith.addf %41, %43 : vector<128x128xf32>
    %45 = arith.addf %1, %44 : vector<128x128xf32>
    %cst_20 = arith.constant dense<0.000000e+00> : vector<128xf32>
    %46 = vector.multi_reduction <add>, %45, %cst_20 [1] : vector<128x128xf32> to vector<128xf32>
    %47 = vector.shape_cast %46 : vector<128xf32> to vector<128x1xf32>
    %cst_21 = arith.constant 1.280000e+02 : f32
    %48 = vector.broadcast %cst_21 : f32 to vector<128x1xf32>
    %49 = arith.divf %47, %48 : vector<128x1xf32>
    %50 = arith.mulf %45, %45 : vector<128x128xf32>
    %cst_22 = arith.constant dense<0.000000e+00> : vector<128xf32>
    %51 = vector.multi_reduction <add>, %50, %cst_22 [1] : vector<128x128xf32> to vector<128xf32>
    %52 = vector.shape_cast %51 : vector<128xf32> to vector<128x1xf32>
    %cst_23 = arith.constant 1.280000e+02 : f32
    %53 = vector.broadcast %cst_23 : f32 to vector<128x1xf32>
    %54 = arith.divf %52, %53 : vector<128x1xf32>
    %55 = vector.broadcast %49 : vector<128x1xf32> to vector<128x128xf32>
    %56 = arith.subf %45, %55 : vector<128x128xf32>
    %57 = arith.mulf %49, %49 : vector<128x1xf32>
    %58 = arith.subf %54, %57 : vector<128x1xf32>
    %cst_24 = arith.constant 9.99999974E-6 : f32
    %59 = vector.broadcast %cst_24 : f32 to vector<128x1xf32>
    %60 = arith.addf %58, %59 : vector<128x1xf32>
    %61 = math.rsqrt %60 : vector<128x1xf32>
    %62 = vector.broadcast %61 : vector<128x1xf32> to vector<128x128xf32>
    %63 = arith.mulf %56, %62 : vector<128x128xf32>
    %64 = arith.truncf %63 : vector<128x128xf32> to vector<128x128xbf16>
    %c0_25 = arith.constant 0 : index
    %c0_26 = arith.constant 0 : index
    %65 = vector.load %arg6[%c0_25, %c0_26] : memref<128x256xbf16, #tpu.memory_space<vmem>>, vector<128x256xbf16>
    %cst_27 = arith.constant dense<0.000000e+00> : vector<128x256xf32>
    %66 = tpu.matmul %64, %65, %cst_27 {dimension_numbers = #tpu.dot_dimension_numbers<[1], [0], [0], [1], [0, 0, 1, 1], [], []>} : vector<128x128xbf16>, vector<128x256xbf16>, vector<128x256xf32> -> vector<128x256xf32>
    %c0_28 = arith.constant 0 : index
    %c0_29 = arith.constant 0 : index
    %67 = vector.load %arg7[%c0_28, %c0_29] : memref<1x256xf32, #tpu.memory_space<vmem>>, vector<1x256xf32>
    %68 = vector.broadcast %67 : vector<1x256xf32> to vector<128x256xf32>
    %69 = arith.addf %66, %68 : vector<128x256xf32>
    %70 = arith.mulf %69, %69 : vector<128x256xf32>
    %71 = arith.mulf %69, %70 : vector<128x256xf32>
    %cst_30 = arith.constant 4.471500e-02 : f32
    %72 = vector.broadcast %cst_30 : f32 to vector<128x256xf32>
    %73 = arith.mulf %72, %71 : vector<128x256xf32>
    %74 = arith.addf %69, %73 : vector<128x256xf32>
    %cst_31 = arith.constant 0.797884583 : f32
    %75 = vector.broadcast %cst_31 : f32 to vector<128x256xf32>
    %76 = arith.mulf %75, %74 : vector<128x256xf32>
    %77 = math.tanh %76 : vector<128x256xf32>
    %cst_32 = arith.constant 1.000000e+00 : f32
    %78 = vector.broadcast %cst_32 : f32 to vector<128x256xf32>
    %79 = arith.addf %78, %77 : vector<128x256xf32>
    %cst_33 = arith.constant 5.000000e-01 : f32
    %80 = vector.broadcast %cst_33 : f32 to vector<128x256xf32>
    %81 = arith.mulf %80, %79 : vector<128x256xf32>
    %82 = arith.mulf %69, %81 : vector<128x256xf32>
    %83 = arith.truncf %82 : vector<128x256xf32> to vector<128x256xbf16>
    %c0_34 = arith.constant 0 : index
    %c0_35 = arith.constant 0 : index
    %84 = vector.load %arg8[%c0_34, %c0_35] : memref<256x128xbf16, #tpu.memory_space<vmem>>, vector<256x128xbf16>
    %cst_36 = arith.constant dense<0.000000e+00> : vector<128x128xf32>
    %85 = tpu.matmul %83, %84, %cst_36 {dimension_numbers = #tpu.dot_dimension_numbers<[1], [0], [0], [1], [0, 0, 1, 1], [], []>} : vector<128x256xbf16>, vector<256x128xbf16>, vector<128x128xf32> -> vector<128x128xf32>
    %c0_37 = arith.constant 0 : index
    %c0_38 = arith.constant 0 : index
    %86 = vector.load %arg9[%c0_37, %c0_38] : memref<1x128xf32, #tpu.memory_space<vmem>>, vector<1x128xf32>
    %87 = vector.broadcast %86 : vector<1x128xf32> to vector<128x128xf32>
    %88 = arith.addf %85, %87 : vector<128x128xf32>
    %89 = arith.addf %45, %88 : vector<128x128xf32>
    %c0_39 = arith.constant 0 : index
    %c0_40 = arith.constant 0 : index
    %c0_41 = arith.constant 0 : index
    %90 = vector.load %arg10[%c0_39, %c0_40, %c0_41] : memref<2x128x128xf32, #tpu.memory_space<vmem>>, vector<1x128x128xf32>
    %91 = vector.shape_cast %90 : vector<1x128x128xf32> to vector<128x128xf32>
    %92 = vector.shape_cast %89 : vector<128x128xf32> to vector<1x128x128xf32>
    tpu.vector_store %arg10[%c0_39, %c0_40, %c0_41], %92 {strides = array<i32>} : memref<2x128x128xf32, #tpu.memory_space<vmem>>, vector<1x128x128xf32>,
    %c1 = arith.constant 1 : index
    %c0_42 = arith.constant 0 : index
    %c0_43 = arith.constant 0 : index
    %93 = vector.load %arg1[%c1, %c0_42, %c0_43] : memref<2x128x128xf32, #tpu.memory_space<vmem>>, vector<1x128x128xf32>
    %94 = vector.shape_cast %93 : vector<1x128x128xf32> to vector<128x128xf32>
    %cst_44 = arith.constant dense<0.000000e+00> : vector<128xf32>
    %95 = vector.multi_reduction <add>, %94, %cst_44 [0] : vector<128x128xf32> to vector<128xf32>
    %96 = vector.shape_cast %95 : vector<128xf32> to vector<1x128xf32>
    %cst_45 = arith.constant 1.280000e+02 : f32
    %97 = vector.broadcast %cst_45 : f32 to vector<1x128xf32>
    %98 = arith.divf %96, %97 : vector<1x128xf32>
    %99 = arith.mulf %94, %94 : vector<128x128xf32>
    %cst_46 = arith.constant dense<0.000000e+00> : vector<128xf32>
    %100 = vector.multi_reduction <add>, %99, %cst_46 [0] : vector<128x128xf32> to vector<128xf32>
    %101 = vector.shape_cast %100 : vector<128xf32> to vector<1x128xf32>
    %cst_47 = arith.constant 1.280000e+02 : f32
    %102 = vector.broadcast %cst_47 : f32 to vector<1x128xf32>
    %103 = arith.divf %101, %102 : vector<1x128xf32>
    %104 = vector.broadcast %98 : vector<1x128xf32> to vector<128x128xf32>
    %105 = arith.subf %94, %104 : vector<128x128xf32>
    %106 = arith.mulf %98, %98 : vector<1x128xf32>
    %107 = arith.subf %103, %106 : vector<1x128xf32>
    %cst_48 = arith.constant 9.99999974E-6 : f32
    %108 = vector.broadcast %cst_48 : f32 to vector<1x128xf32>
    %109 = arith.addf %107, %108 : vector<1x128xf32>
    %110 = math.rsqrt %109 : vector<1x128xf32>
    %111 = vector.broadcast %110 : vector<1x128xf32> to vector<128x128xf32>
    %112 = arith.mulf %105, %111 : vector<128x128xf32>
    %113 = arith.truncf %112 : vector<128x128xf32> to vector<128x128xbf16>
    %c0_49 = arith.constant 0 : index
    %c0_50 = arith.constant 0 : index
    %114 = vector.load %arg2[%c0_49, %c0_50] : memref<64x128xbf16, #tpu.memory_space<vmem>>, vector<64x128xbf16>
    %cst_51 = arith.constant dense<0.000000e+00> : vector<64x128xf32>
    %115 = tpu.matmul %114, %113, %cst_51 {dimension_numbers = #tpu.dot_dimension_numbers<[1], [0], [0], [1], [0, 0, 1, 1], [], []>} : vector<64x128xbf16>, vector<128x128xbf16>, vector<64x128xf32> -> vector<64x128xf32>
    %c0_52 = arith.constant 0 : index
    %c0_53 = arith.constant 0 : index
    %116 = vector.load %arg3[%c0_52, %c0_53] : memref<64x1xf32, #tpu.memory_space<vmem>>, vector<64x1xf32>
    %117 = vector.broadcast %116 : vector<64x1xf32> to vector<64x128xf32>
    %118 = arith.addf %115, %117 : vector<64x128xf32>
    %119 = arith.mulf %118, %118 : vector<64x128xf32>
    %120 = arith.mulf %118, %119 : vector<64x128xf32>
    %cst_54 = arith.constant 4.471500e-02 : f32
    %121 = vector.broadcast %cst_54 : f32 to vector<64x128xf32>
    %122 = arith.mulf %121, %120 : vector<64x128xf32>
    %123 = arith.addf %118, %122 : vector<64x128xf32>
    %cst_55 = arith.constant 0.797884583 : f32
    %124 = vector.broadcast %cst_55 : f32 to vector<64x128xf32>
    %125 = arith.mulf %124, %123 : vector<64x128xf32>
    %126 = math.tanh %125 : vector<64x128xf32>
    %cst_56 = arith.constant 1.000000e+00 : f32
    %127 = vector.broadcast %cst_56 : f32 to vector<64x128xf32>
    %128 = arith.addf %127, %126 : vector<64x128xf32>
    %cst_57 = arith.constant 5.000000e-01 : f32
    %129 = vector.broadcast %cst_57 : f32 to vector<64x128xf32>
    %130 = arith.mulf %129, %128 : vector<64x128xf32>
    %131 = arith.mulf %118, %130 : vector<64x128xf32>
    %132 = arith.truncf %131 : vector<64x128xf32> to vector<64x128xbf16>
    %c0_58 = arith.constant 0 : index
    %c0_59 = arith.constant 0 : index
    %133 = vector.load %arg4[%c0_58, %c0_59] : memref<128x64xbf16, #tpu.memory_space<vmem>>, vector<128x64xbf16>
    %cst_60 = arith.constant dense<0.000000e+00> : vector<128x128xf32>
    %134 = tpu.matmul %133, %132, %cst_60 {dimension_numbers = #tpu.dot_dimension_numbers<[1], [0], [0], [1], [0, 0, 1, 1], [], []>} : vector<128x64xbf16>, vector<64x128xbf16>, vector<128x128xf32> -> vector<128x128xf32>
    %c0_61 = arith.constant 0 : index
    %c0_62 = arith.constant 0 : index
    %135 = vector.load %arg5[%c0_61, %c0_62] : memref<128x1xf32, #tpu.memory_space<vmem>>, vector<128x1xf32>
    %136 = vector.broadcast %135 : vector<128x1xf32> to vector<128x128xf32>
    %137 = arith.addf %134, %136 : vector<128x128xf32>
    %138 = arith.addf %94, %137 : vector<128x128xf32>
    %cst_63 = arith.constant dense<0.000000e+00> : vector<128xf32>
    %139 = vector.multi_reduction <add>, %138, %cst_63 [1] : vector<128x128xf32> to vector<128xf32>
    %140 = vector.shape_cast %139 : vector<128xf32> to vector<128x1xf32>
    %cst_64 = arith.constant 1.280000e+02 : f32
    %141 = vector.broadcast %cst_64 : f32 to vector<128x1xf32>
    %142 = arith.divf %140, %141 : vector<128x1xf32>
    %143 = arith.mulf %138, %138 : vector<128x128xf32>
    %cst_65 = arith.constant dense<0.000000e+00> : vector<128xf32>
    %144 = vector.multi_reduction <add>, %143, %cst_65 [1] : vector<128x128xf32> to vector<128xf32>
    %145 = vector.shape_cast %144 : vector<128xf32> to vector<128x1xf32>
    %cst_66 = arith.constant 1.280000e+02 : f32
    %146 = vector.broadcast %cst_66 : f32 to vector<128x1xf32>
    %147 = arith.divf %145, %146 : vector<128x1xf32>
    %148 = vector.broadcast %142 : vector<128x1xf32> to vector<128x128xf32>
    %149 = arith.subf %138, %148 : vector<128x128xf32>
    %150 = arith.mulf %142, %142 : vector<128x1xf32>
    %151 = arith.subf %147, %150 : vector<128x1xf32>
    %cst_67 = arith.constant 9.99999974E-6 : f32
    %152 = vector.broadcast %cst_67 : f32 to vector<128x1xf32>
    %153 = arith.addf %151, %152 : vector<128x1xf32>
    %154 = math.rsqrt %153 : vector<128x1xf32>
    %155 = vector.broadcast %154 : vector<128x1xf32> to vector<128x128xf32>
    %156 = arith.mulf %149, %155 : vector<128x128xf32>
    %157 = arith.truncf %156 : vector<128x128xf32> to vector<128x128xbf16>
    %c0_68 = arith.constant 0 : index
    %c0_69 = arith.constant 0 : index
    %158 = vector.load %arg6[%c0_68, %c0_69] : memref<128x256xbf16, #tpu.memory_space<vmem>>, vector<128x256xbf16>
    %cst_70 = arith.constant dense<0.000000e+00> : vector<128x256xf32>
    %159 = tpu.matmul %157, %158, %cst_70 {dimension_numbers = #tpu.dot_dimension_numbers<[1], [0], [0], [1], [0, 0, 1, 1], [], []>} : vector<128x128xbf16>, vector<128x256xbf16>, vector<128x256xf32> -> vector<128x256xf32>
    %c0_71 = arith.constant 0 : index
    %c0_72 = arith.constant 0 : index
    %160 = vector.load %arg7[%c0_71, %c0_72] : memref<1x256xf32, #tpu.memory_space<vmem>>, vector<1x256xf32>
    %161 = vector.broadcast %160 : vector<1x256xf32> to vector<128x256xf32>
    %162 = arith.addf %159, %161 : vector<128x256xf32>
    %163 = arith.mulf %162, %162 : vector<128x256xf32>
    %164 = arith.mulf %162, %163 : vector<128x256xf32>
    %cst_73 = arith.constant 4.471500e-02 : f32
    %165 = vector.broadcast %cst_73 : f32 to vector<128x256xf32>
    %166 = arith.mulf %165, %164 : vector<128x256xf32>
    %167 = arith.addf %162, %166 : vector<128x256xf32>
    %cst_74 = arith.constant 0.797884583 : f32
    %168 = vector.broadcast %cst_74 : f32 to vector<128x256xf32>
    %169 = arith.mulf %168, %167 : vector<128x256xf32>
    %170 = math.tanh %169 : vector<128x256xf32>
    %cst_75 = arith.constant 1.000000e+00 : f32
    %171 = vector.broadcast %cst_75 : f32 to vector<128x256xf32>
    %172 = arith.addf %171, %170 : vector<128x256xf32>
    %cst_76 = arith.constant 5.000000e-01 : f32
    %173 = vector.broadcast %cst_76 : f32 to vector<128x256xf32>
    %174 = arith.mulf %173, %172 : vector<128x256xf32>
    %175 = arith.mulf %162, %174 : vector<128x256xf32>
    %176 = arith.truncf %175 : vector<128x256xf32> to vector<128x256xbf16>
    %c0_77 = arith.constant 0 : index
    %c0_78 = arith.constant 0 : index
    %177 = vector.load %arg8[%c0_77, %c0_78] : memref<256x128xbf16, #tpu.memory_space<vmem>>, vector<256x128xbf16>
    %cst_79 = arith.constant dense<0.000000e+00> : vector<128x128xf32>
    %178 = tpu.matmul %176, %177, %cst_79 {dimension_numbers = #tpu.dot_dimension_numbers<[1], [0], [0], [1], [0, 0, 1, 1], [], []>} : vector<128x256xbf16>, vector<256x128xbf16>, vector<128x128xf32> -> vector<128x128xf32>
    %c0_80 = arith.constant 0 : index
    %c0_81 = arith.constant 0 : index
    %179 = vector.load %arg9[%c0_80, %c0_81] : memref<1x128xf32, #tpu.memory_space<vmem>>, vector<1x128xf32>
    %180 = vector.broadcast %179 : vector<1x128xf32> to vector<128x128xf32>
    %181 = arith.addf %178, %180 : vector<128x128xf32>
    %182 = arith.addf %138, %181 : vector<128x128xf32>
    %c1_82 = arith.constant 1 : index
    %c0_83 = arith.constant 0 : index
    %c0_84 = arith.constant 0 : index
    %183 = vector.load %arg10[%c1_82, %c0_83, %c0_84] : memref<2x128x128xf32, #tpu.memory_space<vmem>>, vector<1x128x128xf32>
    %184 = vector.shape_cast %183 : vector<1x128x128xf32> to vector<128x128xf32>
    %185 = vector.shape_cast %182 : vector<128x128xf32> to vector<1x128x128xf32>
    tpu.vector_store %arg10[%c1_82, %c0_83, %c0_84], %185 {strides = array<i32>} : memref<2x128x128xf32, #tpu.memory_space<vmem>>, vector<1x128x128xf32>,
    return
  }
  func.func @transform_0(%arg0: i32) -> (i32, i32, i32) {
    %c0_i32 = arith.constant 0 : i32
    %c0_i32_0 = arith.constant 0 : i32
    %c0_i32_1 = arith.constant 0 : i32
    return %arg0, %c0_i32, %c0_i32_0 : i32, i32, i32
  }
  func.func @transform_1(%arg0: i32) -> (i32, i32) {
    %c0_i32 = arith.constant 0 : i32
    %c0_i32_0 = arith.constant 0 : i32
    %c0_i32_1 = arith.constant 0 : i32
    return %c0_i32, %c0_i32_0 : i32, i32
  }
  func.func @transform_2(%arg0: i32) -> (i32, i32) {
    %c0_i32 = arith.constant 0 : i32
    %c0_i32_0 = arith.constant 0 : i32
    %c0_i32_1 = arith.constant 0 : i32
    return %c0_i32, %c0_i32_0 : i32, i32
  }
  func.func @transform_3(%arg0: i32) -> (i32, i32) {
    %c0_i32 = arith.constant 0 : i32
    %c0_i32_0 = arith.constant 0 : i32
    %c0_i32_1 = arith.constant 0 : i32
    return %c0_i32, %c0_i32_0 : i32, i32
  }
  func.func @transform_4(%arg0: i32) -> (i32, i32) {
    %c0_i32 = arith.constant 0 : i32
    %c0_i32_0 = arith.constant 0 : i32
    %c0_i32_1 = arith.constant 0 : i32
    return %c0_i32, %c0_i32_0 : i32, i32
  }
  func.func @transform_5(%arg0: i32) -> (i32, i32) {
    %c0_i32 = arith.constant 0 : i32
    %c0_i32_0 = arith.constant 0 : i32
    %c0_i32_1 = arith.constant 0 : i32
    return %c0_i32, %c0_i32_0 : i32, i32
  }
  func.func @transform_6(%arg0: i32) -> (i32, i32) {
    %c0_i32 = arith.constant 0 : i32
    %c0_i32_0 = arith.constant 0 : i32
    %c0_i32_1 = arith.constant 0 : i32
    return %c0_i32, %c0_i32_0 : i32, i32
  }
  func.func @transform_7(%arg0: i32) -> (i32, i32) {
    %c0_i32 = arith.constant 0 : i32
    %c0_i32_0 = arith.constant 0 : i32
    %c0_i32_1 = arith.constant 0 : i32
    return %c0_i32, %c0_i32_0 : i32, i32
  }
  func.func @transform_8(%arg0: i32) -> (i32, i32) {
    %c0_i32 = arith.constant 0 : i32
    %c0_i32_0 = arith.constant 0 : i32
    %c0_i32_1 = arith.constant 0 : i32
    return %c0_i32, %c0_i32_0 : i32, i32
  }
  func.func @transform_9(%arg0: i32) -> (i32, i32, i32) {
    %c0_i32 = arith.constant 0 : i32
    %c0_i32_0 = arith.constant 0 : i32
    %c0_i32_1 = arith.constant 0 : i32
    return %arg0, %c0_i32, %c0_i32_0 : i32, i32, i32
  }
}

</mosaic_0001>

<llo_original>
// kernel: tpu_custom_call.1
$region0: #{tpu_custom_call.1}
  #allocation0 [shape = 'u32[]', space=smem, size = 0x4, offset = 0x4, fixed_abs, tag = 'smem constant byte address 0x4 - core index']
  #allocation1 [shape = 'u32[144,128]{1,0:T(1,128)}', space=vmem, size = 0x12000, scoped, tag = 'internal scratch']
  %s0 = inlined_call_operand.hbm [shape: f32[8,128,128], index: 0, kind: input, shape index: {}]
  %s1 = inlined_call_operand.hbm [shape: bf16[64,128], index: 1, kind: input, shape index: {}]
  %s2 = inlined_call_operand.vmem [shape: f32[64,1], index: 2, kind: input, shape index: {}]
  %s3 = inlined_call_operand.vmem [shape: bf16[128,64], index: 3, kind: input, shape index: {}]
  %s4 = inlined_call_operand.vmem [shape: f32[128,1], index: 4, kind: input, shape index: {}]
  %s5 = inlined_call_operand.vmem [shape: bf16[128,256], index: 5, kind: input, shape index: {}]
  %s6 = inlined_call_operand.vmem [shape: f32[1,256], index: 6, kind: input, shape index: {}]
  %s7 = inlined_call_operand.vmem [shape: bf16[256,128], index: 7, kind: input, shape index: {}]
  %s8 = inlined_call_operand.vmem [shape: f32[1,128], index: 8, kind: input, shape index: {}]
  %s9 = inlined_call_operand.hbm [shape: f32[8,128,128], index: 9, kind: output, shape index: {}]
  %s10 = sld [smem:[#allocation0]]
  $region77: #{tpu_custom_call.1} parent=0
    _
  %s12 = ssub.s32 1, %s10
  %s13 = scalar_select 0, %s12, %s10
  $region1: #{tpu_custom_call.1} parent=0
    #allocation2 [shape = 'u8[262144]{0}', space=vmem, size = 0x40000, scoped, tag = 'input window, operand 0']
    #allocation3 [shape = 's32[2]{0}', space=sflag, size = 0x8, scoped, tag = 'scoped memory for tpu_custom_call.1']
    #allocation4 [shape = 's32[2]{0}', space=sflag, size = 0x8, scoped, tag = 'scoped memory for tpu_custom_call.1']
    #allocation5 [shape = 'u8[16384]{0}', space=vmem, size = 0x4000, scoped, tag = 'input window, operand 1, single buffered']
    #allocation6 [shape = 's32[1]{0}', space=sflag, size = 0x4, scoped, tag = 'scoped memory for tpu_custom_call.1']
    #allocation7 [shape = 'u8[262144]{0}', space=vmem, size = 0x40000, scoped, tag = 'output window, operand 0']
    %14 = vsyncpa [#allocation3], 0
    %s15 = scalar_lea.sflag [#allocation3], 1
    %16 = vsyncpa %s15, 0
    %17 = vsyncpa [#allocation6], 0
    %18 = vsyncpa [#allocation4], 0
    %s19 = scalar_lea.sflag [#allocation4], 1
    %20 = vsyncpa %s19, 0
    loop: start=0, step=1, limit=6
    $region2: #{tpu_custom_call.1} parent=1 // loop_pre_header
      _
    $region3: #{tpu_custom_call.1} parent=1 // loop_header
      %s22 = sphi 0, %s26
      %p23 = scmp.ge.s32.totalorder %s22, 6
      %s32 = sphi 0, %s34
      %s35 = sphi 0, %s32
      %s36 = sphi 0, %s35
      %s52 = sphi 0, %s36
      %s56 = sphi 0, %s56
      %s58 = sphi 0, %s56
      %s59 = sphi 0, %s58
      %s73 = sphi 0, %s59
      %s77 = sphi 0, %s77
      %s79 = sphi 0, %s77
      %s80 = sphi 0, %s79
      %s94 = sphi 0, %s80
      %s98 = sphi 0, %s98
      %s100 = sphi 0, %s98
      %s101 = sphi 0, %s100
      %s115 = sphi 0, %s101
      %s119 = sphi 0, %s119
      %s121 = sphi 0, %s119
      %s122 = sphi 0, %s121
      %s136 = sphi 0, %s122
      %s140 = sphi 0, %s140
      %s142 = sphi 0, %s140
      %s143 = sphi 0, %s142
      %s157 = sphi 0, %s143
      %s161 = sphi 0, %s161
      %s163 = sphi 0, %s161
      %s164 = sphi 0, %s163
      %s178 = sphi 0, %s164
      %s182 = sphi 0, %s182
      %s184 = sphi 0, %s182
      %s185 = sphi 0, %s184
      %s199 = sphi 0, %s185
      %s203 = sphi 0, %s203
      %s205 = sphi 0, %s203
      %s206 = sphi 0, %s205
      %s220 = sphi 0, %s206
      %s226 = sphi 0, %s228
      %s229 = sphi 0, %s226
      %s230 = sphi 0, %s229
      %s246 = sphi 0, %s230
    $region4: #{tpu_custom_call.1} parent=1 // loop_header_branch
      %25 = sbr.rel (%p23) target = $region8
    $region5: #{tpu_custom_call.1} parent=1 // loop_body
      %s27 = ssub.s32 %s22, 1
      %s28 = ssub.s32 %s22, 2
      %s29 = sadd.s32 %s22, 1
      %s30 = ssub.s32 %s22, %s29
      %p31 = scmp.eq.s32.totalorder %s30, 0
      %s33 = sadd.s32 %s32, 1
      %s34 = scalar_select %p31, %s32, %s33
      %p37 = pneg %p31
      %p38 = scmp.eq.s32.totalorder %s22, 3
      %p39 = por %p37, %p38
      %p40 = scmp.ne.s32.totalorder %s32, %s35
      %p41 = scmp.eq.s32.totalorder %s22, 0
      %p42 = por %p40, %p41
      %p43 = scmp.ne.s32.totalorder %s32, %s35
      %p44 = scmp.eq.s32.totalorder %s27, 3
      %p45 = por %p43, %p44
      %p46 = scmp.ne.s32.totalorder %s35, %s36
      %p47 = scmp.eq.s32.totalorder %s27, 0
      %p48 = por %p46, %p47
      %p49 = scmp.ne.s32.totalorder %s35, %s36
      %p50 = scmp.eq.s32.totalorder %s28, 3
      %p51 = por %p49, %p50
      %p53 = scmp.ne.s32.totalorder %s36, %s52
      %p54 = scmp.eq.s32.totalorder %s28, 0
      %p55 = por %p53, %p54
      %s57 = sadd.s32 %s56, 1
      %p60 = scmp.eq.s32.totalorder %s22, 3
      %p61 = scmp.ne.s32.totalorder %s56, %s58
      %p62 = scmp.eq.s32.totalorder %s22, 0
      %p63 = por %p61, %p62
      %p64 = scmp.ne.s32.totalorder %s56, %s58
      %p65 = scmp.eq.s32.totalorder %s27, 3
      %p66 = por %p64, %p65
      %p67 = scmp.ne.s32.totalorder %s58, %s59
      %p68 = scmp.eq.s32.totalorder %s27, 0
      %p69 = por %p67, %p68
      %p70 = scmp.ne.s32.totalorder %s58, %s59
      %p71 = scmp.eq.s32.totalorder %s28, 3
      %p72 = por %p70, %p71
      %p74 = scmp.ne.s32.totalorder %s59, %s73
      %p75 = scmp.eq.s32.totalorder %s28, 0
      %p76 = por %p74, %p75
      %s78 = sadd.s32 %s77, 1
      %p81 = scmp.eq.s32.totalorder %s22, 3
      %p82 = scmp.ne.s32.totalorder %s77, %s79
      %p83 = scmp.eq.s32.totalorder %s22, 0
      %p84 = por %p82, %p83
      %p85 = scmp.ne.s32.totalorder %s77, %s79
      %p86 = scmp.eq.s32.totalorder %s27, 3
      %p87 = por %p85, %p86
      %p88 = scmp.ne.s32.totalorder %s79, %s80
      %p89 = scmp.eq.s32.totalorder %s27, 0
      %p90 = por %p88, %p89
      %p91 = scmp.ne.s32.totalorder %s79, %s80
      %p92 = scmp.eq.s32.totalorder %s28, 3
      %p93 = por %p91, %p92
      %p95 = scmp.ne.s32.totalorder %s80, %s94
      %p96 = scmp.eq.s32.totalorder %s28, 0
      %p97 = por %p95, %p96
      %s99 = sadd.s32 %s98, 1
      %p102 = scmp.eq.s32.totalorder %s22, 3
      %p103 = scmp.ne.s32.totalorder %s98, %s100
      %p104 = scmp.eq.s32.totalorder %s22, 0
      %p105 = por %p103, %p104
      %p106 = scmp.ne.s32.totalorder %s98, %s100
      %p107 = scmp.eq.s32.totalorder %s27, 3
      %p108 = por %p106, %p107
      %p109 = scmp.ne.s32.totalorder %s100, %s101
      %p110 = scmp.eq.s32.totalorder %s27, 0
      %p111 = por %p109, %p110
      %p112 = scmp.ne.s32.totalorder %s100, %s101
      %p113 = scmp.eq.s32.totalorder %s28, 3
      %p114 = por %p112, %p113
      %p116 = scmp.ne.s32.totalorder %s101, %s115
      %p117 = scmp.eq.s32.totalorder %s28, 0
      %p118 = por %p116, %p117
      %s120 = sadd.s32 %s119, 1
      %p123 = scmp.eq.s32.totalorder %s22, 3
      %p124 = scmp.ne.s32.totalorder %s119, %s121
      %p125 = scmp.eq.s32.totalorder %s22, 0
      %p126 = por %p124, %p125
      %p127 = scmp.ne.s32.totalorder %s119, %s121
      %p128 = scmp.eq.s32.totalorder %s27, 3
      %p129 = por %p127, %p128
      %p130 = scmp.ne.s32.totalorder %s121, %s122
      %p131 = scmp.eq.s32.totalorder %s27, 0
      %p132 = por %p130, %p131
      %p133 = scmp.ne.s32.totalorder %s121, %s122
      %p134 = scmp.eq.s32.totalorder %s28, 3
      %p135 = por %p133, %p134
      %p137 = scmp.ne.s32.totalorder %s122, %s136
      %p138 = scmp.eq.s32.totalorder %s28, 0
      %p139 = por %p137, %p138
      %s141 = sadd.s32 %s140, 1
      %p144 = scmp.eq.s32.totalorder %s22, 3
      %p145 = scmp.ne.s32.totalorder %s140, %s142
      %p146 = scmp.eq.s32.totalorder %s22, 0
      %p147 = por %p145, %p146
      %p148 = scmp.ne.s32.totalorder %s140, %s142
      %p149 = scmp.eq.s32.totalorder %s27, 3
      %p150 = por %p148, %p149
      %p151 = scmp.ne.s32.totalorder %s142, %s143
      %p152 = scmp.eq.s32.totalorder %s27, 0
      %p153 = por %p151, %p152
      %p154 = scmp.ne.s32.totalorder %s142, %s143
      %p155 = scmp.eq.s32.totalorder %s28, 3
      %p156 = por %p154, %p155
      %p158 = scmp.ne.s32.totalorder %s143, %s157
      %p159 = scmp.eq.s32.totalorder %s28, 0
      %p160 = por %p158, %p159
      %s162 = sadd.s32 %s161, 1
      %p165 = scmp.eq.s32.totalorder %s22, 3
      %p166 = scmp.ne.s32.totalorder %s161, %s163
      %p167 = scmp.eq.s32.totalorder %s22, 0
      %p168 = por %p166, %p167
      %p169 = scmp.ne.s32.totalorder %s161, %s163
      %p170 = scmp.eq.s32.totalorder %s27, 3
      %p171 = por %p169, %p170
      %p172 = scmp.ne.s32.totalorder %s163, %s164
      %p173 = scmp.eq.s32.totalorder %s27, 0
      %p174 = por %p172, %p173
      %p175 = scmp.ne.s32.totalorder %s163, %s164
      %p176 = scmp.eq.s32.totalorder %s28, 3
      %p177 = por %p175, %p176
      %p179 = scmp.ne.s32.totalorder %s164, %s178
      %p180 = scmp.eq.s32.totalorder %s28, 0
      %p181 = por %p179, %p180
      %s183 = sadd.s32 %s182, 1
      %p186 = scmp.eq.s32.totalorder %s22, 3
      %p187 = scmp.ne.s32.totalorder %s182, %s184
      %p188 = scmp.eq.s32.totalorder %s22, 0
      %p189 = por %p187, %p188
      %p190 = scmp.ne.s32.totalorder %s182, %s184
      %p191 = scmp.eq.s32.totalorder %s27, 3
      %p192 = por %p190, %p191
      %p193 = scmp.ne.s32.totalorder %s184, %s185
      %p194 = scmp.eq.s32.totalorder %s27, 0
      %p195 = por %p193, %p194
      %p196 = scmp.ne.s32.totalorder %s184, %s185
      %p197 = scmp.eq.s32.totalorder %s28, 3
      %p198 = por %p196, %p197
      %p200 = scmp.ne.s32.totalorder %s185, %s199
      %p201 = scmp.eq.s32.totalorder %s28, 0
      %p202 = por %p200, %p201
      %s204 = sadd.s32 %s203, 1
      %p207 = scmp.eq.s32.totalorder %s22, 3
      %p208 = scmp.ne.s32.totalorder %s203, %s205
      %p209 = scmp.eq.s32.totalorder %s22, 0
      %p210 = por %p208, %p209
      %p211 = scmp.ne.s32.totalorder %s203, %s205
      %p212 = scmp.eq.s32.totalorder %s27, 3
      %p213 = por %p211, %p212
      %p214 = scmp.ne.s32.totalorder %s205, %s206
      %p215 = scmp.eq.s32.totalorder %s27, 0
      %p216 = por %p214, %p215
      %p217 = scmp.ne.s32.totalorder %s205, %s206
      %p218 = scmp.eq.s32.totalorder %s28, 3
      %p219 = por %p217, %p218
      %p221 = scmp.ne.s32.totalorder %s206, %s220
      %p222 = scmp.eq.s32.totalorder %s28, 0
      %p223 = por %p221, %p222
      %s224 = ssub.s32 %s22, %s29
      %p225 = scmp.eq.s32.totalorder %s224, 0
      %s227 = sadd.s32 %s226, 1
      %s228 = scalar_select %p225, %s226, %s227
      %p231 = pneg %p225
      %p232 = scmp.eq.s32.totalorder %s22, 3
      %p233 = por %p231, %p232
      %p234 = scmp.ne.s32.totalorder %s226, %s229
      %p235 = scmp.eq.s32.totalorder %s22, 0
      %p236 = por %p234, %p235
      %p237 = scmp.ne.s32.totalorder %s226, %s229
      %p238 = scmp.eq.s32.totalorder %s27, 3
      %p239 = por %p237, %p238
      %p240 = scmp.ne.s32.totalorder %s229, %s230
      %p241 = scmp.eq.s32.totalorder %s27, 0
      %p242 = por %p240, %p241
      %p243 = scmp.ne.s32.totalorder %s229, %s230
      %p244 = scmp.eq.s32.totalorder %s28, 3
      %p245 = por %p243, %p244
      %p247 = scmp.ne.s32.totalorder %s230, %s246
      %p248 = scmp.eq.s32.totalorder %s28, 0
      %p249 = por %p247, %p248
      %p250 = scmp.le.s32.totalorder 1, %s22
      %p251 = scmp.lt.s32.totalorder %s22, 5
      %p252 = pnand %p250, %p251
      %p253 = pneg %p252
      // Predicated region
      $region9: #{tpu_custom_call.1} parent=5 // pred_check
        _
      $region10: #{tpu_custom_call.1} parent=5 // pred_check_branch
        %255 = sbr.rel (%p252) target = $region12
      $region11: #{tpu_custom_call.1} parent=5 // pred_region
        %s256 = ssub.s32 %s22, 1
        // Predicated region
        $region13: #{tpu_custom_call.1} parent=11 // pred_check
          %p257 = pneg %p69
        $region14: #{tpu_custom_call.1} parent=11 // pred_check_branch
          %259 = sbr.rel (%p257) target = $region16
        $region15: #{tpu_custom_call.1} parent=11 // pred_region
          %s261 = ssub.s32 512, 512
          %262 = vsyncadd [#allocation6], %s261
          %s263 = sshll.u32 [#allocation5], 4
          %s264 = int_to_ptr.vmem [resolvable:$true] %s263
          %269 = dma.hbm_to_vmem [thread:$0]  %s1, 512, %s264, [#allocation6], 64, 64, 4
        $region16: #{tpu_custom_call.1} parent=11 // pred_fallthru
          _
        // Predicated region
        $region17: #{tpu_custom_call.1} parent=11 // pred_check
          %p270 = pneg %p90
        $region18: #{tpu_custom_call.1} parent=11 // pred_check_branch
          %272 = sbr.rel (%p270) target = $region20
        $region19: #{tpu_custom_call.1} parent=11 // pred_region
          _
        $region20: #{tpu_custom_call.1} parent=11 // pred_fallthru
          _
        // Predicated region
        $region21: #{tpu_custom_call.1} parent=11 // pred_check
          %p273 = pneg %p111
        $region22: #{tpu_custom_call.1} parent=11 // pred_check_branch
          %275 = sbr.rel (%p273) target = $region24
        $region23: #{tpu_custom_call.1} parent=11 // pred_region
          _
        $region24: #{tpu_custom_call.1} parent=11 // pred_fallthru
          _
        // Predicated region
        $region25: #{tpu_custom_call.1} parent=11 // pred_check
          %p276 = pneg %p132
        $region26: #{tpu_custom_call.1} parent=11 // pred_check_branch
          %278 = sbr.rel (%p276) target = $region28
        $region27: #{tpu_custom_call.1} parent=11 // pred_region
          _
        $region28: #{tpu_custom_call.1} parent=11 // pred_fallthru
          _
        // Predicated region
        $region29: #{tpu_custom_call.1} parent=11 // pred_check
          %p279 = pneg %p153
        $region30: #{tpu_custom_call.1} parent=11 // pred_check_branch
          %281 = sbr.rel (%p279) target = $region32
        $region31: #{tpu_custom_call.1} parent=11 // pred_region
          _
        $region32: #{tpu_custom_call.1} parent=11 // pred_fallthru
          _
        // Predicated region
        $region33: #{tpu_custom_call.1} parent=11 // pred_check
          %p282 = pneg %p174
        $region34: #{tpu_custom_call.1} parent=11 // pred_check_branch
          %284 = sbr.rel (%p282) target = $region36
        $region35: #{tpu_custom_call.1} parent=11 // pred_region
          _
        $region36: #{tpu_custom_call.1} parent=11 // pred_fallthru
          _
        // Predicated region
        $region37: #{tpu_custom_call.1} parent=11 // pred_check
          %p285 = pneg %p195
        $region38: #{tpu_custom_call.1} parent=11 // pred_check_branch
          %287 = sbr.rel (%p285) target = $region40
        $region39: #{tpu_custom_call.1} parent=11 // pred_region
          _
        $region40: #{tpu_custom_call.1} parent=11 // pred_fallthru
          _
        // Predicated region
        $region41: #{tpu_custom_call.1} parent=11 // pred_check
          %p288 = pneg %p216
        $region42: #{tpu_custom_call.1} parent=11 // pred_check_branch
          %290 = sbr.rel (%p288) target = $region44
        $region43: #{tpu_custom_call.1} parent=11 // pred_region
          _
        $region44: #{tpu_custom_call.1} parent=11 // pred_fallthru
          _
      $region12: #{tpu_custom_call.1} parent=5 // pred_fallthru
        _
      %p291 = scmp.lt.s32.totalorder %s22, 4
      // Predicated region
      $region45: #{tpu_custom_call.1} parent=5 // pred_check
        %p292 = pneg %p291
      $region46: #{tpu_custom_call.1} parent=5 // pred_check_branch
        %294 = sbr.rel (%p292) target = $region48
      $region47: #{tpu_custom_call.1} parent=5 // pred_region
        // Predicated region
        $region49: #{tpu_custom_call.1} parent=47 // pred_check
          %p295 = pneg %p42
        $region50: #{tpu_custom_call.1} parent=47 // pred_check_branch
          %297 = sbr.rel (%p295) target = $region52
        $region51: #{tpu_custom_call.1} parent=47 // pred_region
          %s298 = sand.u32 %s32, 1
          %s299 = scalar_lea.sflag [#allocation3], %s298
          %s300 = sand.u32 %s32, 1
          %s301 = smul.addr %s300, 256
          %s302 = scalar_lea.vmem [#allocation2], %s301
          %s303 = smul.u32 2, %s22
          %s305 = ssub.s32 4096, 4096
          %306 = vsyncadd %s299, %s305
          %s307 = smul.addr %s303, 16
          %s308 = smul.addr %s307, 128
          %s309 = scalar_lea.hbm %s0, %s308
          %s310 = sshll.u32 %s302, 4
          %s311 = int_to_ptr.vmem [resolvable:$true] %s310
          %316 = dma.hbm_to_vmem [thread:$0]  %s309, 4096, %s311, %s299, 128, 128, 8
        $region52: #{tpu_custom_call.1} parent=47 // pred_fallthru
          _
      $region48: #{tpu_custom_call.1} parent=5 // pred_fallthru
        _
      %p317 = scmp.le.s32.totalorder 1, %s22
      %p318 = scmp.lt.s32.totalorder %s22, 5
      %p319 = pnand %p317, %p318
      %p320 = pneg %p319
      // Predicated region
      $region53: #{tpu_custom_call.1} parent=5 // pred_check
        _
      $region54: #{tpu_custom_call.1} parent=5 // pred_check_branch
        %322 = sbr.rel (%p319) target = $region56
      $region55: #{tpu_custom_call.1} parent=5 // pred_region
        %s323 = ssub.s32 %s22, 1
        %s324 = sand.u32 %s35, 1
        %s325 = scalar_lea.sflag [#allocation3], %s324
        %s326 = sand.u32 %s35, 1
        %s327 = smul.addr %s326, 256
        %s328 = scalar_lea.vmem [#allocation2], %s327
        // Predicated region
        $region57: #{tpu_custom_call.1} parent=55 // pred_check
          %p329 = pneg %p48
        $region58: #{tpu_custom_call.1} parent=55 // pred_check_branch
          %331 = sbr.rel (%p329) target = $region60
        $region59: #{tpu_custom_call.1} parent=55 // pred_region
          %332 = dma.done %s325, 4096
        $region60: #{tpu_custom_call.1} parent=55 // pred_fallthru
          _
        // Predicated region
        $region61: #{tpu_custom_call.1} parent=55 // pred_check
          %p333 = pneg %p69
        $region62: #{tpu_custom_call.1} parent=55 // pred_check_branch
          %335 = sbr.rel (%p333) target = $region64
        $region63: #{tpu_custom_call.1} parent=55 // pred_region
          %336 = dma.done [#allocation6], 512
        $region64: #{tpu_custom_call.1} parent=55 // pred_fallthru
          _
        %s337 = sand.u32 %s35, 1
        %s338 = scalar_lea.sflag [#allocation3], %s337
        %s339 = sand.u32 %s35, 1
        %s340 = smul.addr %s339, 256
        %s341 = scalar_lea.vmem [#allocation2], %s340
        %p342 = pneg %p48
        %p343 = pneg %p45
        %p344 = pneg %p69
        %p345 = pneg %p66
        %p346 = pneg %p90
        %p347 = pneg %p87
        %p348 = pneg %p111
        %p349 = pneg %p108
        %p350 = pneg %p132
        %p351 = pneg %p129
        %p352 = pneg %p153
        %p353 = pneg %p150
        %p354 = pneg %p174
        %p355 = pneg %p171
        %p356 = pneg %p195
        %p357 = pneg %p192
        %p358 = pneg %p216
        %p359 = pneg %p213
        %p360 = pneg %p242
        %p361 = pneg %p239
        %s362 = sand.u32 %s229, 1
        %s363 = scalar_lea.sflag [#allocation4], %s362
        %s364 = sand.u32 %s229, 1
        %s365 = smul.addr %s364, 256
        %s366 = scalar_lea.vmem [#allocation7], %s365
        %s367 = smul.u32 2, %s27
        %s368 = smul.u32 2, %s27
        %v370 = vld [vmem:[%s328] sm:$0xff]
        %v371 = vld [vmem:[%s328 + $0x8] sm:$0xff]
        %v372 = vld [vmem:[%s328 + $0x10] sm:$0xff]
        %v373 = vld [vmem:[%s328 + $0x18] sm:$0xff]
        %v374 = vld [vmem:[%s328 + $0x20] sm:$0xff]
        %v375 = vld [vmem:[%s328 + $0x28] sm:$0xff]
        %v376 = vld [vmem:[%s328 + $0x30] sm:$0xff]
        %v377 = vld [vmem:[%s328 + $0x38] sm:$0xff]
        %v378 = vld [vmem:[%s328 + $0x40] sm:$0xff]
        %v379 = vld [vmem:[%s328 + $0x48] sm:$0xff]
        %v380 = vld [vmem:[%s328 + $0x50] sm:$0xff]
        %v381 = vld [vmem:[%s328 + $0x58] sm:$0xff]
        %v382 = vld [vmem:[%s328 + $0x60] sm:$0xff]
        %v383 = vld [vmem:[%s328 + $0x68] sm:$0xff]
        %v384 = vld [vmem:[%s328 + $0x70] sm:$0xff]
        %v385 = vld [vmem:[%s328 + $0x78] sm:$0xff]
        %v386 = vadd.f32 %v370, %v371
        %v387 = vadd.f32 %v386, %v372
        %v388 = vadd.f32 %v387, %v373
        %v389 = vadd.f32 %v388, %v374
        %v390 = vadd.f32 %v389, %v375
        %v391 = vadd.f32 %v390, %v376
        %v392 = vadd.f32 %v391, %v377
        %v393 = vadd.f32 %v392, %v378
        %v394 = vadd.f32 %v393, %v379
        %v395 = vadd.f32 %v394, %v380
        %v396 = vadd.f32 %v395, %v381
        %v397 = vadd.f32 %v396, %v382
        %v398 = vadd.f32 %v397, %v383
        %v399 = vadd.f32 %v398, %v384
        %v400 = vadd.f32 %v399, %v385
        %v401 = vrot.slane %v400, 4
        %v402 = vadd.f32 %v400, %v401
        %v403 = vrot.slane %v402, 2
        %v404 = vadd.f32 %v402, %v403
        %v405 = vrot.slane %v404, 1
        %v406 = vadd.f32 %v404, %v405
        %v407 = vrcp.pop 128.0
        %v408 = vmul.f32 %v406, %v407
        %v409 = vmul.f32 %v370, %v370
        %v410 = vmul.f32 %v371, %v371
        %v411 = vmul.f32 %v372, %v372
        %v412 = vmul.f32 %v373, %v373
        %v413 = vmul.f32 %v374, %v374
        %v414 = vmul.f32 %v375, %v375
        %v415 = vmul.f32 %v376, %v376
        %v416 = vmul.f32 %v377, %v377
        %v417 = vmul.f32 %v378, %v378
        %v418 = vmul.f32 %v379, %v379
        %v419 = vmul.f32 %v380, %v380
        %v420 = vmul.f32 %v381, %v381
        %v421 = vmul.f32 %v382, %v382
        %v422 = vmul.f32 %v383, %v383
        %v423 = vmul.f32 %v384, %v384
        %v424 = vmul.f32 %v385, %v385
        %v425 = vadd.f32 %v409, %v410
        %v426 = vadd.f32 %v425, %v411
        %v427 = vadd.f32 %v426, %v412
        %v428 = vadd.f32 %v427, %v413
        %v429 = vadd.f32 %v428, %v414
        %v430 = vadd.f32 %v429, %v415
        %v431 = vadd.f32 %v430, %v416
        %v432 = vadd.f32 %v431, %v417
        %v433 = vadd.f32 %v432, %v418
        %v434 = vadd.f32 %v433, %v419
        %v435 = vadd.f32 %v434, %v420
        %v436 = vadd.f32 %v435, %v421
        %v437 = vadd.f32 %v436, %v422
        %v438 = vadd.f32 %v437, %v423
        %v439 = vadd.f32 %v438, %v424
        %v440 = vrot.slane %v439, 4
        %v441 = vadd.f32 %v439, %v440
        %v442 = vrot.slane %v441, 2
        %v443 = vadd.f32 %v441, %v442
        %v444 = vrot.slane %v443, 1
        %v445 = vadd.f32 %v443, %v444
        %v446 = vmul.f32 %v445, %v407
        %v447 = vsub.f32 %v370, %v408
        %v448 = vsub.f32 %v371, %v408
        %v449 = vsub.f32 %v372, %v408
        %v450 = vsub.f32 %v373, %v408
        %v451 = vsub.f32 %v374, %v408
        %v452 = vsub.f32 %v375, %v408
        %v453 = vsub.f32 %v376, %v408
        %v454 = vsub.f32 %v377, %v408
        %v455 = vsub.f32 %v378, %v408
        %v456 = vsub.f32 %v379, %v408
        %v457 = vsub.f32 %v380, %v408
        %v458 = vsub.f32 %v381, %v408
        %v459 = vsub.f32 %v382, %v408
        %v460 = vsub.f32 %v383, %v408
        %v461 = vsub.f32 %v384, %v408
        %v462 = vsub.f32 %v385, %v408
        %v463 = vmul.f32 %v408, %v408
        %v464 = vsub.f32 %v446, %v463
        %v465 = vadd.f32 %v464, 1e-05
        %v466 = vrsqrt.pop %v465
        %v467 = vmul.f32 %v447, %v466
        %v468 = vmul.f32 %v448, %v466
        %v469 = vmul.f32 %v449, %v466
        %v470 = vmul.f32 %v450, %v466
        %v471 = vmul.f32 %v451, %v466
        %v472 = vmul.f32 %v452, %v466
        %v473 = vmul.f32 %v453, %v466
        %v474 = vmul.f32 %v454, %v466
        %v475 = vmul.f32 %v455, %v466
        %v476 = vmul.f32 %v456, %v466
        %v477 = vmul.f32 %v457, %v466
        %v478 = vmul.f32 %v458, %v466
        %v479 = vmul.f32 %v459, %v466
        %v480 = vmul.f32 %v460, %v466
        %v481 = vmul.f32 %v461, %v466
        %v482 = vmul.f32 %v462, %v466
        %v483 = vpack.c.bf16 %v468, %v467
        %v484 = vpack.c.bf16 %v470, %v469
        %v485 = vpack.c.bf16 %v472, %v471
        %v486 = vpack.c.bf16 %v474, %v473
        %v487 = vpack.c.bf16 %v476, %v475
        %v488 = vpack.c.bf16 %v478, %v477
        %v489 = vpack.c.bf16 %v480, %v479
        %v490 = vpack.c.bf16 %v482, %v481
        %v491 = vld [vmem:[#allocation5] sm:$0xf]
        %v492 = vld [vmem:[#allocation5 + $0x4] sm:$0xf]
        %v493 = vld [vmem:[#allocation5 + $0x8] sm:$0xf]
        %v494 = vld [vmem:[#allocation5 + $0xc] sm:$0xf]
        %v495 = vld [vmem:[#allocation5 + $0x10] sm:$0xf]
        %v496 = vld [vmem:[#allocation5 + $0x14] sm:$0xf]
        %v497 = vld [vmem:[#allocation5 + $0x18] sm:$0xf]
        %v498 = vld [vmem:[#allocation5 + $0x1c] sm:$0xf]
        %v499 = vld [vmem:[%s2] sm:$0xff]
        %v500 = vld [vmem:[%s2 + $0x8] sm:$0xff]
        %v501 = vld [vmem:[%s2 + $0x10] sm:$0xff]
        %v502 = vld [vmem:[%s2 + $0x18] sm:$0xff]
        %v503 = vld [vmem:[%s2 + $0x20] sm:$0xff]
        %v504 = vld [vmem:[%s2 + $0x28] sm:$0xff]
        %v505 = vld [vmem:[%s2 + $0x30] sm:$0xff]
        %v506 = vld [vmem:[%s2 + $0x38] sm:$0xff]
        %508 = vset.pattern.permute.xlu0 0
        %509 = vperm.xlu0 %508, %v499
        %v510 = vpop.permute.xlu0 %509
        %513 = vset.pattern.permute.xlu0 0
        %514 = vperm.xlu0 %513, %v500
        %v515 = vpop.permute.xlu0 %514
        %518 = vset.pattern.permute.xlu0 0
        %519 = vperm.xlu0 %518, %v501
        %v520 = vpop.permute.xlu0 %519
        %523 = vset.pattern.permute.xlu0 0
        %524 = vperm.xlu0 %523, %v502
        %v525 = vpop.permute.xlu0 %524
        %528 = vset.pattern.permute.xlu0 0
        %529 = vperm.xlu0 %528, %v503
        %v530 = vpop.permute.xlu0 %529
        %533 = vset.pattern.permute.xlu0 0
        %534 = vperm.xlu0 %533, %v504
        %v535 = vpop.permute.xlu0 %534
        %538 = vset.pattern.permute.xlu0 0
        %539 = vperm.xlu0 %538, %v505
        %v540 = vpop.permute.xlu0 %539
        %543 = vset.pattern.permute.xlu0 0
        %544 = vperm.xlu0 %543, %v506
        %v545 = vpop.permute.xlu0 %544
        %v555 = vunpack.c.l.b16 %v491
        %v556 = vunpack.c.l.b16 %v492
        %v557 = vunpack.c.l.b16 %v493
        %v558 = vunpack.c.l.b16 %v494
        %v559 = vunpack.c.l.b16 %v495
        %v560 = vunpack.c.l.b16 %v496
        %v561 = vunpack.c.l.b16 %v497
        %v562 = vunpack.c.l.b16 %v498
        %v563 = vpack.c.b16 %v556, %v555
        %v564 = vpack.c.b16 %v558, %v557
        %v565 = vpack.c.b16 %v560, %v559
        %v566 = vpack.c.b16 %v562, %v561
        %571 = vmatprep.subr.bf16.mxu0 0
        %572 = vmatpush1.bf16.msra.mxu0 %v490
        %573 = vmatprep.subr.bf16.mxu0 0
        %574 = vmatpush1.bf16.msra.mxu0 %v489
        %575 = vmatprep.subr.bf16.mxu0 0
        %576 = vmatpush1.bf16.msra.mxu0 %v488
        %577 = vmatprep.subr.bf16.mxu0 0
        %578 = vmatpush1.bf16.msra.mxu0 %v487
        %579 = vmatprep.subr.bf16.mxu0 0
        %580 = vmatpush1.bf16.msra.mxu0 %v486
        %581 = vmatprep.subr.bf16.mxu0 0
        %582 = vmatpush1.bf16.msra.mxu0 %v485
        %583 = vmatprep.subr.bf16.mxu0 0
        %584 = vmatpush1.bf16.msra.mxu0 %v484
        %585 = vmatprep.subr.bf16.mxu0 0
        %586 = vmatpush1.bf16.msra.mxu0 %v483
        %587 = vmatprep.subr.bf16.mxu0 0
        %588 = vmatpush2.bf16.msra.mxu0 0
        %589 = vmatprep.subr.bf16.mxu0 0
        %590 = vmatpush2.bf16.msra.mxu0 0
        %591 = vmatprep.subr.bf16.mxu0 0
        %592 = vmatpush2.bf16.msra.mxu0 0
        %593 = vmatprep.subr.bf16.mxu0 0
        %594 = vmatpush2.bf16.msra.mxu0 0
        %595 = vmatprep.subr.bf16.mxu0 0
        %596 = vmatpush2.bf16.msra.mxu0 0
        %597 = vmatprep.subr.bf16.mxu0 0
        %598 = vmatpush2.bf16.msra.mxu0 0
        %599 = vmatprep.subr.bf16.mxu0 0
        %600 = vmatpush2.bf16.msra.mxu0 0
        %601 = vmatprep.subr.bf16.mxu0 0
        %602 = vmatpush2.bf16.msra.mxu0 0
        %603 = vmatprep.mubr.bf16.mxu0 0
        %604 = vmatmul.mubr.bf16.gmra.mxu0 %v563
        %v605 = vpop.f32.mrf.mxu0
        %v606 = vadd.f32 %v510, %v605
        %v607 = vpop.f32.mrf.mxu0
        %v608 = vpop.f32.mrf.mxu0
        %v609 = vadd.f32 %v515, %v608
        %v610 = vpop.f32.mrf.mxu0
        %611 = vmatprep.mubr.bf16.mxu0 0
        %612 = vmatmul.mubr.bf16.gmra.mxu0 %v564
        %v613 = vpop.f32.mrf.mxu0
        %v614 = vadd.f32 %v520, %v613
        %v615 = vpop.f32.mrf.mxu0
        %v616 = vpop.f32.mrf.mxu0
        %v617 = vadd.f32 %v525, %v616
        %v618 = vpop.f32.mrf.mxu0
        %619 = vmatprep.mubr.bf16.mxu0 0
        %620 = vmatmul.mubr.bf16.gmra.mxu0 %v565
        %v621 = vpop.f32.mrf.mxu0
        %v622 = vadd.f32 %v530, %v621
        %v623 = vpop.f32.mrf.mxu0
        %v624 = vpop.f32.mrf.mxu0
        %v625 = vadd.f32 %v535, %v624
        %v626 = vpop.f32.mrf.mxu0
        %627 = vmatprep.mubr.bf16.mxu0 0
        %628 = vmatmul.mubr.bf16.gmra.mxu0 %v566
        %v629 = vpop.f32.mrf.mxu0
        %v630 = vadd.f32 %v540, %v629
        %v631 = vpop.f32.mrf.mxu0
        %v632 = vpop.f32.mrf.mxu0
        %v633 = vadd.f32 %v545, %v632
        %v634 = vpop.f32.mrf.mxu0
        %635 = vdwg.mxu0
        %v636 = vmul.f32 %v606, %v606
        %v637 = vmul.f32 %v609, %v609
        %v638 = vmul.f32 %v614, %v614
        %v639 = vmul.f32 %v617, %v617
        %v640 = vmul.f32 %v622, %v622
        %v641 = vmul.f32 %v625, %v625
        %v642 = vmul.f32 %v630, %v630
        %v643 = vmul.f32 %v633, %v633
        %v644 = vmul.f32 %v606, %v636
        %v645 = vmul.f32 %v609, %v637
        %v646 = vmul.f32 %v614, %v638
        %v647 = vmul.f32 %v617, %v639
        %v648 = vmul.f32 %v622, %v640
        %v649 = vmul.f32 %v625, %v641
        %v650 = vmul.f32 %v630, %v642
        %v651 = vmul.f32 %v633, %v643
        %v652 = vmul.f32 %v644, 0.044715
        %v653 = vmul.f32 %v645, 0.044715
        %v654 = vmul.f32 %v646, 0.044715
        %v655 = vmul.f32 %v647, 0.044715
        %v656 = vmul.f32 %v648, 0.044715
        %v657 = vmul.f32 %v649, 0.044715
        %v658 = vmul.f32 %v650, 0.044715
        %v659 = vmul.f32 %v651, 0.044715
        %v660 = vadd.f32 %v606, %v652
        %v661 = vadd.f32 %v609, %v653
        %v662 = vadd.f32 %v614, %v654
        %v663 = vadd.f32 %v617, %v655
        %v664 = vadd.f32 %v622, %v656
        %v665 = vadd.f32 %v625, %v657
        %v666 = vadd.f32 %v630, %v658
        %v667 = vadd.f32 %v633, %v659
        %v668 = vmul.f32 %v660, 0.7978846
        %v669 = vmul.f32 %v661, 0.7978846
        %v670 = vmul.f32 %v662, 0.7978846
        %v671 = vmul.f32 %v663, 0.7978846
        %v672 = vmul.f32 %v664, 0.7978846
        %v673 = vmul.f32 %v665, 0.7978846
        %v674 = vmul.f32 %v666, 0.7978846
        %v675 = vmul.f32 %v667, 0.7978846
        %v676 = vtanh.pop %v668
        %v677 = vtanh.pop %v669
        %v678 = vtanh.pop %v670
        %v679 = vtanh.pop %v671
        %v680 = vtanh.pop %v672
        %v681 = vtanh.pop %v673
        %v682 = vtanh.pop %v674
        %v683 = vtanh.pop %v675
        %v684 = vadd.f32 %v676, 1.0
        %v685 = vadd.f32 %v677, 1.0
        %v686 = vadd.f32 %v678, 1.0
        %v687 = vadd.f32 %v679, 1.0
        %v688 = vadd.f32 %v680, 1.0
        %v689 = vadd.f32 %v681, 1.0
        %v690 = vadd.f32 %v682, 1.0
        %v691 = vadd.f32 %v683, 1.0
        %v692 = vmul.f32 %v684, 0.5
        %v693 = vmul.f32 %v685, 0.5
        %v694 = vmul.f32 %v686, 0.5
        %v695 = vmul.f32 %v687, 0.5
        %v696 = vmul.f32 %v688, 0.5
        %v697 = vmul.f32 %v689, 0.5
        %v698 = vmul.f32 %v690, 0.5
        %v699 = vmul.f32 %v691, 0.5
        %v700 = vmul.f32 %v606, %v692
        %v701 = vmul.f32 %v609, %v693
        %v702 = vmul.f32 %v614, %v694
        %v703 = vmul.f32 %v617, %v695
        %v704 = vmul.f32 %v622, %v696
        %v705 = vmul.f32 %v625, %v697
        %v706 = vmul.f32 %v630, %v698
        %v707 = vmul.f32 %v633, %v699
        %v708 = vpack.c.bf16 %v701, %v700
        %v709 = vpack.c.bf16 %v703, %v702
        %v710 = vpack.c.bf16 %v705, %v704
        %v711 = vpack.c.bf16 %v707, %v706
        %v712 = vld [vmem:[%s3] sm:$0xf]
        %v713 = vld [vmem:[%s3 + $0x4] sm:$0xf]
        %v714 = vld [vmem:[%s3 + $0x8] sm:$0xf]
        %v715 = vld [vmem:[%s3 + $0xc] sm:$0xf]
        %v716 = vld [vmem:[%s3 + $0x10] sm:$0xf]
        %v717 = vld [vmem:[%s3 + $0x14] sm:$0xf]
        %v718 = vld [vmem:[%s3 + $0x18] sm:$0xf]
        %v719 = vld [vmem:[%s3 + $0x1c] sm:$0xf]
        %v720 = vld [vmem:[%s3 + $0x20] sm:$0xf]
        %v721 = vld [vmem:[%s3 + $0x24] sm:$0xf]
        %v722 = vld [vmem:[%s3 + $0x28] sm:$0xf]
        %v723 = vld [vmem:[%s3 + $0x2c] sm:$0xf]
        %v724 = vld [vmem:[%s3 + $0x30] sm:$0xf]
        %v725 = vld [vmem:[%s3 + $0x34] sm:$0xf]
        %v726 = vld [vmem:[%s3 + $0x38] sm:$0xf]
        %v727 = vld [vmem:[%s3 + $0x3c] sm:$0xf]
        %v728 = vld [vmem:[%s4] sm:$0xff]
        %v729 = vld [vmem:[%s4 + $0x8] sm:$0xff]
        %v730 = vld [vmem:[%s4 + $0x10] sm:$0xff]
        %v731 = vld [vmem:[%s4 + $0x18] sm:$0xff]
        %v732 = vld [vmem:[%s4 + $0x20] sm:$0xff]
        %v733 = vld [vmem:[%s4 + $0x28] sm:$0xff]
        %v734 = vld [vmem:[%s4 + $0x30] sm:$0xff]
        %v735 = vld [vmem:[%s4 + $0x38] sm:$0xff]
        %v736 = vld [vmem:[%s4 + $0x40] sm:$0xff]
        %v737 = vld [vmem:[%s4 + $0x48] sm:$0xff]
        %v738 = vld [vmem:[%s4 + $0x50] sm:$0xff]
        %v739 = vld [vmem:[%s4 + $0x58] sm:$0xff]
        %v740 = vld [vmem:[%s4 + $0x60] sm:$0xff]
        %v741 = vld [vmem:[%s4 + $0x68] sm:$0xff]
        %v742 = vld [vmem:[%s4 + $0x70] sm:$0xff]
        %v743 = vld [vmem:[%s4 + $0x78] sm:$0xff]
        %745 = vset.pattern.permute.xlu0 0
        %746 = vperm.xlu0 %745, %v728
        %v747 = vpop.permute.xlu0 %746
        %750 = vset.pattern.permute.xlu0 0
        %751 = vperm.xlu0 %750, %v729
        %v752 = vpop.permute.xlu0 %751
        %755 = vset.pattern.permute.xlu0 0
        %756 = vperm.xlu0 %755, %v730
        %v757 = vpop.permute.xlu0 %756
        %760 = vset.pattern.permute.xlu0 0
        %761 = vperm.xlu0 %760, %v731
        %v762 = vpop.permute.xlu0 %761
        %765 = vset.pattern.permute.xlu0 0
        %766 = vperm.xlu0 %765, %v732
        %v767 = vpop.permute.xlu0 %766
        %770 = vset.pattern.permute.xlu0 0
        %771 = vperm.xlu0 %770, %v733
        %v772 = vpop.permute.xlu0 %771
        %775 = vset.pattern.permute.xlu0 0
        %776 = vperm.xlu0 %775, %v734
        %v777 = vpop.permute.xlu0 %776
        %780 = vset.pattern.permute.xlu0 0
        %781 = vperm.xlu0 %780, %v735
        %v782 = vpop.permute.xlu0 %781
        %785 = vset.pattern.permute.xlu0 0
        %786 = vperm.xlu0 %785, %v736
        %v787 = vpop.permute.xlu0 %786
        %790 = vset.pattern.permute.xlu0 0
        %791 = vperm.xlu0 %790, %v737
        %v792 = vpop.permute.xlu0 %791
        %795 = vset.pattern.permute.xlu0 0
        %796 = vperm.xlu0 %795, %v738
        %v797 = vpop.permute.xlu0 %796
        %800 = vset.pattern.permute.xlu0 0
        %801 = vperm.xlu0 %800, %v739
        %v802 = vpop.permute.xlu0 %801
        %805 = vset.pattern.permute.xlu0 0
        %806 = vperm.xlu0 %805, %v740
        %v807 = vpop.permute.xlu0 %806
        %810 = vset.pattern.permute.xlu0 0
        %811 = vperm.xlu0 %810, %v741
        %v812 = vpop.permute.xlu0 %811
        %815 = vset.pattern.permute.xlu0 0
        %816 = vperm.xlu0 %815, %v742
        %v817 = vpop.permute.xlu0 %816
        %820 = vset.pattern.permute.xlu0 0
        %821 = vperm.xlu0 %820, %v743
        %v822 = vpop.permute.xlu0 %821
        %v840 = vunpack.c.l.b16 %v712
        %v841 = vunpack.c.l.b16 %v713
        %v842 = vunpack.c.l.b16 %v714
        %v843 = vunpack.c.l.b16 %v715
        %v844 = vunpack.c.l.b16 %v716
        %v845 = vunpack.c.l.b16 %v717
        %v846 = vunpack.c.l.b16 %v718
        %v847 = vunpack.c.l.b16 %v719
        %v848 = vunpack.c.l.b16 %v720
        %v849 = vunpack.c.l.b16 %v721
        %v850 = vunpack.c.l.b16 %v722
        %v851 = vunpack.c.l.b16 %v723
        %v852 = vunpack.c.l.b16 %v724
        %v853 = vunpack.c.l.b16 %v725
        %v854 = vunpack.c.l.b16 %v726
        %v855 = vunpack.c.l.b16 %v727
        %v856 = vpack.c.b16 %v841, %v840
        %v857 = vpack.c.b16 %v843, %v842
        %v858 = vpack.c.b16 %v845, %v844
        %v859 = vpack.c.b16 %v847, %v846
        %v860 = vpack.c.b16 %v849, %v848
        %v861 = vpack.c.b16 %v851, %v850
        %v862 = vpack.c.b16 %v853, %v852
        %v863 = vpack.c.b16 %v855, %v854
        %vm864 = vcmask 523264
        %v866 = vsel %vm864, %v856, 0
        %v869 = vsel %vm864, %v857, 0
        %v872 = vsel %vm864, %v858, 0
        %v875 = vsel %vm864, %v859, 0
        %v878 = vsel %vm864, %v860, 0
        %v881 = vsel %vm864, %v861, 0
        %v884 = vsel %vm864, %v862, 0
        %v887 = vsel %vm864, %v863, 0
        %889 = vmatprep.subr.bf16.mxu0 0
        %890 = vmatpush1.bf16.msra.mxu0 0
        %891 = vmatprep.subr.bf16.mxu0 0
        %892 = vmatpush1.bf16.msra.mxu0 0
        %893 = vmatprep.subr.bf16.mxu0 0
        %894 = vmatpush1.bf16.msra.mxu0 0
        %895 = vmatprep.subr.bf16.mxu0 0
        %896 = vmatpush1.bf16.msra.mxu0 0
        %897 = vmatprep.subr.bf16.mxu0 0
        %898 = vmatpush1.bf16.msra.mxu0 %v711
        %899 = vmatprep.subr.bf16.mxu0 0
        %900 = vmatpush1.bf16.msra.mxu0 %v710
        %901 = vmatprep.subr.bf16.mxu0 0
        %902 = vmatpush1.bf16.msra.mxu0 %v709
        %903 = vmatprep.subr.bf16.mxu0 0
        %904 = vmatpush1.bf16.msra.mxu0 %v708
        %905 = vmatprep.subr.bf16.mxu0 0
        %906 = vmatpush2.bf16.msra.mxu0 0
        %907 = vmatprep.subr.bf16.mxu0 0
        %908 = vmatpush2.bf16.msra.mxu0 0
        %909 = vmatprep.subr.bf16.mxu0 0
        %910 = vmatpush2.bf16.msra.mxu0 0
        %911 = vmatprep.subr.bf16.mxu0 0
        %912 = vmatpush2.bf16.msra.mxu0 0
        %913 = vmatprep.subr.bf16.mxu0 0
        %914 = vmatpush2.bf16.msra.mxu0 0
        %915 = vmatprep.subr.bf16.mxu0 0
        %916 = vmatpush2.bf16.msra.mxu0 0
        %917 = vmatprep.subr.bf16.mxu0 0
        %918 = vmatpush2.bf16.msra.mxu0 0
        %919 = vmatprep.subr.bf16.mxu0 0
        %920 = vmatpush2.bf16.msra.mxu0 0
        %921 = vmatprep.mubr.bf16.mxu0 0
        %922 = vmatmul.mubr.bf16.gmra.mxu0 %v866
        %v923 = vpop.f32.mrf.mxu0
        %v924 = vadd.f32 %v747, %v923
        %v925 = vpop.f32.mrf.mxu0
        %v926 = vpop.f32.mrf.mxu0
        %v927 = vadd.f32 %v752, %v926
        %v928 = vpop.f32.mrf.mxu0
        %929 = vmatprep.mubr.bf16.mxu0 0
        %930 = vmatmul.mubr.bf16.gmra.mxu0 %v869
        %v931 = vpop.f32.mrf.mxu0
        %v932 = vadd.f32 %v757, %v931
        %v933 = vpop.f32.mrf.mxu0
        %v934 = vpop.f32.mrf.mxu0
        %v935 = vadd.f32 %v762, %v934
        %v936 = vpop.f32.mrf.mxu0
        %937 = vmatprep.mubr.bf16.mxu0 0
        %938 = vmatmul.mubr.bf16.gmra.mxu0 %v872
        %v939 = vpop.f32.mrf.mxu0
        %v940 = vadd.f32 %v767, %v939
        %v941 = vpop.f32.mrf.mxu0
        %v942 = vpop.f32.mrf.mxu0
        %v943 = vadd.f32 %v772, %v942
        %v944 = vpop.f32.mrf.mxu0
        %945 = vmatprep.mubr.bf16.mxu0 0
        %946 = vmatmul.mubr.bf16.gmra.mxu0 %v875
        %v947 = vpop.f32.mrf.mxu0
        %v948 = vadd.f32 %v777, %v947
        %v949 = vpop.f32.mrf.mxu0
        %v950 = vpop.f32.mrf.mxu0
        %v951 = vadd.f32 %v782, %v950
        %v952 = vpop.f32.mrf.mxu0
        %953 = vmatprep.mubr.bf16.mxu0 0
        %954 = vmatmul.mubr.bf16.gmra.mxu0 %v878
        %v955 = vpop.f32.mrf.mxu0
        %v956 = vadd.f32 %v787, %v955
        %v957 = vpop.f32.mrf.mxu0
        %v958 = vpop.f32.mrf.mxu0
        %v959 = vadd.f32 %v792, %v958
        %v960 = vpop.f32.mrf.mxu0
        %961 = vmatprep.mubr.bf16.mxu0 0
        %962 = vmatmul.mubr.bf16.gmra.mxu0 %v881
        %v963 = vpop.f32.mrf.mxu0
        %v964 = vadd.f32 %v797, %v963
        %v965 = vpop.f32.mrf.mxu0
        %v966 = vpop.f32.mrf.mxu0
        %v967 = vadd.f32 %v802, %v966
        %v968 = vpop.f32.mrf.mxu0
        %969 = vmatprep.mubr.bf16.mxu0 0
        %970 = vmatmul.mubr.bf16.gmra.mxu0 %v884
        %v971 = vpop.f32.mrf.mxu0
        %v972 = vadd.f32 %v807, %v971
        %v973 = vpop.f32.mrf.mxu0
        %v974 = vpop.f32.mrf.mxu0
        %v975 = vadd.f32 %v812, %v974
        %v976 = vpop.f32.mrf.mxu0
        %977 = vmatprep.mubr.bf16.mxu0 0
        %978 = vmatmul.mubr.bf16.gmra.mxu0 %v887
        %v979 = vpop.f32.mrf.mxu0
        %v980 = vadd.f32 %v817, %v979
        %v981 = vpop.f32.mrf.mxu0
        %v982 = vpop.f32.mrf.mxu0
        %v983 = vadd.f32 %v822, %v982
        %v984 = vpop.f32.mrf.mxu0
        %985 = vdwg.mxu0
        %v986 = vadd.f32 %v370, %v924
        %v987 = vadd.f32 %v371, %v927
        %v988 = vadd.f32 %v372, %v932
        %v989 = vadd.f32 %v373, %v935
        %v990 = vadd.f32 %v374, %v940
        %v991 = vadd.f32 %v375, %v943
        %v992 = vadd.f32 %v376, %v948
        %v993 = vadd.f32 %v377, %v951
        %v994 = vadd.f32 %v378, %v956
        %v995 = vadd.f32 %v379, %v959
        %v996 = vadd.f32 %v380, %v964
        %v997 = vadd.f32 %v381, %v967
        %v998 = vadd.f32 %v382, %v972
        %v999 = vadd.f32 %v383, %v975
        %v1000 = vadd.f32 %v384, %v980
        %v1001 = vadd.f32 %v385, %v983
        %1002 = vadd.xlane.f32.xlu0 %v986
        %v1003 = vpop.xlane.xlu0 %1002
        %1004 = vadd.xlane.f32.xlu0 %v987
        %v1005 = vpop.xlane.xlu0 %1004
        %1006 = vadd.xlane.f32.xlu0 %v988
        %v1007 = vpop.xlane.xlu0 %1006
        %1008 = vadd.xlane.f32.xlu0 %v989
        %v1009 = vpop.xlane.xlu0 %1008
        %1010 = vadd.xlane.f32.xlu0 %v990
        %v1011 = vpop.xlane.xlu0 %1010
        %1012 = vadd.xlane.f32.xlu0 %v991
        %v1013 = vpop.xlane.xlu0 %1012
        %1014 = vadd.xlane.f32.xlu0 %v992
        %v1015 = vpop.xlane.xlu0 %1014
        %1016 = vadd.xlane.f32.xlu0 %v993
        %v1017 = vpop.xlane.xlu0 %1016
        %1018 = vadd.xlane.f32.xlu0 %v994
        %v1019 = vpop.xlane.xlu0 %1018
        %1020 = vadd.xlane.f32.xlu0 %v995
        %v1021 = vpop.xlane.xlu0 %1020
        %1022 = vadd.xlane.f32.xlu0 %v996
        %v1023 = vpop.xlane.xlu0 %1022
        %1024 = vadd.xlane.f32.xlu0 %v997
        %v1025 = vpop.xlane.xlu0 %1024
        %1026 = vadd.xlane.f32.xlu0 %v998
        %v1027 = vpop.xlane.xlu0 %1026
        %1028 = vadd.xlane.f32.xlu0 %v999
        %v1029 = vpop.xlane.xlu0 %1028
        %1030 = vadd.xlane.f32.xlu0 %v1000
        %v1031 = vpop.xlane.xlu0 %1030
        %1032 = vadd.xlane.f32.xlu0 %v1001
        %v1033 = vpop.xlane.xlu0 %1032
        %v1034 = vmul.f32 %v1003, %v407
        %v1035 = vmul.f32 %v1005, %v407
        %v1036 = vmul.f32 %v1007, %v407
        %v1037 = vmul.f32 %v1009, %v407
        %v1038 = vmul.f32 %v1011, %v407
        %v1039 = vmul.f32 %v1013, %v407
        %v1040 = vmul.f32 %v1015, %v407
        %v1041 = vmul.f32 %v1017, %v407
        %v1042 = vmul.f32 %v1019, %v407
        %v1043 = vmul.f32 %v1021, %v407
        %v1044 = vmul.f32 %v1023, %v407
        %v1045 = vmul.f32 %v1025, %v407
        %v1046 = vmul.f32 %v1027, %v407
        %v1047 = vmul.f32 %v1029, %v407
        %v1048 = vmul.f32 %v1031, %v407
        %v1049 = vmul.f32 %v1033, %v407
        %v1050 = vmul.f32 %v986, %v986
        %v1051 = vmul.f32 %v987, %v987
        %v1052 = vmul.f32 %v988, %v988
        %v1053 = vmul.f32 %v989, %v989
        %v1054 = vmul.f32 %v990, %v990
        %v1055 = vmul.f32 %v991, %v991
        %v1056 = vmul.f32 %v992, %v992
        %v1057 = vmul.f32 %v993, %v993
        %v1058 = vmul.f32 %v994, %v994
        %v1059 = vmul.f32 %v995, %v995
        %v1060 = vmul.f32 %v996, %v996
        %v1061 = vmul.f32 %v997, %v997
        %v1062 = vmul.f32 %v998, %v998
        %v1063 = vmul.f32 %v999, %v999
        %v1064 = vmul.f32 %v1000, %v1000
        %v1065 = vmul.f32 %v1001, %v1001
        %1066 = vadd.xlane.f32.xlu0 %v1050
        %v1067 = vpop.xlane.xlu0 %1066
        %1068 = vadd.xlane.f32.xlu0 %v1051
        %v1069 = vpop.xlane.xlu0 %1068
        %1070 = vadd.xlane.f32.xlu0 %v1052
        %v1071 = vpop.xlane.xlu0 %1070
        %1072 = vadd.xlane.f32.xlu0 %v1053
        %v1073 = vpop.xlane.xlu0 %1072
        %1074 = vadd.xlane.f32.xlu0 %v1054
        %v1075 = vpop.xlane.xlu0 %1074
        %1076 = vadd.xlane.f32.xlu0 %v1055
        %v1077 = vpop.xlane.xlu0 %1076
        %1078 = vadd.xlane.f32.xlu0 %v1056
        %v1079 = vpop.xlane.xlu0 %1078
        %1080 = vadd.xlane.f32.xlu0 %v1057
        %v1081 = vpop.xlane.xlu0 %1080
        %1082 = vadd.xlane.f32.xlu0 %v1058
        %v1083 = vpop.xlane.xlu0 %1082
        %1084 = vadd.xlane.f32.xlu0 %v1059
        %v1085 = vpop.xlane.xlu0 %1084
        %1086 = vadd.xlane.f32.xlu0 %v1060
        %v1087 = vpop.xlane.xlu0 %1086
        %1088 = vadd.xlane.f32.xlu0 %v1061
        %v1089 = vpop.xlane.xlu0 %1088
        %1090 = vadd.xlane.f32.xlu0 %v1062
        %v1091 = vpop.xlane.xlu0 %1090
        %1092 = vadd.xlane.f32.xlu0 %v1063
        %v1093 = vpop.xlane.xlu0 %1092
        %1094 = vadd.xlane.f32.xlu0 %v1064
        %v1095 = vpop.xlane.xlu0 %1094
        %1096 = vadd.xlane.f32.xlu0 %v1065
        %v1097 = vpop.xlane.xlu0 %1096
        %v1098 = vmul.f32 %v1067, %v407
        %v1099 = vmul.f32 %v1069, %v407
        %v1100 = vmul.f32 %v1071, %v407
        %v1101 = vmul.f32 %v1073, %v407
        %v1102 = vmul.f32 %v1075, %v407
        %v1103 = vmul.f32 %v1077, %v407
        %v1104 = vmul.f32 %v1079, %v407
        %v1105 = vmul.f32 %v1081, %v407
        %v1106 = vmul.f32 %v1083, %v407
        %v1107 = vmul.f32 %v1085, %v407
        %v1108 = vmul.f32 %v1087, %v407
        %v1109 = vmul.f32 %v1089, %v407
        %v1110 = vmul.f32 %v1091, %v407
        %v1111 = vmul.f32 %v1093, %v407
        %v1112 = vmul.f32 %v1095, %v407
        %v1113 = vmul.f32 %v1097, %v407
        %v1114 = vsub.f32 %v986, %v1034
        %v1115 = vsub.f32 %v987, %v1035
        %v1116 = vsub.f32 %v988, %v1036
        %v1117 = vsub.f32 %v989, %v1037
        %v1118 = vsub.f32 %v990, %v1038
        %v1119 = vsub.f32 %v991, %v1039
        %v1120 = vsub.f32 %v992, %v1040
        %v1121 = vsub.f32 %v993, %v1041
        %v1122 = vsub.f32 %v994, %v1042
        %v1123 = vsub.f32 %v995, %v1043
        %v1124 = vsub.f32 %v996, %v1044
        %v1125 = vsub.f32 %v997, %v1045
        %v1126 = vsub.f32 %v998, %v1046
        %v1127 = vsub.f32 %v999, %v1047
        %v1128 = vsub.f32 %v1000, %v1048
        %v1129 = vsub.f32 %v1001, %v1049
        %v1130 = vmul.f32 %v1034, %v1034
        %v1131 = vmul.f32 %v1035, %v1035
        %v1132 = vmul.f32 %v1036, %v1036
        %v1133 = vmul.f32 %v1037, %v1037
        %v1134 = vmul.f32 %v1038, %v1038
        %v1135 = vmul.f32 %v1039, %v1039
        %v1136 = vmul.f32 %v1040, %v1040
        %v1137 = vmul.f32 %v1041, %v1041
        %v1138 = vmul.f32 %v1042, %v1042
        %v1139 = vmul.f32 %v1043, %v1043
        %v1140 = vmul.f32 %v1044, %v1044
        %v1141 = vmul.f32 %v1045, %v1045
        %v1142 = vmul.f32 %v1046, %v1046
        %v1143 = vmul.f32 %v1047, %v1047
        %v1144 = vmul.f32 %v1048, %v1048
        %v1145 = vmul.f32 %v1049, %v1049
        %v1146 = vsub.f32 %v1098, %v1130
        %v1147 = vsub.f32 %v1099, %v1131
        %v1148 = vsub.f32 %v1100, %v1132
        %v1149 = vsub.f32 %v1101, %v1133
        %v1150 = vsub.f32 %v1102, %v1134
        %v1151 = vsub.f32 %v1103, %v1135
        %v1152 = vsub.f32 %v1104, %v1136
        %v1153 = vsub.f32 %v1105, %v1137
        %v1154 = vsub.f32 %v1106, %v1138
        %v1155 = vsub.f32 %v1107, %v1139
        %v1156 = vsub.f32 %v1108, %v1140
        %v1157 = vsub.f32 %v1109, %v1141
        %v1158 = vsub.f32 %v1110, %v1142
        %v1159 = vsub.f32 %v1111, %v1143
        %v1160 = vsub.f32 %v1112, %v1144
        %v1161 = vsub.f32 %v1113, %v1145
        %v1162 = vadd.f32 %v1146, 1e-05
        %v1163 = vadd.f32 %v1147, 1e-05
        %v1164 = vadd.f32 %v1148, 1e-05
        %v1165 = vadd.f32 %v1149, 1e-05
        %v1166 = vadd.f32 %v1150, 1e-05
        %v1167 = vadd.f32 %v1151, 1e-05
        %v1168 = vadd.f32 %v1152, 1e-05
        %v1169 = vadd.f32 %v1153, 1e-05
        %v1170 = vadd.f32 %v1154, 1e-05
        %v1171 = vadd.f32 %v1155, 1e-05
        %v1172 = vadd.f32 %v1156, 1e-05
        %v1173 = vadd.f32 %v1157, 1e-05
        %v1174 = vadd.f32 %v1158, 1e-05
        %v1175 = vadd.f32 %v1159, 1e-05
        %v1176 = vadd.f32 %v1160, 1e-05
        %v1177 = vadd.f32 %v1161, 1e-05
        %v1178 = vrsqrt.pop %v1162
        %v1179 = vrsqrt.pop %v1163
        %v1180 = vrsqrt.pop %v1164
        %v1181 = vrsqrt.pop %v1165
        %v1182 = vrsqrt.pop %v1166
        %v1183 = vrsqrt.pop %v1167
        %v1184 = vrsqrt.pop %v1168
        %v1185 = vrsqrt.pop %v1169
        %v1186 = vrsqrt.pop %v1170
        %v1187 = vrsqrt.pop %v1171
        %v1188 = vrsqrt.pop %v1172
        %v1189 = vrsqrt.pop %v1173
        %v1190 = vrsqrt.pop %v1174
        %v1191 = vrsqrt.pop %v1175
        %v1192 = vrsqrt.pop %v1176
        %v1193 = vrsqrt.pop %v1177
        %v1194 = vmul.f32 %v1114, %v1178
        %v1195 = vmul.f32 %v1115, %v1179
        %v1196 = vmul.f32 %v1116, %v1180
        %v1197 = vmul.f32 %v1117, %v1181
        %v1198 = vmul.f32 %v1118, %v1182
        %v1199 = vmul.f32 %v1119, %v1183
        %v1200 = vmul.f32 %v1120, %v1184
        %v1201 = vmul.f32 %v1121, %v1185
        %v1202 = vmul.f32 %v1122, %v1186
        %v1203 = vmul.f32 %v1123, %v1187
        %v1204 = vmul.f32 %v1124, %v1188
        %v1205 = vmul.f32 %v1125, %v1189
        %v1206 = vmul.f32 %v1126, %v1190
        %v1207 = vmul.f32 %v1127, %v1191
        %v1208 = vmul.f32 %v1128, %v1192
        %v1209 = vmul.f32 %v1129, %v1193
        %v1210 = vpack.c.bf16 %v1195, %v1194
        %v1211 = vpack.c.bf16 %v1197, %v1196
        %v1212 = vpack.c.bf16 %v1199, %v1198
        %v1213 = vpack.c.bf16 %v1201, %v1200
        %v1214 = vpack.c.bf16 %v1203, %v1202
        %v1215 = vpack.c.bf16 %v1205, %v1204
        %v1216 = vpack.c.bf16 %v1207, %v1206
        %v1217 = vpack.c.bf16 %v1209, %v1208
        %v1218 = vld [vmem:[%s5] sm:$0xff]
        %v1219 = vld [vmem:[%s5 + $0x8] sm:$0xff]
        %v1220 = vld [vmem:[%s5 + $0x10] sm:$0xff]
        %v1221 = vld [vmem:[%s5 + $0x18] sm:$0xff]
        %v1222 = vld [vmem:[%s5 + $0x20] sm:$0xff]
        %v1223 = vld [vmem:[%s5 + $0x28] sm:$0xff]
        %v1224 = vld [vmem:[%s5 + $0x30] sm:$0xff]
        %v1225 = vld [vmem:[%s5 + $0x38] sm:$0xff]
        %v1226 = vld [vmem:[%s5 + $0x40] sm:$0xff]
        %v1227 = vld [vmem:[%s5 + $0x48] sm:$0xff]
        %v1228 = vld [vmem:[%s5 + $0x50] sm:$0xff]
        %v1229 = vld [vmem:[%s5 + $0x58] sm:$0xff]
        %v1230 = vld [vmem:[%s5 + $0x60] sm:$0xff]
        %v1231 = vld [vmem:[%s5 + $0x68] sm:$0xff]
        %v1232 = vld [vmem:[%s5 + $0x70] sm:$0xff]
        %v1233 = vld [vmem:[%s5 + $0x78] sm:$0xff]
        %v1234 = vld [vmem:[%s6] sm:$0x3]
        %v1236 = vlaneseq
        %v1237 = vshrl.u32 %v1236, 7
        %v1238 = vsub.s32 0, %v1237
        %v1239 = vrot.slane %v1234, %v1238
        %v1240 = vlaneseq
        %v1241 = vshrl.u32 %v1240, 7
        %v1242 = vsub.s32 1, %v1241
        %v1243 = vrot.slane %v1234, %v1242
        %v1262 = vunpack.c.l.b16 %v1218
        %v1263 = vunpack.c.h.b16 %v1218
        %v1264 = vunpack.c.l.b16 %v1219
        %v1265 = vunpack.c.h.b16 %v1219
        %v1266 = vunpack.c.l.b16 %v1220
        %v1267 = vunpack.c.h.b16 %v1220
        %v1268 = vunpack.c.l.b16 %v1221
        %v1269 = vunpack.c.h.b16 %v1221
        %v1270 = vunpack.c.l.b16 %v1222
        %v1271 = vunpack.c.h.b16 %v1222
        %v1272 = vunpack.c.l.b16 %v1223
        %v1273 = vunpack.c.h.b16 %v1223
        %v1274 = vunpack.c.l.b16 %v1224
        %v1275 = vunpack.c.h.b16 %v1224
        %v1276 = vunpack.c.l.b16 %v1225
        %v1277 = vunpack.c.h.b16 %v1225
        %v1278 = vunpack.c.l.b16 %v1226
        %v1279 = vunpack.c.h.b16 %v1226
        %v1280 = vunpack.c.l.b16 %v1227
        %v1281 = vunpack.c.h.b16 %v1227
        %v1282 = vunpack.c.l.b16 %v1228
        %v1283 = vunpack.c.h.b16 %v1228
        %v1284 = vunpack.c.l.b16 %v1229
        %v1285 = vunpack.c.h.b16 %v1229
        %v1286 = vunpack.c.l.b16 %v1230
        %v1287 = vunpack.c.h.b16 %v1230
        %v1288 = vunpack.c.l.b16 %v1231
        %v1289 = vunpack.c.h.b16 %v1231
        %v1290 = vunpack.c.l.b16 %v1232
        %v1291 = vunpack.c.h.b16 %v1232
        %v1292 = vunpack.c.l.b16 %v1233
        %v1293 = vunpack.c.h.b16 %v1233
        %v1294 = vpack.c.b16 %v1264, %v1262
        %v1295 = vpack.c.b16 %v1265, %v1263
        %v1296 = vpack.c.b16 %v1268, %v1266
        %v1297 = vpack.c.b16 %v1269, %v1267
        %v1298 = vpack.c.b16 %v1272, %v1270
        %v1299 = vpack.c.b16 %v1273, %v1271
        %v1300 = vpack.c.b16 %v1276, %v1274
        %v1301 = vpack.c.b16 %v1277, %v1275
        %v1302 = vpack.c.b16 %v1280, %v1278
        %v1303 = vpack.c.b16 %v1281, %v1279
        %v1304 = vpack.c.b16 %v1284, %v1282
        %v1305 = vpack.c.b16 %v1285, %v1283
        %v1306 = vpack.c.b16 %v1288, %v1286
        %v1307 = vpack.c.b16 %v1289, %v1287
        %v1308 = vpack.c.b16 %v1292, %v1290
        %v1309 = vpack.c.b16 %v1293, %v1291
        %1326 = vmatprep.subr.bf16.mxu0 %v1309
        %1327 = vmatpush1.bf16.msra.mxu0 %v1308
        %1328 = vmatprep.subr.bf16.mxu0 %v1307
        %1329 = vmatpush1.bf16.msra.mxu0 %v1306
        %1330 = vmatprep.subr.bf16.mxu0 %v1305
        %1331 = vmatpush1.bf16.msra.mxu0 %v1304
        %1332 = vmatprep.subr.bf16.mxu0 %v1303
        %1333 = vmatpush1.bf16.msra.mxu0 %v1302
        %1334 = vmatprep.subr.bf16.mxu0 %v1301
        %1335 = vmatpush1.bf16.msra.mxu0 %v1300
        %1336 = vmatprep.subr.bf16.mxu0 %v1299
        %1337 = vmatpush1.bf16.msra.mxu0 %v1298
        %1338 = vmatprep.subr.bf16.mxu0 %v1297
        %1339 = vmatpush1.bf16.msra.mxu0 %v1296
        %1340 = vmatprep.subr.bf16.mxu0 %v1295
        %1341 = vmatpush1.bf16.msra.mxu0 %v1294
        %1342 = vmatprep.subr.bf16.mxu0 0
        %1343 = vmatpush2.bf16.msra.mxu0 0
        %1344 = vmatprep.subr.bf16.mxu0 0
        %1345 = vmatpush2.bf16.msra.mxu0 0
        %1346 = vmatprep.subr.bf16.mxu0 0
        %1347 = vmatpush2.bf16.msra.mxu0 0
        %1348 = vmatprep.subr.bf16.mxu0 0
        %1349 = vmatpush2.bf16.msra.mxu0 0
        %1350 = vmatprep.subr.bf16.mxu0 0
        %1351 = vmatpush2.bf16.msra.mxu0 0
        %1352 = vmatprep.subr.bf16.mxu0 0
        %1353 = vmatpush2.bf16.msra.mxu0 0
        %1354 = vmatprep.subr.bf16.mxu0 0
        %1355 = vmatpush2.bf16.msra.mxu0 0
        %1356 = vmatprep.subr.bf16.mxu0 0
        %1357 = vmatpush2.bf16.msra.mxu0 0
        %1358 = vmatprep.mubr.bf16.mxu0 0
        %1359 = vmatmul.mubr.bf16.gmra.mxu0 %v1210
        %v1360 = vpop.f32.mrf.mxu0
        %v1361 = vadd.f32 %v1239, %v1360
        %v1362 = vpop.f32.mrf.mxu0
        %v1363 = vadd.f32 %v1243, %v1362
        %v1364 = vpop.f32.mrf.mxu0
        %v1365 = vadd.f32 %v1239, %v1364
        %v1366 = vpop.f32.mrf.mxu0
        %v1367 = vadd.f32 %v1243, %v1366
        %1368 = vmatprep.mubr.bf16.mxu0 0
        %1369 = vmatmul.mubr.bf16.gmra.mxu0 %v1211
        %v1370 = vpop.f32.mrf.mxu0
        %v1371 = vadd.f32 %v1239, %v1370
        %v1372 = vpop.f32.mrf.mxu0
        %v1373 = vadd.f32 %v1243, %v1372
        %v1374 = vpop.f32.mrf.mxu0
        %v1375 = vadd.f32 %v1239, %v1374
        %v1376 = vpop.f32.mrf.mxu0
        %v1377 = vadd.f32 %v1243, %v1376
        %1378 = vmatprep.mubr.bf16.mxu0 0
        %1379 = vmatmul.mubr.bf16.gmra.mxu0 %v1212
        %v1380 = vpop.f32.mrf.mxu0
        %v1381 = vadd.f32 %v1239, %v1380
        %v1382 = vpop.f32.mrf.mxu0
        %v1383 = vadd.f32 %v1243, %v1382
        %v1384 = vpop.f32.mrf.mxu0
        %v1385 = vadd.f32 %v1239, %v1384
        %v1386 = vpop.f32.mrf.mxu0
        %v1387 = vadd.f32 %v1243, %v1386
        %1388 = vmatprep.mubr.bf16.mxu0 0
        %1389 = vmatmul.mubr.bf16.gmra.mxu0 %v1213
        %v1390 = vpop.f32.mrf.mxu0
        %v1391 = vadd.f32 %v1239, %v1390
        %v1392 = vpop.f32.mrf.mxu0
        %v1393 = vadd.f32 %v1243, %v1392
        %v1394 = vpop.f32.mrf.mxu0
        %v1395 = vadd.f32 %v1239, %v1394
        %v1396 = vpop.f32.mrf.mxu0
        %v1397 = vadd.f32 %v1243, %v1396
        %1398 = vmatprep.mubr.bf16.mxu0 0
        %1399 = vmatmul.mubr.bf16.gmra.mxu0 %v1214
        %v1400 = vpop.f32.mrf.mxu0
        %v1401 = vadd.f32 %v1239, %v1400
        %v1402 = vpop.f32.mrf.mxu0
        %v1403 = vadd.f32 %v1243, %v1402
        %v1404 = vpop.f32.mrf.mxu0
        %v1405 = vadd.f32 %v1239, %v1404
        %v1406 = vpop.f32.mrf.mxu0
        %v1407 = vadd.f32 %v1243, %v1406
        %1408 = vmatprep.mubr.bf16.mxu0 0
        %1409 = vmatmul.mubr.bf16.gmra.mxu0 %v1215
        %v1410 = vpop.f32.mrf.mxu0
        %v1411 = vadd.f32 %v1239, %v1410
        %v1412 = vpop.f32.mrf.mxu0
        %v1413 = vadd.f32 %v1243, %v1412
        %v1414 = vpop.f32.mrf.mxu0
        %v1415 = vadd.f32 %v1239, %v1414
        %v1416 = vpop.f32.mrf.mxu0
        %v1417 = vadd.f32 %v1243, %v1416
        %1418 = vmatprep.mubr.bf16.mxu0 0
        %1419 = vmatmul.mubr.bf16.gmra.mxu0 %v1216
        %v1420 = vpop.f32.mrf.mxu0
        %v1421 = vadd.f32 %v1239, %v1420
        %v1422 = vpop.f32.mrf.mxu0
        %v1423 = vadd.f32 %v1243, %v1422
        %v1424 = vpop.f32.mrf.mxu0
        %v1425 = vadd.f32 %v1239, %v1424
        %v1426 = vpop.f32.mrf.mxu0
        %v1427 = vadd.f32 %v1243, %v1426
        %1428 = vmatprep.mubr.bf16.mxu0 0
        %1429 = vmatmul.mubr.bf16.gmra.mxu0 %v1217
        %v1430 = vpop.f32.mrf.mxu0
        %v1431 = vadd.f32 %v1239, %v1430
        %v1432 = vpop.f32.mrf.mxu0
        %v1433 = vadd.f32 %v1243, %v1432
        %v1434 = vpop.f32.mrf.mxu0
        %v1435 = vadd.f32 %v1239, %v1434
        %v1436 = vpop.f32.mrf.mxu0
        %v1437 = vadd.f32 %v1243, %v1436
        %1438 = vdwg.mxu0
        %v1439 = vmul.f32 %v1361, %v1361
        %v1440 = vmul.f32 %v1363, %v1363
        %v1441 = vmul.f32 %v1365, %v1365
        %v1442 = vmul.f32 %v1367, %v1367
        %v1443 = vmul.f32 %v1371, %v1371
        %v1444 = vmul.f32 %v1373, %v1373
        %v1445 = vmul.f32 %v1375, %v1375
        %v1446 = vmul.f32 %v1377, %v1377
        %v1447 = vmul.f32 %v1381, %v1381
        %v1448 = vmul.f32 %v1383, %v1383
        %v1449 = vmul.f32 %v1385, %v1385
        %v1450 = vmul.f32 %v1387, %v1387
        %v1451 = vmul.f32 %v1391, %v1391
        %v1452 = vmul.f32 %v1393, %v1393
        %v1453 = vmul.f32 %v1395, %v1395
        %v1454 = vmul.f32 %v1397, %v1397
        %v1455 = vmul.f32 %v1401, %v1401
        %v1456 = vmul.f32 %v1403, %v1403
        %v1457 = vmul.f32 %v1405, %v1405
        %v1458 = vmul.f32 %v1407, %v1407
        %v1459 = vmul.f32 %v1411, %v1411
        %v1460 = vmul.f32 %v1413, %v1413
        %v1461 = vmul.f32 %v1415, %v1415
        %v1462 = vmul.f32 %v1417, %v1417
        %v1463 = vmul.f32 %v1421, %v1421
        %v1464 = vmul.f32 %v1423, %v1423
        %v1465 = vmul.f32 %v1425, %v1425
        %v1466 = vmul.f32 %v1427, %v1427
        %v1467 = vmul.f32 %v1431, %v1431
        %v1468 = vmul.f32 %v1433, %v1433
        %v1469 = vmul.f32 %v1435, %v1435
        %v1470 = vmul.f32 %v1437, %v1437
        %v1471 = vmul.f32 %v1361, %v1439
        %v1472 = vmul.f32 %v1363, %v1440
        %v1473 = vmul.f32 %v1365, %v1441
        %v1474 = vmul.f32 %v1367, %v1442
        %v1475 = vmul.f32 %v1371, %v1443
        %v1476 = vmul.f32 %v1373, %v1444
        %v1477 = vmul.f32 %v1375, %v1445
        %v1478 = vmul.f32 %v1377, %v1446
        %v1479 = vmul.f32 %v1381, %v1447
        %v1480 = vmul.f32 %v1383, %v1448
        %v1481 = vmul.f32 %v1385, %v1449
        %v1482 = vmul.f32 %v1387, %v1450
        %v1483 = vmul.f32 %v1391, %v1451
        %v1484 = vmul.f32 %v1393, %v1452
        %v1485 = vmul.f32 %v1395, %v1453
        %v1486 = vmul.f32 %v1397, %v1454
        %v1487 = vmul.f32 %v1401, %v1455
        %v1488 = vmul.f32 %v1403, %v1456
        %v1489 = vmul.f32 %v1405, %v1457
        %v1490 = vmul.f32 %v1407, %v1458
        %v1491 = vmul.f32 %v1411, %v1459
        %v1492 = vmul.f32 %v1413, %v1460
        %v1493 = vmul.f32 %v1415, %v1461
        %v1494 = vmul.f32 %v1417, %v1462
        %v1495 = vmul.f32 %v1421, %v1463
        %v1496 = vmul.f32 %v1423, %v1464
        %v1497 = vmul.f32 %v1425, %v1465
        %v1498 = vmul.f32 %v1427, %v1466
        %v1499 = vmul.f32 %v1431, %v1467
        %v1500 = vmul.f32 %v1433, %v1468
        %v1501 = vmul.f32 %v1435, %v1469
        %v1502 = vmul.f32 %v1437, %v1470
        %v1503 = vmul.f32 %v1471, 0.044715
        %v1504 = vmul.f32 %v1472, 0.044715
        %v1505 = vmul.f32 %v1473, 0.044715
        %v1506 = vmul.f32 %v1474, 0.044715
        %v1507 = vmul.f32 %v1475, 0.044715
        %v1508 = vmul.f32 %v1476, 0.044715
        %v1509 = vmul.f32 %v1477, 0.044715
        %v1510 = vmul.f32 %v1478, 0.044715
        %v1511 = vmul.f32 %v1479, 0.044715
        %v1512 = vmul.f32 %v1480, 0.044715
        %v1513 = vmul.f32 %v1481, 0.044715
        %v1514 = vmul.f32 %v1482, 0.044715
        %v1515 = vmul.f32 %v1483, 0.044715
        %v1516 = vmul.f32 %v1484, 0.044715
        %v1517 = vmul.f32 %v1485, 0.044715
        %v1518 = vmul.f32 %v1486, 0.044715
        %v1519 = vmul.f32 %v1487, 0.044715
        %v1520 = vmul.f32 %v1488, 0.044715
        %v1521 = vmul.f32 %v1489, 0.044715
        %v1522 = vmul.f32 %v1490, 0.044715
        %v1523 = vmul.f32 %v1491, 0.044715
        %v1524 = vmul.f32 %v1492, 0.044715
        %v1525 = vmul.f32 %v1493, 0.044715
        %v1526 = vmul.f32 %v1494, 0.044715
        %v1527 = vmul.f32 %v1495, 0.044715
        %v1528 = vmul.f32 %v1496, 0.044715
        %v1529 = vmul.f32 %v1497, 0.044715
        %v1530 = vmul.f32 %v1498, 0.044715
        %v1531 = vmul.f32 %v1499, 0.044715
        %v1532 = vmul.f32 %v1500, 0.044715
        %v1533 = vmul.f32 %v1501, 0.044715
        %v1534 = vmul.f32 %v1502, 0.044715
        %v1535 = vadd.f32 %v1361, %v1503
        %v1536 = vadd.f32 %v1363, %v1504
        %v1537 = vadd.f32 %v1365, %v1505
        %v1538 = vadd.f32 %v1367, %v1506
        %v1539 = vadd.f32 %v1371, %v1507
        %v1540 = vadd.f32 %v1373, %v1508
        %v1541 = vadd.f32 %v1375, %v1509
        %v1542 = vadd.f32 %v1377, %v1510
        %v1543 = vadd.f32 %v1381, %v1511
        %v1544 = vadd.f32 %v1383, %v1512
        %v1545 = vadd.f32 %v1385, %v1513
        %v1546 = vadd.f32 %v1387, %v1514
        %v1547 = vadd.f32 %v1391, %v1515
        %v1548 = vadd.f32 %v1393, %v1516
        %v1549 = vadd.f32 %v1395, %v1517
        %v1550 = vadd.f32 %v1397, %v1518
        %v1551 = vadd.f32 %v1401, %v1519
        %v1552 = vadd.f32 %v1403, %v1520
        %v1553 = vadd.f32 %v1405, %v1521
        %v1554 = vadd.f32 %v1407, %v1522
        %v1555 = vadd.f32 %v1411, %v1523
        %v1556 = vadd.f32 %v1413, %v1524
        %v1557 = vadd.f32 %v1415, %v1525
        %v1558 = vadd.f32 %v1417, %v1526
        %v1559 = vadd.f32 %v1421, %v1527
        %v1560 = vadd.f32 %v1423, %v1528
        %v1561 = vadd.f32 %v1425, %v1529
        %v1562 = vadd.f32 %v1427, %v1530
        %v1563 = vadd.f32 %v1431, %v1531
        %v1564 = vadd.f32 %v1433, %v1532
        %v1565 = vadd.f32 %v1435, %v1533
        %v1566 = vadd.f32 %v1437, %v1534
        %v1567 = vmul.f32 %v1535, 0.7978846
        %v1568 = vmul.f32 %v1536, 0.7978846
        %v1569 = vmul.f32 %v1537, 0.7978846
        %v1570 = vmul.f32 %v1538, 0.7978846
        %v1571 = vmul.f32 %v1539, 0.7978846
        %v1572 = vmul.f32 %v1540, 0.7978846
        %v1573 = vmul.f32 %v1541, 0.7978846
        %v1574 = vmul.f32 %v1542, 0.7978846
        %v1575 = vmul.f32 %v1543, 0.7978846
        %v1576 = vmul.f32 %v1544, 0.7978846
        %v1577 = vmul.f32 %v1545, 0.7978846
        %v1578 = vmul.f32 %v1546, 0.7978846
        %v1579 = vmul.f32 %v1547, 0.7978846
        %v1580 = vmul.f32 %v1548, 0.7978846
        %v1581 = vmul.f32 %v1549, 0.7978846
        %v1582 = vmul.f32 %v1550, 0.7978846
        %v1583 = vmul.f32 %v1551, 0.7978846
        %v1584 = vmul.f32 %v1552, 0.7978846
        %v1585 = vmul.f32 %v1553, 0.7978846
        %v1586 = vmul.f32 %v1554, 0.7978846
        %v1587 = vmul.f32 %v1555, 0.7978846
        %v1588 = vmul.f32 %v1556, 0.7978846
        %v1589 = vmul.f32 %v1557, 0.7978846
        %v1590 = vmul.f32 %v1558, 0.7978846
        %v1591 = vmul.f32 %v1559, 0.7978846
        %v1592 = vmul.f32 %v1560, 0.7978846
        %v1593 = vmul.f32 %v1561, 0.7978846
        %v1594 = vmul.f32 %v1562, 0.7978846
        %v1595 = vmul.f32 %v1563, 0.7978846
        %v1596 = vmul.f32 %v1564, 0.7978846
        %v1597 = vmul.f32 %v1565, 0.7978846
        %v1598 = vmul.f32 %v1566, 0.7978846
        %v1599 = vtanh.pop %v1567
        %v1600 = vtanh.pop %v1568
        %v1601 = vtanh.pop %v1569
        %v1602 = vtanh.pop %v1570
        %v1603 = vtanh.pop %v1571
        %v1604 = vtanh.pop %v1572
        %v1605 = vtanh.pop %v1573
        %v1606 = vtanh.pop %v1574
        %v1607 = vtanh.pop %v1575
        %v1608 = vtanh.pop %v1576
        %v1609 = vtanh.pop %v1577
        %v1610 = vtanh.pop %v1578
        %v1611 = vtanh.pop %v1579
        %v1612 = vtanh.pop %v1580
        %v1613 = vtanh.pop %v1581
        %v1614 = vtanh.pop %v1582
        %v1615 = vtanh.pop %v1583
        %v1616 = vtanh.pop %v1584
        %v1617 = vtanh.pop %v1585
        %v1618 = vtanh.pop %v1586
        %v1619 = vtanh.pop %v1587
        %v1620 = vtanh.pop %v1588
        %v1621 = vtanh.pop %v1589
        %v1622 = vtanh.pop %v1590
        %v1623 = vtanh.pop %v1591
        %v1624 = vtanh.pop %v1592
        %v1625 = vtanh.pop %v1593
        %v1626 = vtanh.pop %v1594
        %v1627 = vtanh.pop %v1595
        %v1628 = vtanh.pop %v1596
        %v1629 = vtanh.pop %v1597
        %v1630 = vtanh.pop %v1598
        %v1631 = vadd.f32 %v1599, 1.0
        %v1632 = vadd.f32 %v1600, 1.0
        %v1633 = vadd.f32 %v1601, 1.0
        %v1634 = vadd.f32 %v1602, 1.0
        %v1635 = vadd.f32 %v1603, 1.0
        %v1636 = vadd.f32 %v1604, 1.0
        %v1637 = vadd.f32 %v1605, 1.0
        %v1638 = vadd.f32 %v1606, 1.0
        %v1639 = vadd.f32 %v1607, 1.0
        %v1640 = vadd.f32 %v1608, 1.0
        %v1641 = vadd.f32 %v1609, 1.0
        %v1642 = vadd.f32 %v1610, 1.0
        %v1643 = vadd.f32 %v1611, 1.0
        %v1644 = vadd.f32 %v1612, 1.0
        %v1645 = vadd.f32 %v1613, 1.0
        %v1646 = vadd.f32 %v1614, 1.0
        %v1647 = vadd.f32 %v1615, 1.0
        %v1648 = vadd.f32 %v1616, 1.0
        %v1649 = vadd.f32 %v1617, 1.0
        %v1650 = vadd.f32 %v1618, 1.0
        %v1651 = vadd.f32 %v1619, 1.0
        %v1652 = vadd.f32 %v1620, 1.0
        %v1653 = vadd.f32 %v1621, 1.0
        %v1654 = vadd.f32 %v1622, 1.0
        %v1655 = vadd.f32 %v1623, 1.0
        %v1656 = vadd.f32 %v1624, 1.0
        %v1657 = vadd.f32 %v1625, 1.0
        %v1658 = vadd.f32 %v1626, 1.0
        %v1659 = vadd.f32 %v1627, 1.0
        %v1660 = vadd.f32 %v1628, 1.0
        %v1661 = vadd.f32 %v1629, 1.0
        %v1662 = vadd.f32 %v1630, 1.0
        %v1663 = vmul.f32 %v1631, 0.5
        %v1664 = vmul.f32 %v1632, 0.5
        %v1665 = vmul.f32 %v1633, 0.5
        %v1666 = vmul.f32 %v1634, 0.5
        %v1667 = vmul.f32 %v1635, 0.5
        %v1668 = vmul.f32 %v1636, 0.5
        %v1669 = vmul.f32 %v1637, 0.5
        %v1670 = vmul.f32 %v1638, 0.5
        %v1671 = vmul.f32 %v1639, 0.5
        %v1672 = vmul.f32 %v1640, 0.5
        %v1673 = vmul.f32 %v1641, 0.5
        %v1674 = vmul.f32 %v1642, 0.5
        %v1675 = vmul.f32 %v1643, 0.5
        %v1676 = vmul.f32 %v1644, 0.5
        %v1677 = vmul.f32 %v1645, 0.5
        %v1678 = vmul.f32 %v1646, 0.5
        %v1679 = vmul.f32 %v1647, 0.5
        %v1680 = vmul.f32 %v1648, 0.5
        %v1681 = vmul.f32 %v1649, 0.5
        %v1682 = vmul.f32 %v1650, 0.5
        %v1683 = vmul.f32 %v1651, 0.5
        %v1684 = vmul.f32 %v1652, 0.5
        %v1685 = vmul.f32 %v1653, 0.5
        %v1686 = vmul.f32 %v1654, 0.5
        %v1687 = vmul.f32 %v1655, 0.5
        %v1688 = vmul.f32 %v1656, 0.5
        %v1689 = vmul.f32 %v1657, 0.5
        %v1690 = vmul.f32 %v1658, 0.5
        %v1691 = vmul.f32 %v1659, 0.5
        %v1692 = vmul.f32 %v1660, 0.5
        %v1693 = vmul.f32 %v1661, 0.5
        %v1694 = vmul.f32 %v1662, 0.5
        %v1695 = vmul.f32 %v1361, %v1663
        %v1696 = vmul.f32 %v1363, %v1664
        %v1697 = vmul.f32 %v1365, %v1665
        %v1698 = vmul.f32 %v1367, %v1666
        %v1699 = vmul.f32 %v1371, %v1667
        %v1700 = vmul.f32 %v1373, %v1668
        %v1701 = vmul.f32 %v1375, %v1669
        %v1702 = vmul.f32 %v1377, %v1670
        %v1703 = vmul.f32 %v1381, %v1671
        %v1704 = vmul.f32 %v1383, %v1672
        %v1705 = vmul.f32 %v1385, %v1673
        %v1706 = vmul.f32 %v1387, %v1674
        %v1707 = vmul.f32 %v1391, %v1675
        %v1708 = vmul.f32 %v1393, %v1676
        %v1709 = vmul.f32 %v1395, %v1677
        %v1710 = vmul.f32 %v1397, %v1678
        %v1711 = vmul.f32 %v1401, %v1679
        %v1712 = vmul.f32 %v1403, %v1680
        %v1713 = vmul.f32 %v1405, %v1681
        %v1714 = vmul.f32 %v1407, %v1682
        %v1715 = vmul.f32 %v1411, %v1683
        %v1716 = vmul.f32 %v1413, %v1684
        %v1717 = vmul.f32 %v1415, %v1685
        %v1718 = vmul.f32 %v1417, %v1686
        %v1719 = vmul.f32 %v1421, %v1687
        %v1720 = vmul.f32 %v1423, %v1688
        %v1721 = vmul.f32 %v1425, %v1689
        %v1722 = vmul.f32 %v1427, %v1690
        %v1723 = vmul.f32 %v1431, %v1691
        %v1724 = vmul.f32 %v1433, %v1692
        %v1725 = vmul.f32 %v1435, %v1693
        %v1726 = vmul.f32 %v1437, %v1694
        %v1727 = vpack.c.bf16 %v1697, %v1695
        %v1728 = vpack.c.bf16 %v1698, %v1696
        %v1729 = vpack.c.bf16 %v1701, %v1699
        %v1730 = vpack.c.bf16 %v1702, %v1700
        %v1731 = vpack.c.bf16 %v1705, %v1703
        %v1732 = vpack.c.bf16 %v1706, %v1704
        %v1733 = vpack.c.bf16 %v1709, %v1707
        %v1734 = vpack.c.bf16 %v1710, %v1708
        %v1735 = vpack.c.bf16 %v1713, %v1711
        %v1736 = vpack.c.bf16 %v1714, %v1712
        %v1737 = vpack.c.bf16 %v1717, %v1715
        %v1738 = vpack.c.bf16 %v1718, %v1716
        %v1739 = vpack.c.bf16 %v1721, %v1719
        %v1740 = vpack.c.bf16 %v1722, %v1720
        %v1741 = vpack.c.bf16 %v1725, %v1723
        %v1742 = vpack.c.bf16 %v1726, %v1724
        %v1743 = vld [vmem:[%s7] sm:$0xf]
        %v1744 = vld [vmem:[%s7 + $0x4] sm:$0xf]
        %v1745 = vld [vmem:[%s7 + $0x8] sm:$0xf]
        %v1746 = vld [vmem:[%s7 + $0xc] sm:$0xf]
        %v1747 = vld [vmem:[%s7 + $0x10] sm:$0xf]
        %v1748 = vld [vmem:[%s7 + $0x14] sm:$0xf]
        %v1749 = vld [vmem:[%s7 + $0x18] sm:$0xf]
        %v1750 = vld [vmem:[%s7 + $0x1c] sm:$0xf]
        %v1751 = vld [vmem:[%s7 + $0x20] sm:$0xf]
        %v1752 = vld [vmem:[%s7 + $0x24] sm:$0xf]
        %v1753 = vld [vmem:[%s7 + $0x28] sm:$0xf]
        %v1754 = vld [vmem:[%s7 + $0x2c] sm:$0xf]
        %v1755 = vld [vmem:[%s7 + $0x30] sm:$0xf]
        %v1756 = vld [vmem:[%s7 + $0x34] sm:$0xf]
        %v1757 = vld [vmem:[%s7 + $0x38] sm:$0xf]
        %v1758 = vld [vmem:[%s7 + $0x3c] sm:$0xf]
        %v1759 = vld [vmem:[%s7 + $0x40] sm:$0xf]
        %v1760 = vld [vmem:[%s7 + $0x44] sm:$0xf]
        %v1761 = vld [vmem:[%s7 + $0x48] sm:$0xf]
        %v1762 = vld [vmem:[%s7 + $0x4c] sm:$0xf]
        %v1763 = vld [vmem:[%s7 + $0x50] sm:$0xf]
        %v1764 = vld [vmem:[%s7 + $0x54] sm:$0xf]
        %v1765 = vld [vmem:[%s7 + $0x58] sm:$0xf]
        %v1766 = vld [vmem:[%s7 + $0x5c] sm:$0xf]
        %v1767 = vld [vmem:[%s7 + $0x60] sm:$0xf]
        %v1768 = vld [vmem:[%s7 + $0x64] sm:$0xf]
        %v1769 = vld [vmem:[%s7 + $0x68] sm:$0xf]
        %v1770 = vld [vmem:[%s7 + $0x6c] sm:$0xf]
        %v1771 = vld [vmem:[%s7 + $0x70] sm:$0xf]
        %v1772 = vld [vmem:[%s7 + $0x74] sm:$0xf]
        %v1773 = vld [vmem:[%s7 + $0x78] sm:$0xf]
        %v1774 = vld [vmem:[%s7 + $0x7c] sm:$0xf]
        %v1775 = vld [vmem:[%s8] sm:$0x1]
        %v1777 = vlaneseq
        %v1778 = vshrl.u32 %v1777, 7
        %v1779 = vsub.s32 0, %v1778
        %v1780 = vrot.slane %v1775, %v1779
        %v1814 = vunpack.c.l.b16 %v1743
        %v1815 = vunpack.c.l.b16 %v1744
        %v1816 = vunpack.c.l.b16 %v1745
        %v1817 = vunpack.c.l.b16 %v1746
        %v1818 = vunpack.c.l.b16 %v1747
        %v1819 = vunpack.c.l.b16 %v1748
        %v1820 = vunpack.c.l.b16 %v1749
        %v1821 = vunpack.c.l.b16 %v1750
        %v1822 = vunpack.c.l.b16 %v1751
        %v1823 = vunpack.c.l.b16 %v1752
        %v1824 = vunpack.c.l.b16 %v1753
        %v1825 = vunpack.c.l.b16 %v1754
        %v1826 = vunpack.c.l.b16 %v1755
        %v1827 = vunpack.c.l.b16 %v1756
        %v1828 = vunpack.c.l.b16 %v1757
        %v1829 = vunpack.c.l.b16 %v1758
        %v1830 = vunpack.c.l.b16 %v1759
        %v1831 = vunpack.c.l.b16 %v1760
        %v1832 = vunpack.c.l.b16 %v1761
        %v1833 = vunpack.c.l.b16 %v1762
        %v1834 = vunpack.c.l.b16 %v1763
        %v1835 = vunpack.c.l.b16 %v1764
        %v1836 = vunpack.c.l.b16 %v1765
        %v1837 = vunpack.c.l.b16 %v1766
        %v1838 = vunpack.c.l.b16 %v1767
        %v1839 = vunpack.c.l.b16 %v1768
        %v1840 = vunpack.c.l.b16 %v1769
        %v1841 = vunpack.c.l.b16 %v1770
        %v1842 = vunpack.c.l.b16 %v1771
        %v1843 = vunpack.c.l.b16 %v1772
        %v1844 = vunpack.c.l.b16 %v1773
        %v1845 = vunpack.c.l.b16 %v1774
        %v1846 = vpack.c.b16 %v1815, %v1814
        %v1847 = vpack.c.b16 %v1817, %v1816
        %v1848 = vpack.c.b16 %v1819, %v1818
        %v1849 = vpack.c.b16 %v1821, %v1820
        %v1850 = vpack.c.b16 %v1823, %v1822
        %v1851 = vpack.c.b16 %v1825, %v1824
        %v1852 = vpack.c.b16 %v1827, %v1826
        %v1853 = vpack.c.b16 %v1829, %v1828
        %v1854 = vpack.c.b16 %v1831, %v1830
        %v1855 = vpack.c.b16 %v1833, %v1832
        %v1856 = vpack.c.b16 %v1835, %v1834
        %v1857 = vpack.c.b16 %v1837, %v1836
        %v1858 = vpack.c.b16 %v1839, %v1838
        %v1859 = vpack.c.b16 %v1841, %v1840
        %v1860 = vpack.c.b16 %v1843, %v1842
        %v1861 = vpack.c.b16 %v1845, %v1844
        %1878 = vmatprep.subr.bf16.mxu0 0
        %1879 = vmatpush1.bf16.msra.mxu0 %v1853
        %1880 = vmatprep.subr.bf16.mxu0 0
        %1881 = vmatpush1.bf16.msra.mxu0 %v1852
        %1882 = vmatprep.subr.bf16.mxu0 0
        %1883 = vmatpush1.bf16.msra.mxu0 %v1851
        %1884 = vmatprep.subr.bf16.mxu0 0
        %1885 = vmatpush1.bf16.msra.mxu0 %v1850
        %1886 = vmatprep.subr.bf16.mxu0 0
        %1887 = vmatpush1.bf16.msra.mxu0 %v1849
        %1888 = vmatprep.subr.bf16.mxu0 0
        %1889 = vmatpush1.bf16.msra.mxu0 %v1848
        %1890 = vmatprep.subr.bf16.mxu0 0
        %1891 = vmatpush1.bf16.msra.mxu0 %v1847
        %1892 = vmatprep.subr.bf16.mxu0 0
        %1893 = vmatpush1.bf16.msra.mxu0 %v1846
        %1894 = vmatprep.subr.bf16.mxu0 0
        %1895 = vmatpush2.bf16.msra.mxu0 %v1861
        %1896 = vmatprep.subr.bf16.mxu0 0
        %1897 = vmatpush2.bf16.msra.mxu0 %v1860
        %1898 = vmatprep.subr.bf16.mxu0 0
        %1899 = vmatpush2.bf16.msra.mxu0 %v1859
        %1900 = vmatprep.subr.bf16.mxu0 0
        %1901 = vmatpush2.bf16.msra.mxu0 %v1858
        %1902 = vmatprep.subr.bf16.mxu0 0
        %1903 = vmatpush2.bf16.msra.mxu0 %v1857
        %1904 = vmatprep.subr.bf16.mxu0 0
        %1905 = vmatpush2.bf16.msra.mxu0 %v1856
        %1906 = vmatprep.subr.bf16.mxu0 0
        %1907 = vmatpush2.bf16.msra.mxu0 %v1855
        %1908 = vmatprep.subr.bf16.mxu0 0
        %1909 = vmatpush2.bf16.msra.mxu0 %v1854
        %1910 = vmatprep.mubr.bf16.mxu0 %v1728
        %1911 = vmatmul.mubr.bf16.gmra.mxu0 %v1727
        %v1912 = vpop.f32.mrf.mxu0
        %v1913 = vadd.f32 %v1780, %v1912
        %v1914 = vpop.f32.mrf.mxu0
        %v1915 = vpop.f32.mrf.mxu0
        %v1916 = vadd.f32 %v1780, %v1915
        %v1917 = vpop.f32.mrf.mxu0
        %1918 = vmatprep.mubr.bf16.mxu0 %v1730
        %1919 = vmatmul.mubr.bf16.gmra.mxu0 %v1729
        %v1920 = vpop.f32.mrf.mxu0
        %v1921 = vadd.f32 %v1780, %v1920
        %v1922 = vpop.f32.mrf.mxu0
        %v1923 = vpop.f32.mrf.mxu0
        %v1924 = vadd.f32 %v1780, %v1923
        %v1925 = vpop.f32.mrf.mxu0
        %1926 = vmatprep.mubr.bf16.mxu0 %v1732
        %1927 = vmatmul.mubr.bf16.gmra.mxu0 %v1731
        %v1928 = vpop.f32.mrf.mxu0
        %v1929 = vadd.f32 %v1780, %v1928
        %v1930 = vpop.f32.mrf.mxu0
        %v1931 = vpop.f32.mrf.mxu0
        %v1932 = vadd.f32 %v1780, %v1931
        %v1933 = vpop.f32.mrf.mxu0
        %1934 = vmatprep.mubr.bf16.mxu0 %v1734
        %1935 = vmatmul.mubr.bf16.gmra.mxu0 %v1733
        %v1936 = vpop.f32.mrf.mxu0
        %v1937 = vadd.f32 %v1780, %v1936
        %v1938 = vpop.f32.mrf.mxu0
        %v1939 = vpop.f32.mrf.mxu0
        %v1940 = vadd.f32 %v1780, %v1939
        %v1941 = vpop.f32.mrf.mxu0
        %1942 = vmatprep.mubr.bf16.mxu0 %v1736
        %1943 = vmatmul.mubr.bf16.gmra.mxu0 %v1735
        %v1944 = vpop.f32.mrf.mxu0
        %v1945 = vadd.f32 %v1780, %v1944
        %v1946 = vpop.f32.mrf.mxu0
        %v1947 = vpop.f32.mrf.mxu0
        %v1948 = vadd.f32 %v1780, %v1947
        %v1949 = vpop.f32.mrf.mxu0
        %1950 = vmatprep.mubr.bf16.mxu0 %v1738
        %1951 = vmatmul.mubr.bf16.gmra.mxu0 %v1737
        %v1952 = vpop.f32.mrf.mxu0
        %v1953 = vadd.f32 %v1780, %v1952
        %v1954 = vpop.f32.mrf.mxu0
        %v1955 = vpop.f32.mrf.mxu0
        %v1956 = vadd.f32 %v1780, %v1955
        %v1957 = vpop.f32.mrf.mxu0
        %1958 = vmatprep.mubr.bf16.mxu0 %v1740
        %1959 = vmatmul.mubr.bf16.gmra.mxu0 %v1739
        %v1960 = vpop.f32.mrf.mxu0
        %v1961 = vadd.f32 %v1780, %v1960
        %v1962 = vpop.f32.mrf.mxu0
        %v1963 = vpop.f32.mrf.mxu0
        %v1964 = vadd.f32 %v1780, %v1963
        %v1965 = vpop.f32.mrf.mxu0
        %1966 = vmatprep.mubr.bf16.mxu0 %v1742
        %1967 = vmatmul.mubr.bf16.gmra.mxu0 %v1741
        %v1968 = vpop.f32.mrf.mxu0
        %v1969 = vadd.f32 %v1780, %v1968
        %v1970 = vpop.f32.mrf.mxu0
        %v1971 = vpop.f32.mrf.mxu0
        %v1972 = vadd.f32 %v1780, %v1971
        %v1973 = vpop.f32.mrf.mxu0
        %1974 = vdwg.mxu0
        %v1975 = vadd.f32 %v986, %v1913
        %v1976 = vadd.f32 %v987, %v1916
        %v1977 = vadd.f32 %v988, %v1921
        %v1978 = vadd.f32 %v989, %v1924
        %v1979 = vadd.f32 %v990, %v1929
        %v1980 = vadd.f32 %v991, %v1932
        %v1981 = vadd.f32 %v992, %v1937
        %v1982 = vadd.f32 %v993, %v1940
        %v1983 = vadd.f32 %v994, %v1945
        %v1984 = vadd.f32 %v995, %v1948
        %v1985 = vadd.f32 %v996, %v1953
        %v1986 = vadd.f32 %v997, %v1956
        %v1987 = vadd.f32 %v998, %v1961
        %v1988 = vadd.f32 %v999, %v1964
        %v1989 = vadd.f32 %v1000, %v1969
        %v1990 = vadd.f32 %v1001, %v1972
        %1991 = vst [vmem:[%s366] sm:$0xff] %v1975
        %1992 = vst [vmem:[%s366 + $0x8] sm:$0xff] %v1976
        %1993 = vst [vmem:[%s366 + $0x10] sm:$0xff] %v1977
        %1994 = vst [vmem:[%s366 + $0x18] sm:$0xff] %v1978
        %1995 = vst [vmem:[%s366 + $0x20] sm:$0xff] %v1979
        %1996 = vst [vmem:[%s366 + $0x28] sm:$0xff] %v1980
        %1997 = vst [vmem:[%s366 + $0x30] sm:$0xff] %v1981
        %1998 = vst [vmem:[%s366 + $0x38] sm:$0xff] %v1982
        %1999 = vst [vmem:[%s366 + $0x40] sm:$0xff] %v1983
        %2000 = vst [vmem:[%s366 + $0x48] sm:$0xff] %v1984
        %2001 = vst [vmem:[%s366 + $0x50] sm:$0xff] %v1985
        %2002 = vst [vmem:[%s366 + $0x58] sm:$0xff] %v1986
        %2003 = vst [vmem:[%s366 + $0x60] sm:$0xff] %v1987
        %2004 = vst [vmem:[%s366 + $0x68] sm:$0xff] %v1988
        %2005 = vst [vmem:[%s366 + $0x70] sm:$0xff] %v1989
        %2006 = vst [vmem:[%s366 + $0x78] sm:$0xff] %v1990
        %s2007 = scalar_lea.vmem %s328, 128 [#allocation2]
        %v2008 = vld [vmem:[%s2007] sm:$0xff]
        %v2009 = vld [vmem:[%s2007 + $0x8] sm:$0xff]
        %v2010 = vld [vmem:[%s2007 + $0x10] sm:$0xff]
        %v2011 = vld [vmem:[%s2007 + $0x18] sm:$0xff]
        %v2012 = vld [vmem:[%s2007 + $0x20] sm:$0xff]
        %v2013 = vld [vmem:[%s2007 + $0x28] sm:$0xff]
        %v2014 = vld [vmem:[%s2007 + $0x30] sm:$0xff]
        %v2015 = vld [vmem:[%s2007 + $0x38] sm:$0xff]
        %v2016 = vld [vmem:[%s2007 + $0x40] sm:$0xff]
        %v2017 = vld [vmem:[%s2007 + $0x48] sm:$0xff]
        %v2018 = vld [vmem:[%s2007 + $0x50] sm:$0xff]
        %v2019 = vld [vmem:[%s2007 + $0x58] sm:$0xff]
        %v2020 = vld [vmem:[%s2007 + $0x60] sm:$0xff]
        %v2021 = vld [vmem:[%s2007 + $0x68] sm:$0xff]
        %v2022 = vld [vmem:[%s2007 + $0x70] sm:$0xff]
        %v2023 = vld [vmem:[%s2007 + $0x78] sm:$0xff]
        %v2024 = vadd.f32 %v2008, %v2009
        %v2025 = vadd.f32 %v2024, %v2010
        %v2026 = vadd.f32 %v2025, %v2011
        %v2027 = vadd.f32 %v2026, %v2012
        %v2028 = vadd.f32 %v2027, %v2013
        %v2029 = vadd.f32 %v2028, %v2014
        %v2030 = vadd.f32 %v2029, %v2015
        %v2031 = vadd.f32 %v2030, %v2016
        %v2032 = vadd.f32 %v2031, %v2017
        %v2033 = vadd.f32 %v2032, %v2018
        %v2034 = vadd.f32 %v2033, %v2019
        %v2035 = vadd.f32 %v2034, %v2020
        %v2036 = vadd.f32 %v2035, %v2021
        %v2037 = vadd.f32 %v2036, %v2022
        %v2038 = vadd.f32 %v2037, %v2023
        %v2039 = vrot.slane %v2038, 4
        %v2040 = vadd.f32 %v2038, %v2039
        %v2041 = vrot.slane %v2040, 2
        %v2042 = vadd.f32 %v2040, %v2041
        %v2043 = vrot.slane %v2042, 1
        %v2044 = vadd.f32 %v2042, %v2043
        %v2045 = vmul.f32 %v2044, %v407
        %v2046 = vmul.f32 %v2008, %v2008
        %v2047 = vmul.f32 %v2009, %v2009
        %v2048 = vmul.f32 %v2010, %v2010
        %v2049 = vmul.f32 %v2011, %v2011
        %v2050 = vmul.f32 %v2012, %v2012
        %v2051 = vmul.f32 %v2013, %v2013
        %v2052 = vmul.f32 %v2014, %v2014
        %v2053 = vmul.f32 %v2015, %v2015
        %v2054 = vmul.f32 %v2016, %v2016
        %v2055 = vmul.f32 %v2017, %v2017
        %v2056 = vmul.f32 %v2018, %v2018
        %v2057 = vmul.f32 %v2019, %v2019
        %v2058 = vmul.f32 %v2020, %v2020
        %v2059 = vmul.f32 %v2021, %v2021
        %v2060 = vmul.f32 %v2022, %v2022
        %v2061 = vmul.f32 %v2023, %v2023
        %v2062 = vadd.f32 %v2046, %v2047
        %v2063 = vadd.f32 %v2062, %v2048
        %v2064 = vadd.f32 %v2063, %v2049
        %v2065 = vadd.f32 %v2064, %v2050
        %v2066 = vadd.f32 %v2065, %v2051
        %v2067 = vadd.f32 %v2066, %v2052
        %v2068 = vadd.f32 %v2067, %v2053
        %v2069 = vadd.f32 %v2068, %v2054
        %v2070 = vadd.f32 %v2069, %v2055
        %v2071 = vadd.f32 %v2070, %v2056
        %v2072 = vadd.f32 %v2071, %v2057
        %v2073 = vadd.f32 %v2072, %v2058
        %v2074 = vadd.f32 %v2073, %v2059
        %v2075 = vadd.f32 %v2074, %v2060
        %v2076 = vadd.f32 %v2075, %v2061
        %v2077 = vrot.slane %v2076, 4
        %v2078 = vadd.f32 %v2076, %v2077
        %v2079 = vrot.slane %v2078, 2
        %v2080 = vadd.f32 %v2078, %v2079
        %v2081 = vrot.slane %v2080, 1
        %v2082 = vadd.f32 %v2080, %v2081
        %v2083 = vmul.f32 %v2082, %v407
        %v2084 = vsub.f32 %v2008, %v2045
        %v2085 = vsub.f32 %v2009, %v2045
        %v2086 = vsub.f32 %v2010, %v2045
        %v2087 = vsub.f32 %v2011, %v2045
        %v2088 = vsub.f32 %v2012, %v2045
        %v2089 = vsub.f32 %v2013, %v2045
        %v2090 = vsub.f32 %v2014, %v2045
        %v2091 = vsub.f32 %v2015, %v2045
        %v2092 = vsub.f32 %v2016, %v2045
        %v2093 = vsub.f32 %v2017, %v2045
        %v2094 = vsub.f32 %v2018, %v2045
        %v2095 = vsub.f32 %v2019, %v2045
        %v2096 = vsub.f32 %v2020, %v2045
        %v2097 = vsub.f32 %v2021, %v2045
        %v2098 = vsub.f32 %v2022, %v2045
        %v2099 = vsub.f32 %v2023, %v2045
        %v2100 = vmul.f32 %v2045, %v2045
        %v2101 = vsub.f32 %v2083, %v2100
        %v2102 = vadd.f32 %v2101, 1e-05
        %v2103 = vrsqrt.pop %v2102
        %v2104 = vmul.f32 %v2084, %v2103
        %v2105 = vmul.f32 %v2085, %v2103
        %v2106 = vmul.f32 %v2086, %v2103
        %v2107 = vmul.f32 %v2087, %v2103
        %v2108 = vmul.f32 %v2088, %v2103
        %v2109 = vmul.f32 %v2089, %v2103
        %v2110 = vmul.f32 %v2090, %v2103
        %v2111 = vmul.f32 %v2091, %v2103
        %v2112 = vmul.f32 %v2092, %v2103
        %v2113 = vmul.f32 %v2093, %v2103
        %v2114 = vmul.f32 %v2094, %v2103
        %v2115 = vmul.f32 %v2095, %v2103
        %v2116 = vmul.f32 %v2096, %v2103
        %v2117 = vmul.f32 %v2097, %v2103
        %v2118 = vmul.f32 %v2098, %v2103
        %v2119 = vmul.f32 %v2099, %v2103
        %v2120 = vpack.c.bf16 %v2105, %v2104
        %v2121 = vpack.c.bf16 %v2107, %v2106
        %v2122 = vpack.c.bf16 %v2109, %v2108
        %v2123 = vpack.c.bf16 %v2111, %v2110
        %v2124 = vpack.c.bf16 %v2113, %v2112
        %v2125 = vpack.c.bf16 %v2115, %v2114
        %v2126 = vpack.c.bf16 %v2117, %v2116
        %v2127 = vpack.c.bf16 %v2119, %v2118
        %v2128 = vld [vmem:[#allocation5] sm:$0xf]
        %v2129 = vld [vmem:[#allocation5 + $0x4] sm:$0xf]
        %v2130 = vld [vmem:[#allocation5 + $0x8] sm:$0xf]
        %v2131 = vld [vmem:[#allocation5 + $0xc] sm:$0xf]
        %v2132 = vld [vmem:[#allocation5 + $0x10] sm:$0xf]
        %v2133 = vld [vmem:[#allocation5 + $0x14] sm:$0xf]
        %v2134 = vld [vmem:[#allocation5 + $0x18] sm:$0xf]
        %v2135 = vld [vmem:[#allocation5 + $0x1c] sm:$0xf]
        %v2136 = vld [vmem:[%s2] sm:$0xff]
        %v2137 = vld [vmem:[%s2 + $0x8] sm:$0xff]
        %v2138 = vld [vmem:[%s2 + $0x10] sm:$0xff]
        %v2139 = vld [vmem:[%s2 + $0x18] sm:$0xff]
        %v2140 = vld [vmem:[%s2 + $0x20] sm:$0xff]
        %v2141 = vld [vmem:[%s2 + $0x28] sm:$0xff]
        %v2142 = vld [vmem:[%s2 + $0x30] sm:$0xff]
        %v2143 = vld [vmem:[%s2 + $0x38] sm:$0xff]
        %2145 = vset.pattern.permute.xlu0 0
        %2146 = vperm.xlu0 %2145, %v2136
        %v2147 = vpop.permute.xlu0 %2146
        %2150 = vset.pattern.permute.xlu0 0
        %2151 = vperm.xlu0 %2150, %v2137
        %v2152 = vpop.permute.xlu0 %2151
        %2155 = vset.pattern.permute.xlu0 0
        %2156 = vperm.xlu0 %2155, %v2138
        %v2157 = vpop.permute.xlu0 %2156
        %2160 = vset.pattern.permute.xlu0 0
        %2161 = vperm.xlu0 %2160, %v2139
        %v2162 = vpop.permute.xlu0 %2161
        %2165 = vset.pattern.permute.xlu0 0
        %2166 = vperm.xlu0 %2165, %v2140
        %v2167 = vpop.permute.xlu0 %2166
        %2170 = vset.pattern.permute.xlu0 0
        %2171 = vperm.xlu0 %2170, %v2141
        %v2172 = vpop.permute.xlu0 %2171
        %2175 = vset.pattern.permute.xlu0 0
        %2176 = vperm.xlu0 %2175, %v2142
        %v2177 = vpop.permute.xlu0 %2176
        %2180 = vset.pattern.permute.xlu0 0
        %2181 = vperm.xlu0 %2180, %v2143
        %v2182 = vpop.permute.xlu0 %2181
        %v2192 = vunpack.c.l.b16 %v2128
        %v2193 = vunpack.c.l.b16 %v2129
        %v2194 = vunpack.c.l.b16 %v2130
        %v2195 = vunpack.c.l.b16 %v2131
        %v2196 = vunpack.c.l.b16 %v2132
        %v2197 = vunpack.c.l.b16 %v2133
        %v2198 = vunpack.c.l.b16 %v2134
        %v2199 = vunpack.c.l.b16 %v2135
        %v2200 = vpack.c.b16 %v2193, %v2192
        %v2201 = vpack.c.b16 %v2195, %v2194
        %v2202 = vpack.c.b16 %v2197, %v2196
        %v2203 = vpack.c.b16 %v2199, %v2198
        %2208 = vmatprep.subr.bf16.mxu0 0
        %2209 = vmatpush1.bf16.msra.mxu0 %v2127
        %2210 = vmatprep.subr.bf16.mxu0 0
        %2211 = vmatpush1.bf16.msra.mxu0 %v2126
        %2212 = vmatprep.subr.bf16.mxu0 0
        %2213 = vmatpush1.bf16.msra.mxu0 %v2125
        %2214 = vmatprep.subr.bf16.mxu0 0
        %2215 = vmatpush1.bf16.msra.mxu0 %v2124
        %2216 = vmatprep.subr.bf16.mxu0 0
        %2217 = vmatpush1.bf16.msra.mxu0 %v2123
        %2218 = vmatprep.subr.bf16.mxu0 0
        %2219 = vmatpush1.bf16.msra.mxu0 %v2122
        %2220 = vmatprep.subr.bf16.mxu0 0
        %2221 = vmatpush1.bf16.msra.mxu0 %v2121
        %2222 = vmatprep.subr.bf16.mxu0 0
        %2223 = vmatpush1.bf16.msra.mxu0 %v2120
        %2224 = vmatprep.subr.bf16.mxu0 0
        %2225 = vmatpush2.bf16.msra.mxu0 0
        %2226 = vmatprep.subr.bf16.mxu0 0
        %2227 = vmatpush2.bf16.msra.mxu0 0
        %2228 = vmatprep.subr.bf16.mxu0 0
        %2229 = vmatpush2.bf16.msra.mxu0 0
        %2230 = vmatprep.subr.bf16.mxu0 0
        %2231 = vmatpush2.bf16.msra.mxu0 0
        %2232 = vmatprep.subr.bf16.mxu0 0
        %2233 = vmatpush2.bf16.msra.mxu0 0
        %2234 = vmatprep.subr.bf16.mxu0 0
        %2235 = vmatpush2.bf16.msra.mxu0 0
        %2236 = vmatprep.subr.bf16.mxu0 0
        %2237 = vmatpush2.bf16.msra.mxu0 0
        %2238 = vmatprep.subr.bf16.mxu0 0
        %2239 = vmatpush2.bf16.msra.mxu0 0
        %2240 = vmatprep.mubr.bf16.mxu0 0
        %2241 = vmatmul.mubr.bf16.gmra.mxu0 %v2200
        %v2242 = vpop.f32.mrf.mxu0
        %v2243 = vadd.f32 %v2147, %v2242
        %v2244 = vpop.f32.mrf.mxu0
        %v2245 = vpop.f32.mrf.mxu0
        %v2246 = vadd.f32 %v2152, %v2245
        %v2247 = vpop.f32.mrf.mxu0
        %2248 = vmatprep.mubr.bf16.mxu0 0
        %2249 = vmatmul.mubr.bf16.gmra.mxu0 %v2201
        %v2250 = vpop.f32.mrf.mxu0
        %v2251 = vadd.f32 %v2157, %v2250
        %v2252 = vpop.f32.mrf.mxu0
        %v2253 = vpop.f32.mrf.mxu0
        %v2254 = vadd.f32 %v2162, %v2253
        %v2255 = vpop.f32.mrf.mxu0
        %2256 = vmatprep.mubr.bf16.mxu0 0
        %2257 = vmatmul.mubr.bf16.gmra.mxu0 %v2202
        %v2258 = vpop.f32.mrf.mxu0
        %v2259 = vadd.f32 %v2167, %v2258
        %v2260 = vpop.f32.mrf.mxu0
        %v2261 = vpop.f32.mrf.mxu0
        %v2262 = vadd.f32 %v2172, %v2261
        %v2263 = vpop.f32.mrf.mxu0
        %2264 = vmatprep.mubr.bf16.mxu0 0
        %2265 = vmatmul.mubr.bf16.gmra.mxu0 %v2203
        %v2266 = vpop.f32.mrf.mxu0
        %v2267 = vadd.f32 %v2177, %v2266
        %v2268 = vpop.f32.mrf.mxu0
        %v2269 = vpop.f32.mrf.mxu0
        %v2270 = vadd.f32 %v2182, %v2269
        %v2271 = vpop.f32.mrf.mxu0
        %2272 = vdwg.mxu0
        %v2273 = vmul.f32 %v2243, %v2243
        %v2274 = vmul.f32 %v2246, %v2246
        %v2275 = vmul.f32 %v2251, %v2251
        %v2276 = vmul.f32 %v2254, %v2254
        %v2277 = vmul.f32 %v2259, %v2259
        %v2278 = vmul.f32 %v2262, %v2262
        %v2279 = vmul.f32 %v2267, %v2267
        %v2280 = vmul.f32 %v2270, %v2270
        %v2281 = vmul.f32 %v2243, %v2273
        %v2282 = vmul.f32 %v2246, %v2274
        %v2283 = vmul.f32 %v2251, %v2275
        %v2284 = vmul.f32 %v2254, %v2276
        %v2285 = vmul.f32 %v2259, %v2277
        %v2286 = vmul.f32 %v2262, %v2278
        %v2287 = vmul.f32 %v2267, %v2279
        %v2288 = vmul.f32 %v2270, %v2280
        %v2289 = vmul.f32 %v2281, 0.044715
        %v2290 = vmul.f32 %v2282, 0.044715
        %v2291 = vmul.f32 %v2283, 0.044715
        %v2292 = vmul.f32 %v2284, 0.044715
        %v2293 = vmul.f32 %v2285, 0.044715
        %v2294 = vmul.f32 %v2286, 0.044715
        %v2295 = vmul.f32 %v2287, 0.044715
        %v2296 = vmul.f32 %v2288, 0.044715
        %v2297 = vadd.f32 %v2243, %v2289
        %v2298 = vadd.f32 %v2246, %v2290
        %v2299 = vadd.f32 %v2251, %v2291
        %v2300 = vadd.f32 %v2254, %v2292
        %v2301 = vadd.f32 %v2259, %v2293
        %v2302 = vadd.f32 %v2262, %v2294
        %v2303 = vadd.f32 %v2267, %v2295
        %v2304 = vadd.f32 %v2270, %v2296
        %v2305 = vmul.f32 %v2297, 0.7978846
        %v2306 = vmul.f32 %v2298, 0.7978846
        %v2307 = vmul.f32 %v2299, 0.7978846
        %v2308 = vmul.f32 %v2300, 0.7978846
        %v2309 = vmul.f32 %v2301, 0.7978846
        %v2310 = vmul.f32 %v2302, 0.7978846
        %v2311 = vmul.f32 %v2303, 0.7978846
        %v2312 = vmul.f32 %v2304, 0.7978846
        %v2313 = vtanh.pop %v2305
        %v2314 = vtanh.pop %v2306
        %v2315 = vtanh.pop %v2307
        %v2316 = vtanh.pop %v2308
        %v2317 = vtanh.pop %v2309
        %v2318 = vtanh.pop %v2310
        %v2319 = vtanh.pop %v2311
        %v2320 = vtanh.pop %v2312
        %v2321 = vadd.f32 %v2313, 1.0
        %v2322 = vadd.f32 %v2314, 1.0
        %v2323 = vadd.f32 %v2315, 1.0
        %v2324 = vadd.f32 %v2316, 1.0
        %v2325 = vadd.f32 %v2317, 1.0
        %v2326 = vadd.f32 %v2318, 1.0
        %v2327 = vadd.f32 %v2319, 1.0
        %v2328 = vadd.f32 %v2320, 1.0
        %v2329 = vmul.f32 %v2321, 0.5
        %v2330 = vmul.f32 %v2322, 0.5
        %v2331 = vmul.f32 %v2323, 0.5
        %v2332 = vmul.f32 %v2324, 0.5
        %v2333 = vmul.f32 %v2325, 0.5
        %v2334 = vmul.f32 %v2326, 0.5
        %v2335 = vmul.f32 %v2327, 0.5
        %v2336 = vmul.f32 %v2328, 0.5
        %v2337 = vmul.f32 %v2243, %v2329
        %v2338 = vmul.f32 %v2246, %v2330
        %v2339 = vmul.f32 %v2251, %v2331
        %v2340 = vmul.f32 %v2254, %v2332
        %v2341 = vmul.f32 %v2259, %v2333
        %v2342 = vmul.f32 %v2262, %v2334
        %v2343 = vmul.f32 %v2267, %v2335
        %v2344 = vmul.f32 %v2270, %v2336
        %v2345 = vpack.c.bf16 %v2338, %v2337
        %v2346 = vpack.c.bf16 %v2340, %v2339
        %v2347 = vpack.c.bf16 %v2342, %v2341
        %v2348 = vpack.c.bf16 %v2344, %v2343
        %v2349 = vld [vmem:[%s3] sm:$0xf]
        %v2350 = vld [vmem:[%s3 + $0x4] sm:$0xf]
        %v2351 = vld [vmem:[%s3 + $0x8] sm:$0xf]
        %v2352 = vld [vmem:[%s3 + $0xc] sm:$0xf]
        %v2353 = vld [vmem:[%s3 + $0x10] sm:$0xf]
        %v2354 = vld [vmem:[%s3 + $0x14] sm:$0xf]
        %v2355 = vld [vmem:[%s3 + $0x18] sm:$0xf]
        %v2356 = vld [vmem:[%s3 + $0x1c] sm:$0xf]
        %v2357 = vld [vmem:[%s3 + $0x20] sm:$0xf]
        %v2358 = vld [vmem:[%s3 + $0x24] sm:$0xf]
        %v2359 = vld [vmem:[%s3 + $0x28] sm:$0xf]
        %v2360 = vld [vmem:[%s3 + $0x2c] sm:$0xf]
        %v2361 = vld [vmem:[%s3 + $0x30] sm:$0xf]
        %v2362 = vld [vmem:[%s3 + $0x34] sm:$0xf]
        %v2363 = vld [vmem:[%s3 + $0x38] sm:$0xf]
        %v2364 = vld [vmem:[%s3 + $0x3c] sm:$0xf]
        %v2365 = vld [vmem:[%s4] sm:$0xff]
        %v2366 = vld [vmem:[%s4 + $0x8] sm:$0xff]
        %v2367 = vld [vmem:[%s4 + $0x10] sm:$0xff]
        %v2368 = vld [vmem:[%s4 + $0x18] sm:$0xff]
        %v2369 = vld [vmem:[%s4 + $0x20] sm:$0xff]
        %v2370 = vld [vmem:[%s4 + $0x28] sm:$0xff]
        %v2371 = vld [vmem:[%s4 + $0x30] sm:$0xff]
        %v2372 = vld [vmem:[%s4 + $0x38] sm:$0xff]
        %v2373 = vld [vmem:[%s4 + $0x40] sm:$0xff]
        %v2374 = vld [vmem:[%s4 + $0x48] sm:$0xff]
        %v2375 = vld [vmem:[%s4 + $0x50] sm:$0xff]
        %v2376 = vld [vmem:[%s4 + $0x58] sm:$0xff]
        %v2377 = vld [vmem:[%s4 + $0x60] sm:$0xff]
        %v2378 = vld [vmem:[%s4 + $0x68] sm:$0xff]
        %v2379 = vld [vmem:[%s4 + $0x70] sm:$0xff]
        %v2380 = vld [vmem:[%s4 + $0x78] sm:$0xff]
        %2382 = vset.pattern.permute.xlu0 0
        %2383 = vperm.xlu0 %2382, %v2365
        %v2384 = vpop.permute.xlu0 %2383
        %2387 = vset.pattern.permute.xlu0 0
        %2388 = vperm.xlu0 %2387, %v2366
        %v2389 = vpop.permute.xlu0 %2388
        %2392 = vset.pattern.permute.xlu0 0
        %2393 = vperm.xlu0 %2392, %v2367
        %v2394 = vpop.permute.xlu0 %2393
        %2397 = vset.pattern.permute.xlu0 0
        %2398 = vperm.xlu0 %2397, %v2368
        %v2399 = vpop.permute.xlu0 %2398
        %2402 = vset.pattern.permute.xlu0 0
        %2403 = vperm.xlu0 %2402, %v2369
        %v2404 = vpop.permute.xlu0 %2403
        %2407 = vset.pattern.permute.xlu0 0
        %2408 = vperm.xlu0 %2407, %v2370
        %v2409 = vpop.permute.xlu0 %2408
        %2412 = vset.pattern.permute.xlu0 0
        %2413 = vperm.xlu0 %2412, %v2371
        %v2414 = vpop.permute.xlu0 %2413
        %2417 = vset.pattern.permute.xlu0 0
        %2418 = vperm.xlu0 %2417, %v2372
        %v2419 = vpop.permute.xlu0 %2418
        %2422 = vset.pattern.permute.xlu0 0
        %2423 = vperm.xlu0 %2422, %v2373
        %v2424 = vpop.permute.xlu0 %2423
        %2427 = vset.pattern.permute.xlu0 0
        %2428 = vperm.xlu0 %2427, %v2374
        %v2429 = vpop.permute.xlu0 %2428
        %2432 = vset.pattern.permute.xlu0 0
        %2433 = vperm.xlu0 %2432, %v2375
        %v2434 = vpop.permute.xlu0 %2433
        %2437 = vset.pattern.permute.xlu0 0
        %2438 = vperm.xlu0 %2437, %v2376
        %v2439 = vpop.permute.xlu0 %2438
        %2442 = vset.pattern.permute.xlu0 0
        %2443 = vperm.xlu0 %2442, %v2377
        %v2444 = vpop.permute.xlu0 %2443
        %2447 = vset.pattern.permute.xlu0 0
        %2448 = vperm.xlu0 %2447, %v2378
        %v2449 = vpop.permute.xlu0 %2448
        %2452 = vset.pattern.permute.xlu0 0
        %2453 = vperm.xlu0 %2452, %v2379
        %v2454 = vpop.permute.xlu0 %2453
        %2457 = vset.pattern.permute.xlu0 0
        %2458 = vperm.xlu0 %2457, %v2380
        %v2459 = vpop.permute.xlu0 %2458
        %v2477 = vunpack.c.l.b16 %v2349
        %v2478 = vunpack.c.l.b16 %v2350
        %v2479 = vunpack.c.l.b16 %v2351
        %v2480 = vunpack.c.l.b16 %v2352
        %v2481 = vunpack.c.l.b16 %v2353
        %v2482 = vunpack.c.l.b16 %v2354
        %v2483 = vunpack.c.l.b16 %v2355
        %v2484 = vunpack.c.l.b16 %v2356
        %v2485 = vunpack.c.l.b16 %v2357
        %v2486 = vunpack.c.l.b16 %v2358
        %v2487 = vunpack.c.l.b16 %v2359
        %v2488 = vunpack.c.l.b16 %v2360
        %v2489 = vunpack.c.l.b16 %v2361
        %v2490 = vunpack.c.l.b16 %v2362
        %v2491 = vunpack.c.l.b16 %v2363
        %v2492 = vunpack.c.l.b16 %v2364
        %v2493 = vpack.c.b16 %v2478, %v2477
        %v2494 = vpack.c.b16 %v2480, %v2479
        %v2495 = vpack.c.b16 %v2482, %v2481
        %v2496 = vpack.c.b16 %v2484, %v2483
        %v2497 = vpack.c.b16 %v2486, %v2485
        %v2498 = vpack.c.b16 %v2488, %v2487
        %v2499 = vpack.c.b16 %v2490, %v2489
        %v2500 = vpack.c.b16 %v2492, %v2491
        %v2502 = vsel %vm864, %v2493, 0
        %v2505 = vsel %vm864, %v2494, 0
        %v2508 = vsel %vm864, %v2495, 0
        %v2511 = vsel %vm864, %v2496, 0
        %v2514 = vsel %vm864, %v2497, 0
        %v2517 = vsel %vm864, %v2498, 0
        %v2520 = vsel %vm864, %v2499, 0
        %v2523 = vsel %vm864, %v2500, 0
        %2525 = vmatprep.subr.bf16.mxu0 0
        %2526 = vmatpush1.bf16.msra.mxu0 0
        %2527 = vmatprep.subr.bf16.mxu0 0
        %2528 = vmatpush1.bf16.msra.mxu0 0
        %2529 = vmatprep.subr.bf16.mxu0 0
        %2530 = vmatpush1.bf16.msra.mxu0 0
        %2531 = vmatprep.subr.bf16.mxu0 0
        %2532 = vmatpush1.bf16.msra.mxu0 0
        %2533 = vmatprep.subr.bf16.mxu0 0
        %2534 = vmatpush1.bf16.msra.mxu0 %v2348
        %2535 = vmatprep.subr.bf16.mxu0 0
        %2536 = vmatpush1.bf16.msra.mxu0 %v2347
        %2537 = vmatprep.subr.bf16.mxu0 0
        %2538 = vmatpush1.bf16.msra.mxu0 %v2346
        %2539 = vmatprep.subr.bf16.mxu0 0
        %2540 = vmatpush1.bf16.msra.mxu0 %v2345
        %2541 = vmatprep.subr.bf16.mxu0 0
        %2542 = vmatpush2.bf16.msra.mxu0 0
        %2543 = vmatprep.subr.bf16.mxu0 0
        %2544 = vmatpush2.bf16.msra.mxu0 0
        %2545 = vmatprep.subr.bf16.mxu0 0
        %2546 = vmatpush2.bf16.msra.mxu0 0
        %2547 = vmatprep.subr.bf16.mxu0 0
        %2548 = vmatpush2.bf16.msra.mxu0 0
        %2549 = vmatprep.subr.bf16.mxu0 0
        %2550 = vmatpush2.bf16.msra.mxu0 0
        %2551 = vmatprep.subr.bf16.mxu0 0
        %2552 = vmatpush2.bf16.msra.mxu0 0
        %2553 = vmatprep.subr.bf16.mxu0 0
        %2554 = vmatpush2.bf16.msra.mxu0 0
        %2555 = vmatprep.subr.bf16.mxu0 0
        %2556 = vmatpush2.bf16.msra.mxu0 0
        %2557 = vmatprep.mubr.bf16.mxu0 0
        %2558 = vmatmul.mubr.bf16.gmra.mxu0 %v2502
        %v2559 = vpop.f32.mrf.mxu0
        %v2560 = vadd.f32 %v2384, %v2559
        %v2561 = vpop.f32.mrf.mxu0
        %v2562 = vpop.f32.mrf.mxu0
        %v2563 = vadd.f32 %v2389, %v2562
        %v2564 = vpop.f32.mrf.mxu0
        %2565 = vmatprep.mubr.bf16.mxu0 0
        %2566 = vmatmul.mubr.bf16.gmra.mxu0 %v2505
        %v2567 = vpop.f32.mrf.mxu0
        %v2568 = vadd.f32 %v2394, %v2567
        %v2569 = vpop.f32.mrf.mxu0
        %v2570 = vpop.f32.mrf.mxu0
        %v2571 = vadd.f32 %v2399, %v2570
        %v2572 = vpop.f32.mrf.mxu0
        %2573 = vmatprep.mubr.bf16.mxu0 0
        %2574 = vmatmul.mubr.bf16.gmra.mxu0 %v2508
        %v2575 = vpop.f32.mrf.mxu0
        %v2576 = vadd.f32 %v2404, %v2575
        %v2577 = vpop.f32.mrf.mxu0
        %v2578 = vpop.f32.mrf.mxu0
        %v2579 = vadd.f32 %v2409, %v2578
        %v2580 = vpop.f32.mrf.mxu0
        %2581 = vmatprep.mubr.bf16.mxu0 0
        %2582 = vmatmul.mubr.bf16.gmra.mxu0 %v2511
        %v2583 = vpop.f32.mrf.mxu0
        %v2584 = vadd.f32 %v2414, %v2583
        %v2585 = vpop.f32.mrf.mxu0
        %v2586 = vpop.f32.mrf.mxu0
        %v2587 = vadd.f32 %v2419, %v2586
        %v2588 = vpop.f32.mrf.mxu0
        %2589 = vmatprep.mubr.bf16.mxu0 0
        %2590 = vmatmul.mubr.bf16.gmra.mxu0 %v2514
        %v2591 = vpop.f32.mrf.mxu0
        %v2592 = vadd.f32 %v2424, %v2591
        %v2593 = vpop.f32.mrf.mxu0
        %v2594 = vpop.f32.mrf.mxu0
        %v2595 = vadd.f32 %v2429, %v2594
        %v2596 = vpop.f32.mrf.mxu0
        %2597 = vmatprep.mubr.bf16.mxu0 0
        %2598 = vmatmul.mubr.bf16.gmra.mxu0 %v2517
        %v2599 = vpop.f32.mrf.mxu0
        %v2600 = vadd.f32 %v2434, %v2599
        %v2601 = vpop.f32.mrf.mxu0
        %v2602 = vpop.f32.mrf.mxu0
        %v2603 = vadd.f32 %v2439, %v2602
        %v2604 = vpop.f32.mrf.mxu0
        %2605 = vmatprep.mubr.bf16.mxu0 0
        %2606 = vmatmul.mubr.bf16.gmra.mxu0 %v2520
        %v2607 = vpop.f32.mrf.mxu0
        %v2608 = vadd.f32 %v2444, %v2607
        %v2609 = vpop.f32.mrf.mxu0
        %v2610 = vpop.f32.mrf.mxu0
        %v2611 = vadd.f32 %v2449, %v2610
        %v2612 = vpop.f32.mrf.mxu0
        %2613 = vmatprep.mubr.bf16.mxu0 0
        %2614 = vmatmul.mubr.bf16.gmra.mxu0 %v2523
        %v2615 = vpop.f32.mrf.mxu0
        %v2616 = vadd.f32 %v2454, %v2615
        %v2617 = vpop.f32.mrf.mxu0
        %v2618 = vpop.f32.mrf.mxu0
        %v2619 = vadd.f32 %v2459, %v2618
        %v2620 = vpop.f32.mrf.mxu0
        %2621 = vdwg.mxu0
        %v2622 = vadd.f32 %v2008, %v2560
        %v2623 = vadd.f32 %v2009, %v2563
        %v2624 = vadd.f32 %v2010, %v2568
        %v2625 = vadd.f32 %v2011, %v2571
        %v2626 = vadd.f32 %v2012, %v2576
        %v2627 = vadd.f32 %v2013, %v2579
        %v2628 = vadd.f32 %v2014, %v2584
        %v2629 = vadd.f32 %v2015, %v2587
        %v2630 = vadd.f32 %v2016, %v2592
        %v2631 = vadd.f32 %v2017, %v2595
        %v2632 = vadd.f32 %v2018, %v2600
        %v2633 = vadd.f32 %v2019, %v2603
        %v2634 = vadd.f32 %v2020, %v2608
        %v2635 = vadd.f32 %v2021, %v2611
        %v2636 = vadd.f32 %v2022, %v2616
        %v2637 = vadd.f32 %v2023, %v2619
        %2638 = vadd.xlane.f32.xlu0 %v2622
        %v2639 = vpop.xlane.xlu0 %2638
        %2640 = vadd.xlane.f32.xlu0 %v2623
        %v2641 = vpop.xlane.xlu0 %2640
        %2642 = vadd.xlane.f32.xlu0 %v2624
        %v2643 = vpop.xlane.xlu0 %2642
        %2644 = vadd.xlane.f32.xlu0 %v2625
        %v2645 = vpop.xlane.xlu0 %2644
        %2646 = vadd.xlane.f32.xlu0 %v2626
        %v2647 = vpop.xlane.xlu0 %2646
        %2648 = vadd.xlane.f32.xlu0 %v2627
        %v2649 = vpop.xlane.xlu0 %2648
        %2650 = vadd.xlane.f32.xlu0 %v2628
        %v2651 = vpop.xlane.xlu0 %2650
        %2652 = vadd.xlane.f32.xlu0 %v2629
        %v2653 = vpop.xlane.xlu0 %2652
        %2654 = vadd.xlane.f32.xlu0 %v2630
        %v2655 = vpop.xlane.xlu0 %2654
        %2656 = vadd.xlane.f32.xlu0 %v2631
        %v2657 = vpop.xlane.xlu0 %2656
        %2658 = vadd.xlane.f32.xlu0 %v2632
        %v2659 = vpop.xlane.xlu0 %2658
        %2660 = vadd.xlane.f32.xlu0 %v2633
        %v2661 = vpop.xlane.xlu0 %2660
        %2662 = vadd.xlane.f32.xlu0 %v2634
        %v2663 = vpop.xlane.xlu0 %2662
        %2664 = vadd.xlane.f32.xlu0 %v2635
        %v2665 = vpop.xlane.xlu0 %2664
        %2666 = vadd.xlane.f32.xlu0 %v2636
        %v2667 = vpop.xlane.xlu0 %2666
        %2668 = vadd.xlane.f32.xlu0 %v2637
        %v2669 = vpop.xlane.xlu0 %2668
        %v2670 = vmul.f32 %v2639, %v407
        %v2671 = vmul.f32 %v2641, %v407
        %v2672 = vmul.f32 %v2643, %v407
        %v2673 = vmul.f32 %v2645, %v407
        %v2674 = vmul.f32 %v2647, %v407
        %v2675 = vmul.f32 %v2649, %v407
        %v2676 = vmul.f32 %v2651, %v407
        %v2677 = vmul.f32 %v2653, %v407
        %v2678 = vmul.f32 %v2655, %v407
        %v2679 = vmul.f32 %v2657, %v407
        %v2680 = vmul.f32 %v2659, %v407
        %v2681 = vmul.f32 %v2661, %v407
        %v2682 = vmul.f32 %v2663, %v407
        %v2683 = vmul.f32 %v2665, %v407
        %v2684 = vmul.f32 %v2667, %v407
        %v2685 = vmul.f32 %v2669, %v407
        %v2686 = vmul.f32 %v2622, %v2622
        %v2687 = vmul.f32 %v2623, %v2623
        %v2688 = vmul.f32 %v2624, %v2624
        %v2689 = vmul.f32 %v2625, %v2625
        %v2690 = vmul.f32 %v2626, %v2626
        %v2691 = vmul.f32 %v2627, %v2627
        %v2692 = vmul.f32 %v2628, %v2628
        %v2693 = vmul.f32 %v2629, %v2629
        %v2694 = vmul.f32 %v2630, %v2630
        %v2695 = vmul.f32 %v2631, %v2631
        %v2696 = vmul.f32 %v2632, %v2632
        %v2697 = vmul.f32 %v2633, %v2633
        %v2698 = vmul.f32 %v2634, %v2634
        %v2699 = vmul.f32 %v2635, %v2635
        %v2700 = vmul.f32 %v2636, %v2636
        %v2701 = vmul.f32 %v2637, %v2637
        %2702 = vadd.xlane.f32.xlu0 %v2686
        %v2703 = vpop.xlane.xlu0 %2702
        %2704 = vadd.xlane.f32.xlu0 %v2687
        %v2705 = vpop.xlane.xlu0 %2704
        %2706 = vadd.xlane.f32.xlu0 %v2688
        %v2707 = vpop.xlane.xlu0 %2706
        %2708 = vadd.xlane.f32.xlu0 %v2689
        %v2709 = vpop.xlane.xlu0 %2708
        %2710 = vadd.xlane.f32.xlu0 %v2690
        %v2711 = vpop.xlane.xlu0 %2710
        %2712 = vadd.xlane.f32.xlu0 %v2691
        %v2713 = vpop.xlane.xlu0 %2712
        %2714 = vadd.xlane.f32.xlu0 %v2692
        %v2715 = vpop.xlane.xlu0 %2714
        %2716 = vadd.xlane.f32.xlu0 %v2693
        %v2717 = vpop.xlane.xlu0 %2716
        %2718 = vadd.xlane.f32.xlu0 %v2694
        %v2719 = vpop.xlane.xlu0 %2718
        %2720 = vadd.xlane.f32.xlu0 %v2695
        %v2721 = vpop.xlane.xlu0 %2720
        %2722 = vadd.xlane.f32.xlu0 %v2696
        %v2723 = vpop.xlane.xlu0 %2722
        %2724 = vadd.xlane.f32.xlu0 %v2697
        %v2725 = vpop.xlane.xlu0 %2724
        %2726 = vadd.xlane.f32.xlu0 %v2698
        %v2727 = vpop.xlane.xlu0 %2726
        %2728 = vadd.xlane.f32.xlu0 %v2699
        %v2729 = vpop.xlane.xlu0 %2728
        %2730 = vadd.xlane.f32.xlu0 %v2700
        %v2731 = vpop.xlane.xlu0 %2730
        %2732 = vadd.xlane.f32.xlu0 %v2701
        %v2733 = vpop.xlane.xlu0 %2732
        %v2734 = vmul.f32 %v2703, %v407
        %v2735 = vmul.f32 %v2705, %v407
        %v2736 = vmul.f32 %v2707, %v407
        %v2737 = vmul.f32 %v2709, %v407
        %v2738 = vmul.f32 %v2711, %v407
        %v2739 = vmul.f32 %v2713, %v407
        %v2740 = vmul.f32 %v2715, %v407
        %v2741 = vmul.f32 %v2717, %v407
        %v2742 = vmul.f32 %v2719, %v407
        %v2743 = vmul.f32 %v2721, %v407
        %v2744 = vmul.f32 %v2723, %v407
        %v2745 = vmul.f32 %v2725, %v407
        %v2746 = vmul.f32 %v2727, %v407
        %v2747 = vmul.f32 %v2729, %v407
        %v2748 = vmul.f32 %v2731, %v407
        %v2749 = vmul.f32 %v2733, %v407
        %v2750 = vsub.f32 %v2622, %v2670
        %v2751 = vsub.f32 %v2623, %v2671
        %v2752 = vsub.f32 %v2624, %v2672
        %v2753 = vsub.f32 %v2625, %v2673
        %v2754 = vsub.f32 %v2626, %v2674
        %v2755 = vsub.f32 %v2627, %v2675
        %v2756 = vsub.f32 %v2628, %v2676
        %v2757 = vsub.f32 %v2629, %v2677
        %v2758 = vsub.f32 %v2630, %v2678
        %v2759 = vsub.f32 %v2631, %v2679
        %v2760 = vsub.f32 %v2632, %v2680
        %v2761 = vsub.f32 %v2633, %v2681
        %v2762 = vsub.f32 %v2634, %v2682
        %v2763 = vsub.f32 %v2635, %v2683
        %v2764 = vsub.f32 %v2636, %v2684
        %v2765 = vsub.f32 %v2637, %v2685
        %v2766 = vmul.f32 %v2670, %v2670
        %v2767 = vmul.f32 %v2671, %v2671
        %v2768 = vmul.f32 %v2672, %v2672
        %v2769 = vmul.f32 %v2673, %v2673
        %v2770 = vmul.f32 %v2674, %v2674
        %v2771 = vmul.f32 %v2675, %v2675
        %v2772 = vmul.f32 %v2676, %v2676
        %v2773 = vmul.f32 %v2677, %v2677
        %v2774 = vmul.f32 %v2678, %v2678
        %v2775 = vmul.f32 %v2679, %v2679
        %v2776 = vmul.f32 %v2680, %v2680
        %v2777 = vmul.f32 %v2681, %v2681
        %v2778 = vmul.f32 %v2682, %v2682
        %v2779 = vmul.f32 %v2683, %v2683
        %v2780 = vmul.f32 %v2684, %v2684
        %v2781 = vmul.f32 %v2685, %v2685
        %v2782 = vsub.f32 %v2734, %v2766
        %v2783 = vsub.f32 %v2735, %v2767
        %v2784 = vsub.f32 %v2736, %v2768
        %v2785 = vsub.f32 %v2737, %v2769
        %v2786 = vsub.f32 %v2738, %v2770
        %v2787 = vsub.f32 %v2739, %v2771
        %v2788 = vsub.f32 %v2740, %v2772
        %v2789 = vsub.f32 %v2741, %v2773
        %v2790 = vsub.f32 %v2742, %v2774
        %v2791 = vsub.f32 %v2743, %v2775
        %v2792 = vsub.f32 %v2744, %v2776
        %v2793 = vsub.f32 %v2745, %v2777
        %v2794 = vsub.f32 %v2746, %v2778
        %v2795 = vsub.f32 %v2747, %v2779
        %v2796 = vsub.f32 %v2748, %v2780
        %v2797 = vsub.f32 %v2749, %v2781
        %v2798 = vadd.f32 %v2782, 1e-05
        %v2799 = vadd.f32 %v2783, 1e-05
        %v2800 = vadd.f32 %v2784, 1e-05
        %v2801 = vadd.f32 %v2785, 1e-05
        %v2802 = vadd.f32 %v2786, 1e-05
        %v2803 = vadd.f32 %v2787, 1e-05
        %v2804 = vadd.f32 %v2788, 1e-05
        %v2805 = vadd.f32 %v2789, 1e-05
        %v2806 = vadd.f32 %v2790, 1e-05
        %v2807 = vadd.f32 %v2791, 1e-05
        %v2808 = vadd.f32 %v2792, 1e-05
        %v2809 = vadd.f32 %v2793, 1e-05
        %v2810 = vadd.f32 %v2794, 1e-05
        %v2811 = vadd.f32 %v2795, 1e-05
        %v2812 = vadd.f32 %v2796, 1e-05
        %v2813 = vadd.f32 %v2797, 1e-05
        %v2814 = vrsqrt.pop %v2798
        %v2815 = vrsqrt.pop %v2799
        %v2816 = vrsqrt.pop %v2800
        %v2817 = vrsqrt.pop %v2801
        %v2818 = vrsqrt.pop %v2802
        %v2819 = vrsqrt.pop %v2803
        %v2820 = vrsqrt.pop %v2804
        %v2821 = vrsqrt.pop %v2805
        %v2822 = vrsqrt.pop %v2806
        %v2823 = vrsqrt.pop %v2807
        %v2824 = vrsqrt.pop %v2808
        %v2825 = vrsqrt.pop %v2809
        %v2826 = vrsqrt.pop %v2810
        %v2827 = vrsqrt.pop %v2811
        %v2828 = vrsqrt.pop %v2812
        %v2829 = vrsqrt.pop %v2813
        %v2830 = vmul.f32 %v2750, %v2814
        %v2831 = vmul.f32 %v2751, %v2815
        %v2832 = vmul.f32 %v2752, %v2816
        %v2833 = vmul.f32 %v2753, %v2817
        %v2834 = vmul.f32 %v2754, %v2818
        %v2835 = vmul.f32 %v2755, %v2819
        %v2836 = vmul.f32 %v2756, %v2820
        %v2837 = vmul.f32 %v2757, %v2821
        %v2838 = vmul.f32 %v2758, %v2822
        %v2839 = vmul.f32 %v2759, %v2823
        %v2840 = vmul.f32 %v2760, %v2824
        %v2841 = vmul.f32 %v2761, %v2825
        %v2842 = vmul.f32 %v2762, %v2826
        %v2843 = vmul.f32 %v2763, %v2827
        %v2844 = vmul.f32 %v2764, %v2828
        %v2845 = vmul.f32 %v2765, %v2829
        %v2846 = vpack.c.bf16 %v2831, %v2830
        %v2847 = vpack.c.bf16 %v2833, %v2832
        %v2848 = vpack.c.bf16 %v2835, %v2834
        %v2849 = vpack.c.bf16 %v2837, %v2836
        %v2850 = vpack.c.bf16 %v2839, %v2838
        %v2851 = vpack.c.bf16 %v2841, %v2840
        %v2852 = vpack.c.bf16 %v2843, %v2842
        %v2853 = vpack.c.bf16 %v2845, %v2844
        %v2854 = vld [vmem:[%s5] sm:$0xff]
        %v2855 = vld [vmem:[%s5 + $0x8] sm:$0xff]
        %v2856 = vld [vmem:[%s5 + $0x10] sm:$0xff]
        %v2857 = vld [vmem:[%s5 + $0x18] sm:$0xff]
        %v2858 = vld [vmem:[%s5 + $0x20] sm:$0xff]
        %v2859 = vld [vmem:[%s5 + $0x28] sm:$0xff]
        %v2860 = vld [vmem:[%s5 + $0x30] sm:$0xff]
        %v2861 = vld [vmem:[%s5 + $0x38] sm:$0xff]
        %v2862 = vld [vmem:[%s5 + $0x40] sm:$0xff]
        %v2863 = vld [vmem:[%s5 + $0x48] sm:$0xff]
        %v2864 = vld [vmem:[%s5 + $0x50] sm:$0xff]
        %v2865 = vld [vmem:[%s5 + $0x58] sm:$0xff]
        %v2866 = vld [vmem:[%s5 + $0x60] sm:$0xff]
        %v2867 = vld [vmem:[%s5 + $0x68] sm:$0xff]
        %v2868 = vld [vmem:[%s5 + $0x70] sm:$0xff]
        %v2869 = vld [vmem:[%s5 + $0x78] sm:$0xff]
        %v2870 = vld [vmem:[%s6] sm:$0x3]
        %v2872 = vlaneseq
        %v2873 = vshrl.u32 %v2872, 7
        %v2874 = vsub.s32 0, %v2873
        %v2875 = vrot.slane %v2870, %v2874
        %v2876 = vlaneseq
        %v2877 = vshrl.u32 %v2876, 7
        %v2878 = vsub.s32 1, %v2877
        %v2879 = vrot.slane %v2870, %v2878
        %v2898 = vunpack.c.l.b16 %v2854
        %v2899 = vunpack.c.h.b16 %v2854
        %v2900 = vunpack.c.l.b16 %v2855
        %v2901 = vunpack.c.h.b16 %v2855
        %v2902 = vunpack.c.l.b16 %v2856
        %v2903 = vunpack.c.h.b16 %v2856
        %v2904 = vunpack.c.l.b16 %v2857
        %v2905 = vunpack.c.h.b16 %v2857
        %v2906 = vunpack.c.l.b16 %v2858
        %v2907 = vunpack.c.h.b16 %v2858
        %v2908 = vunpack.c.l.b16 %v2859
        %v2909 = vunpack.c.h.b16 %v2859
        %v2910 = vunpack.c.l.b16 %v2860
        %v2911 = vunpack.c.h.b16 %v2860
        %v2912 = vunpack.c.l.b16 %v2861
        %v2913 = vunpack.c.h.b16 %v2861
        %v2914 = vunpack.c.l.b16 %v2862
        %v2915 = vunpack.c.h.b16 %v2862
        %v2916 = vunpack.c.l.b16 %v2863
        %v2917 = vunpack.c.h.b16 %v2863
        %v2918 = vunpack.c.l.b16 %v2864
        %v2919 = vunpack.c.h.b16 %v2864
        %v2920 = vunpack.c.l.b16 %v2865
        %v2921 = vunpack.c.h.b16 %v2865
        %v2922 = vunpack.c.l.b16 %v2866
        %v2923 = vunpack.c.h.b16 %v2866
        %v2924 = vunpack.c.l.b16 %v2867
        %v2925 = vunpack.c.h.b16 %v2867
        %v2926 = vunpack.c.l.b16 %v2868
        %v2927 = vunpack.c.h.b16 %v2868
        %v2928 = vunpack.c.l.b16 %v2869
        %v2929 = vunpack.c.h.b16 %v2869
        %v2930 = vpack.c.b16 %v2900, %v2898
        %v2931 = vpack.c.b16 %v2901, %v2899
        %v2932 = vpack.c.b16 %v2904, %v2902
        %v2933 = vpack.c.b16 %v2905, %v2903
        %v2934 = vpack.c.b16 %v2908, %v2906
        %v2935 = vpack.c.b16 %v2909, %v2907
        %v2936 = vpack.c.b16 %v2912, %v2910
        %v2937 = vpack.c.b16 %v2913, %v2911
        %v2938 = vpack.c.b16 %v2916, %v2914
        %v2939 = vpack.c.b16 %v2917, %v2915
        %v2940 = vpack.c.b16 %v2920, %v2918
        %v2941 = vpack.c.b16 %v2921, %v2919
        %v2942 = vpack.c.b16 %v2924, %v2922
        %v2943 = vpack.c.b16 %v2925, %v2923
        %v2944 = vpack.c.b16 %v2928, %v2926
        %v2945 = vpack.c.b16 %v2929, %v2927
        %2962 = vmatprep.subr.bf16.mxu0 %v2945
        %2963 = vmatpush1.bf16.msra.mxu0 %v2944
        %2964 = vmatprep.subr.bf16.mxu0 %v2943
        %2965 = vmatpush1.bf16.msra.mxu0 %v2942
        %2966 = vmatprep.subr.bf16.mxu0 %v2941
        %2967 = vmatpush1.bf16.msra.mxu0 %v2940
        %2968 = vmatprep.subr.bf16.mxu0 %v2939
        %2969 = vmatpush1.bf16.msra.mxu0 %v2938
        %2970 = vmatprep.subr.bf16.mxu0 %v2937
        %2971 = vmatpush1.bf16.msra.mxu0 %v2936
        %2972 = vmatprep.subr.bf16.mxu0 %v2935
        %2973 = vmatpush1.bf16.msra.mxu0 %v2934
        %2974 = vmatprep.subr.bf16.mxu0 %v2933
        %2975 = vmatpush1.bf16.msra.mxu0 %v2932
        %2976 = vmatprep.subr.bf16.mxu0 %v2931
        %2977 = vmatpush1.bf16.msra.mxu0 %v2930
        %2978 = vmatprep.subr.bf16.mxu0 0
        %2979 = vmatpush2.bf16.msra.mxu0 0
        %2980 = vmatprep.subr.bf16.mxu0 0
        %2981 = vmatpush2.bf16.msra.mxu0 0
        %2982 = vmatprep.subr.bf16.mxu0 0
        %2983 = vmatpush2.bf16.msra.mxu0 0
        %2984 = vmatprep.subr.bf16.mxu0 0
        %2985 = vmatpush2.bf16.msra.mxu0 0
        %2986 = vmatprep.subr.bf16.mxu0 0
        %2987 = vmatpush2.bf16.msra.mxu0 0
        %2988 = vmatprep.subr.bf16.mxu0 0
        %2989 = vmatpush2.bf16.msra.mxu0 0
        %2990 = vmatprep.subr.bf16.mxu0 0
        %2991 = vmatpush2.bf16.msra.mxu0 0
        %2992 = vmatprep.subr.bf16.mxu0 0
        %2993 = vmatpush2.bf16.msra.mxu0 0
        %2994 = vmatprep.mubr.bf16.mxu0 0
        %2995 = vmatmul.mubr.bf16.gmra.mxu0 %v2846
        %v2996 = vpop.f32.mrf.mxu0
        %v2997 = vadd.f32 %v2875, %v2996
        %v2998 = vpop.f32.mrf.mxu0
        %v2999 = vadd.f32 %v2879, %v2998
        %v3000 = vpop.f32.mrf.mxu0
        %v3001 = vadd.f32 %v2875, %v3000
        %v3002 = vpop.f32.mrf.mxu0
        %v3003 = vadd.f32 %v2879, %v3002
        %3004 = vmatprep.mubr.bf16.mxu0 0
        %3005 = vmatmul.mubr.bf16.gmra.mxu0 %v2847
        %v3006 = vpop.f32.mrf.mxu0
        %v3007 = vadd.f32 %v2875, %v3006
        %v3008 = vpop.f32.mrf.mxu0
        %v3009 = vadd.f32 %v2879, %v3008
        %v3010 = vpop.f32.mrf.mxu0
        %v3011 = vadd.f32 %v2875, %v3010
        %v3012 = vpop.f32.mrf.mxu0
        %v3013 = vadd.f32 %v2879, %v3012
        %3014 = vmatprep.mubr.bf16.mxu0 0
        %3015 = vmatmul.mubr.bf16.gmra.mxu0 %v2848
        %v3016 = vpop.f32.mrf.mxu0
        %v3017 = vadd.f32 %v2875, %v3016
        %v3018 = vpop.f32.mrf.mxu0
        %v3019 = vadd.f32 %v2879, %v3018
        %v3020 = vpop.f32.mrf.mxu0
        %v3021 = vadd.f32 %v2875, %v3020
        %v3022 = vpop.f32.mrf.mxu0
        %v3023 = vadd.f32 %v2879, %v3022
        %3024 = vmatprep.mubr.bf16.mxu0 0
        %3025 = vmatmul.mubr.bf16.gmra.mxu0 %v2849
        %v3026 = vpop.f32.mrf.mxu0
        %v3027 = vadd.f32 %v2875, %v3026
        %v3028 = vpop.f32.mrf.mxu0
        %v3029 = vadd.f32 %v2879, %v3028
        %v3030 = vpop.f32.mrf.mxu0
        %v3031 = vadd.f32 %v2875, %v3030
        %v3032 = vpop.f32.mrf.mxu0
        %v3033 = vadd.f32 %v2879, %v3032
        %3034 = vmatprep.mubr.bf16.mxu0 0
        %3035 = vmatmul.mubr.bf16.gmra.mxu0 %v2850
        %v3036 = vpop.f32.mrf.mxu0
        %v3037 = vadd.f32 %v2875, %v3036
        %v3038 = vpop.f32.mrf.mxu0
        %v3039 = vadd.f32 %v2879, %v3038
        %v3040 = vpop.f32.mrf.mxu0
        %v3041 = vadd.f32 %v2875, %v3040
        %v3042 = vpop.f32.mrf.mxu0
        %v3043 = vadd.f32 %v2879, %v3042
        %3044 = vmatprep.mubr.bf16.mxu0 0
        %3045 = vmatmul.mubr.bf16.gmra.mxu0 %v2851
        %v3046 = vpop.f32.mrf.mxu0
        %v3047 = vadd.f32 %v2875, %v3046
        %v3048 = vpop.f32.mrf.mxu0
        %v3049 = vadd.f32 %v2879, %v3048
        %v3050 = vpop.f32.mrf.mxu0
        %v3051 = vadd.f32 %v2875, %v3050
        %v3052 = vpop.f32.mrf.mxu0
        %v3053 = vadd.f32 %v2879, %v3052
        %3054 = vmatprep.mubr.bf16.mxu0 0
        %3055 = vmatmul.mubr.bf16.gmra.mxu0 %v2852
        %v3056 = vpop.f32.mrf.mxu0
        %v3057 = vadd.f32 %v2875, %v3056
        %v3058 = vpop.f32.mrf.mxu0
        %v3059 = vadd.f32 %v2879, %v3058
        %v3060 = vpop.f32.mrf.mxu0
        %v3061 = vadd.f32 %v2875, %v3060
        %v3062 = vpop.f32.mrf.mxu0
        %v3063 = vadd.f32 %v2879, %v3062
        %3064 = vmatprep.mubr.bf16.mxu0 0
        %3065 = vmatmul.mubr.bf16.gmra.mxu0 %v2853
        %v3066 = vpop.f32.mrf.mxu0
        %v3067 = vadd.f32 %v2875, %v3066
        %v3068 = vpop.f32.mrf.mxu0
        %v3069 = vadd.f32 %v2879, %v3068
        %v3070 = vpop.f32.mrf.mxu0
        %v3071 = vadd.f32 %v2875, %v3070
        %v3072 = vpop.f32.mrf.mxu0
        %v3073 = vadd.f32 %v2879, %v3072
        %3074 = vdwg.mxu0
        %v3075 = vmul.f32 %v2997, %v2997
        %v3076 = vmul.f32 %v2999, %v2999
        %v3077 = vmul.f32 %v3001, %v3001
        %v3078 = vmul.f32 %v3003, %v3003
        %v3079 = vmul.f32 %v3007, %v3007
        %v3080 = vmul.f32 %v3009, %v3009
        %v3081 = vmul.f32 %v3011, %v3011
        %v3082 = vmul.f32 %v3013, %v3013
        %v3083 = vmul.f32 %v3017, %v3017
        %v3084 = vmul.f32 %v3019, %v3019
        %v3085 = vmul.f32 %v3021, %v3021
        %v3086 = vmul.f32 %v3023, %v3023
        %v3087 = vmul.f32 %v3027, %v3027
        %v3088 = vmul.f32 %v3029, %v3029
        %v3089 = vmul.f32 %v3031, %v3031
        %v3090 = vmul.f32 %v3033, %v3033
        %v3091 = vmul.f32 %v3037, %v3037
        %v3092 = vmul.f32 %v3039, %v3039
        %v3093 = vmul.f32 %v3041, %v3041
        %v3094 = vmul.f32 %v3043, %v3043
        %v3095 = vmul.f32 %v3047, %v3047
        %v3096 = vmul.f32 %v3049, %v3049
        %v3097 = vmul.f32 %v3051, %v3051
        %v3098 = vmul.f32 %v3053, %v3053
        %v3099 = vmul.f32 %v3057, %v3057
        %v3100 = vmul.f32 %v3059, %v3059
        %v3101 = vmul.f32 %v3061, %v3061
        %v3102 = vmul.f32 %v3063, %v3063
        %v3103 = vmul.f32 %v3067, %v3067
        %v3104 = vmul.f32 %v3069, %v3069
        %v3105 = vmul.f32 %v3071, %v3071
        %v3106 = vmul.f32 %v3073, %v3073
        %v3107 = vmul.f32 %v2997, %v3075
        %v3108 = vmul.f32 %v2999, %v3076
        %v3109 = vmul.f32 %v3001, %v3077
        %v3110 = vmul.f32 %v3003, %v3078
        %v3111 = vmul.f32 %v3007, %v3079
        %v3112 = vmul.f32 %v3009, %v3080
        %v3113 = vmul.f32 %v3011, %v3081
        %v3114 = vmul.f32 %v3013, %v3082
        %v3115 = vmul.f32 %v3017, %v3083
        %v3116 = vmul.f32 %v3019, %v3084
        %v3117 = vmul.f32 %v3021, %v3085
        %v3118 = vmul.f32 %v3023, %v3086
        %v3119 = vmul.f32 %v3027, %v3087
        %v3120 = vmul.f32 %v3029, %v3088
        %v3121 = vmul.f32 %v3031, %v3089
        %v3122 = vmul.f32 %v3033, %v3090
        %v3123 = vmul.f32 %v3037, %v3091
        %v3124 = vmul.f32 %v3039, %v3092
        %v3125 = vmul.f32 %v3041, %v3093
        %v3126 = vmul.f32 %v3043, %v3094
        %v3127 = vmul.f32 %v3047, %v3095
        %v3128 = vmul.f32 %v3049, %v3096
        %v3129 = vmul.f32 %v3051, %v3097
        %v3130 = vmul.f32 %v3053, %v3098
        %v3131 = vmul.f32 %v3057, %v3099
        %v3132 = vmul.f32 %v3059, %v3100
        %v3133 = vmul.f32 %v3061, %v3101
        %v3134 = vmul.f32 %v3063, %v3102
        %v3135 = vmul.f32 %v3067, %v3103
        %v3136 = vmul.f32 %v3069, %v3104
        %v3137 = vmul.f32 %v3071, %v3105
        %v3138 = vmul.f32 %v3073, %v3106
        %v3139 = vmul.f32 %v3107, 0.044715
        %v3140 = vmul.f32 %v3108, 0.044715
        %v3141 = vmul.f32 %v3109, 0.044715
        %v3142 = vmul.f32 %v3110, 0.044715
        %v3143 = vmul.f32 %v3111, 0.044715
        %v3144 = vmul.f32 %v3112, 0.044715
        %v3145 = vmul.f32 %v3113, 0.044715
        %v3146 = vmul.f32 %v3114, 0.044715
        %v3147 = vmul.f32 %v3115, 0.044715
        %v3148 = vmul.f32 %v3116, 0.044715
        %v3149 = vmul.f32 %v3117, 0.044715
        %v3150 = vmul.f32 %v3118, 0.044715
        %v3151 = vmul.f32 %v3119, 0.044715
        %v3152 = vmul.f32 %v3120, 0.044715
        %v3153 = vmul.f32 %v3121, 0.044715
        %v3154 = vmul.f32 %v3122, 0.044715
        %v3155 = vmul.f32 %v3123, 0.044715
        %v3156 = vmul.f32 %v3124, 0.044715
        %v3157 = vmul.f32 %v3125, 0.044715
        %v3158 = vmul.f32 %v3126, 0.044715
        %v3159 = vmul.f32 %v3127, 0.044715
        %v3160 = vmul.f32 %v3128, 0.044715
        %v3161 = vmul.f32 %v3129, 0.044715
        %v3162 = vmul.f32 %v3130, 0.044715
        %v3163 = vmul.f32 %v3131, 0.044715
        %v3164 = vmul.f32 %v3132, 0.044715
        %v3165 = vmul.f32 %v3133, 0.044715
        %v3166 = vmul.f32 %v3134, 0.044715
        %v3167 = vmul.f32 %v3135, 0.044715
        %v3168 = vmul.f32 %v3136, 0.044715
        %v3169 = vmul.f32 %v3137, 0.044715
        %v3170 = vmul.f32 %v3138, 0.044715
        %v3171 = vadd.f32 %v2997, %v3139
        %v3172 = vadd.f32 %v2999, %v3140
        %v3173 = vadd.f32 %v3001, %v3141
        %v3174 = vadd.f32 %v3003, %v3142
        %v3175 = vadd.f32 %v3007, %v3143
        %v3176 = vadd.f32 %v3009, %v3144
        %v3177 = vadd.f32 %v3011, %v3145
        %v3178 = vadd.f32 %v3013, %v3146
        %v3179 = vadd.f32 %v3017, %v3147
        %v3180 = vadd.f32 %v3019, %v3148
        %v3181 = vadd.f32 %v3021, %v3149
        %v3182 = vadd.f32 %v3023, %v3150
        %v3183 = vadd.f32 %v3027, %v3151
        %v3184 = vadd.f32 %v3029, %v3152
        %v3185 = vadd.f32 %v3031, %v3153
        %v3186 = vadd.f32 %v3033, %v3154
        %v3187 = vadd.f32 %v3037, %v3155
        %v3188 = vadd.f32 %v3039, %v3156
        %v3189 = vadd.f32 %v3041, %v3157
        %v3190 = vadd.f32 %v3043, %v3158
        %v3191 = vadd.f32 %v3047, %v3159
        %v3192 = vadd.f32 %v3049, %v3160
        %v3193 = vadd.f32 %v3051, %v3161
        %v3194 = vadd.f32 %v3053, %v3162
        %v3195 = vadd.f32 %v3057, %v3163
        %v3196 = vadd.f32 %v3059, %v3164
        %v3197 = vadd.f32 %v3061, %v3165
        %v3198 = vadd.f32 %v3063, %v3166
        %v3199 = vadd.f32 %v3067, %v3167
        %v3200 = vadd.f32 %v3069, %v3168
        %v3201 = vadd.f32 %v3071, %v3169
        %v3202 = vadd.f32 %v3073, %v3170
        %v3203 = vmul.f32 %v3171, 0.7978846
        %v3204 = vmul.f32 %v3172, 0.7978846
        %v3205 = vmul.f32 %v3173, 0.7978846
        %v3206 = vmul.f32 %v3174, 0.7978846
        %v3207 = vmul.f32 %v3175, 0.7978846
        %v3208 = vmul.f32 %v3176, 0.7978846
        %v3209 = vmul.f32 %v3177, 0.7978846
        %v3210 = vmul.f32 %v3178, 0.7978846
        %v3211 = vmul.f32 %v3179, 0.7978846
        %v3212 = vmul.f32 %v3180, 0.7978846
        %v3213 = vmul.f32 %v3181, 0.7978846
        %v3214 = vmul.f32 %v3182, 0.7978846
        %v3215 = vmul.f32 %v3183, 0.7978846
        %v3216 = vmul.f32 %v3184, 0.7978846
        %v3217 = vmul.f32 %v3185, 0.7978846
        %v3218 = vmul.f32 %v3186, 0.7978846
        %v3219 = vmul.f32 %v3187, 0.7978846
        %v3220 = vmul.f32 %v3188, 0.7978846
        %v3221 = vmul.f32 %v3189, 0.7978846
        %v3222 = vmul.f32 %v3190, 0.7978846
        %v3223 = vmul.f32 %v3191, 0.7978846
        %v3224 = vmul.f32 %v3192, 0.7978846
        %v3225 = vmul.f32 %v3193, 0.7978846
        %v3226 = vmul.f32 %v3194, 0.7978846
        %v3227 = vmul.f32 %v3195, 0.7978846
        %v3228 = vmul.f32 %v3196, 0.7978846
        %v3229 = vmul.f32 %v3197, 0.7978846
        %v3230 = vmul.f32 %v3198, 0.7978846
        %v3231 = vmul.f32 %v3199, 0.7978846
        %v3232 = vmul.f32 %v3200, 0.7978846
        %v3233 = vmul.f32 %v3201, 0.7978846
        %v3234 = vmul.f32 %v3202, 0.7978846
        %v3235 = vtanh.pop %v3203
        %v3236 = vtanh.pop %v3204
        %v3237 = vtanh.pop %v3205
        %v3238 = vtanh.pop %v3206
        %v3239 = vtanh.pop %v3207
        %v3240 = vtanh.pop %v3208
        %v3241 = vtanh.pop %v3209
        %v3242 = vtanh.pop %v3210
        %v3243 = vtanh.pop %v3211
        %v3244 = vtanh.pop %v3212
        %v3245 = vtanh.pop %v3213
        %v3246 = vtanh.pop %v3214
        %v3247 = vtanh.pop %v3215
        %v3248 = vtanh.pop %v3216
        %v3249 = vtanh.pop %v3217
        %v3250 = vtanh.pop %v3218
        %v3251 = vtanh.pop %v3219
        %v3252 = vtanh.pop %v3220
        %v3253 = vtanh.pop %v3221
        %v3254 = vtanh.pop %v3222
        %v3255 = vtanh.pop %v3223
        %v3256 = vtanh.pop %v3224
        %v3257 = vtanh.pop %v3225
        %v3258 = vtanh.pop %v3226
        %v3259 = vtanh.pop %v3227
        %v3260 = vtanh.pop %v3228
        %v3261 = vtanh.pop %v3229
        %v3262 = vtanh.pop %v3230
        %v3263 = vtanh.pop %v3231
        %v3264 = vtanh.pop %v3232
        %v3265 = vtanh.pop %v3233
        %v3266 = vtanh.pop %v3234
        %v3267 = vadd.f32 %v3235, 1.0
        %v3268 = vadd.f32 %v3236, 1.0
        %v3269 = vadd.f32 %v3237, 1.0
        %v3270 = vadd.f32 %v3238, 1.0
        %v3271 = vadd.f32 %v3239, 1.0
        %v3272 = vadd.f32 %v3240, 1.0
        %v3273 = vadd.f32 %v3241, 1.0
        %v3274 = vadd.f32 %v3242, 1.0
        %v3275 = vadd.f32 %v3243, 1.0
        %v3276 = vadd.f32 %v3244, 1.0
        %v3277 = vadd.f32 %v3245, 1.0
        %v3278 = vadd.f32 %v3246, 1.0
        %v3279 = vadd.f32 %v3247, 1.0
        %v3280 = vadd.f32 %v3248, 1.0
        %v3281 = vadd.f32 %v3249, 1.0
        %v3282 = vadd.f32 %v3250, 1.0
        %v3283 = vadd.f32 %v3251, 1.0
        %v3284 = vadd.f32 %v3252, 1.0
        %v3285 = vadd.f32 %v3253, 1.0
        %v3286 = vadd.f32 %v3254, 1.0
        %v3287 = vadd.f32 %v3255, 1.0
        %v3288 = vadd.f32 %v3256, 1.0
        %v3289 = vadd.f32 %v3257, 1.0
        %v3290 = vadd.f32 %v3258, 1.0
        %v3291 = vadd.f32 %v3259, 1.0
        %v3292 = vadd.f32 %v3260, 1.0
        %v3293 = vadd.f32 %v3261, 1.0
        %v3294 = vadd.f32 %v3262, 1.0
        %v3295 = vadd.f32 %v3263, 1.0
        %v3296 = vadd.f32 %v3264, 1.0
        %v3297 = vadd.f32 %v3265, 1.0
        %v3298 = vadd.f32 %v3266, 1.0
        %v3299 = vmul.f32 %v3267, 0.5
        %v3300 = vmul.f32 %v3268, 0.5
        %v3301 = vmul.f32 %v3269, 0.5
        %v3302 = vmul.f32 %v3270, 0.5
        %v3303 = vmul.f32 %v3271, 0.5
        %v3304 = vmul.f32 %v3272, 0.5
        %v3305 = vmul.f32 %v3273, 0.5
        %v3306 = vmul.f32 %v3274, 0.5
        %v3307 = vmul.f32 %v3275, 0.5
        %v3308 = vmul.f32 %v3276, 0.5
        %v3309 = vmul.f32 %v3277, 0.5
        %v3310 = vmul.f32 %v3278, 0.5
        %v3311 = vmul.f32 %v3279, 0.5
        %v3312 = vmul.f32 %v3280, 0.5
        %v3313 = vmul.f32 %v3281, 0.5
        %v3314 = vmul.f32 %v3282, 0.5
        %v3315 = vmul.f32 %v3283, 0.5
        %v3316 = vmul.f32 %v3284, 0.5
        %v3317 = vmul.f32 %v3285, 0.5
        %v3318 = vmul.f32 %v3286, 0.5
        %v3319 = vmul.f32 %v3287, 0.5
        %v3320 = vmul.f32 %v3288, 0.5
        %v3321 = vmul.f32 %v3289, 0.5
        %v3322 = vmul.f32 %v3290, 0.5
        %v3323 = vmul.f32 %v3291, 0.5
        %v3324 = vmul.f32 %v3292, 0.5
        %v3325 = vmul.f32 %v3293, 0.5
        %v3326 = vmul.f32 %v3294, 0.5
        %v3327 = vmul.f32 %v3295, 0.5
        %v3328 = vmul.f32 %v3296, 0.5
        %v3329 = vmul.f32 %v3297, 0.5
        %v3330 = vmul.f32 %v3298, 0.5
        %v3331 = vmul.f32 %v2997, %v3299
        %v3332 = vmul.f32 %v2999, %v3300
        %v3333 = vmul.f32 %v3001, %v3301
        %v3334 = vmul.f32 %v3003, %v3302
        %v3335 = vmul.f32 %v3007, %v3303
        %v3336 = vmul.f32 %v3009, %v3304
        %v3337 = vmul.f32 %v3011, %v3305
        %v3338 = vmul.f32 %v3013, %v3306
        %v3339 = vmul.f32 %v3017, %v3307
        %v3340 = vmul.f32 %v3019, %v3308
        %v3341 = vmul.f32 %v3021, %v3309
        %v3342 = vmul.f32 %v3023, %v3310
        %v3343 = vmul.f32 %v3027, %v3311
        %v3344 = vmul.f32 %v3029, %v3312
        %v3345 = vmul.f32 %v3031, %v3313
        %v3346 = vmul.f32 %v3033, %v3314
        %v3347 = vmul.f32 %v3037, %v3315
        %v3348 = vmul.f32 %v3039, %v3316
        %v3349 = vmul.f32 %v3041, %v3317
        %v3350 = vmul.f32 %v3043, %v3318
        %v3351 = vmul.f32 %v3047, %v3319
        %v3352 = vmul.f32 %v3049, %v3320
        %v3353 = vmul.f32 %v3051, %v3321
        %v3354 = vmul.f32 %v3053, %v3322
        %v3355 = vmul.f32 %v3057, %v3323
        %v3356 = vmul.f32 %v3059, %v3324
        %v3357 = vmul.f32 %v3061, %v3325
        %v3358 = vmul.f32 %v3063, %v3326
        %v3359 = vmul.f32 %v3067, %v3327
        %v3360 = vmul.f32 %v3069, %v3328
        %v3361 = vmul.f32 %v3071, %v3329
        %v3362 = vmul.f32 %v3073, %v3330
        %v3363 = vpack.c.bf16 %v3333, %v3331
        %v3364 = vpack.c.bf16 %v3334, %v3332
        %v3365 = vpack.c.bf16 %v3337, %v3335
        %v3366 = vpack.c.bf16 %v3338, %v3336
        %v3367 = vpack.c.bf16 %v3341, %v3339
        %v3368 = vpack.c.bf16 %v3342, %v3340
        %v3369 = vpack.c.bf16 %v3345, %v3343
        %v3370 = vpack.c.bf16 %v3346, %v3344
        %v3371 = vpack.c.bf16 %v3349, %v3347
        %v3372 = vpack.c.bf16 %v3350, %v3348
        %v3373 = vpack.c.bf16 %v3353, %v3351
        %v3374 = vpack.c.bf16 %v3354, %v3352
        %v3375 = vpack.c.bf16 %v3357, %v3355
        %v3376 = vpack.c.bf16 %v3358, %v3356
        %v3377 = vpack.c.bf16 %v3361, %v3359
        %v3378 = vpack.c.bf16 %v3362, %v3360
        %v3379 = vld [vmem:[%s7] sm:$0xf]
        %v3380 = vld [vmem:[%s7 + $0x4] sm:$0xf]
        %v3381 = vld [vmem:[%s7 + $0x8] sm:$0xf]
        %v3382 = vld [vmem:[%s7 + $0xc] sm:$0xf]
        %v3383 = vld [vmem:[%s7 + $0x10] sm:$0xf]
        %v3384 = vld [vmem:[%s7 + $0x14] sm:$0xf]
        %v3385 = vld [vmem:[%s7 + $0x18] sm:$0xf]
        %v3386 = vld [vmem:[%s7 + $0x1c] sm:$0xf]
        %v3387 = vld [vmem:[%s7 + $0x20] sm:$0xf]
        %v3388 = vld [vmem:[%s7 + $0x24] sm:$0xf]
        %v3389 = vld [vmem:[%s7 + $0x28] sm:$0xf]
        %v3390 = vld [vmem:[%s7 + $0x2c] sm:$0xf]
        %v3391 = vld [vmem:[%s7 + $0x30] sm:$0xf]
        %v3392 = vld [vmem:[%s7 + $0x34] sm:$0xf]
        %v3393 = vld [vmem:[%s7 + $0x38] sm:$0xf]
        %v3394 = vld [vmem:[%s7 + $0x3c] sm:$0xf]
        %v3395 = vld [vmem:[%s7 + $0x40] sm:$0xf]
        %v3396 = vld [vmem:[%s7 + $0x44] sm:$0xf]
        %v3397 = vld [vmem:[%s7 + $0x48] sm:$0xf]
        %v3398 = vld [vmem:[%s7 + $0x4c] sm:$0xf]
        %v3399 = vld [vmem:[%s7 + $0x50] sm:$0xf]
        %v3400 = vld [vmem:[%s7 + $0x54] sm:$0xf]
        %v3401 = vld [vmem:[%s7 + $0x58] sm:$0xf]
        %v3402 = vld [vmem:[%s7 + $0x5c] sm:$0xf]
        %v3403 = vld [vmem:[%s7 + $0x60] sm:$0xf]
        %v3404 = vld [vmem:[%s7 + $0x64] sm:$0xf]
        %v3405 = vld [vmem:[%s7 + $0x68] sm:$0xf]
        %v3406 = vld [vmem:[%s7 + $0x6c] sm:$0xf]
        %v3407 = vld [vmem:[%s7 + $0x70] sm:$0xf]
        %v3408 = vld [vmem:[%s7 + $0x74] sm:$0xf]
        %v3409 = vld [vmem:[%s7 + $0x78] sm:$0xf]
        %v3410 = vld [vmem:[%s7 + $0x7c] sm:$0xf]
        %v3411 = vld [vmem:[%s8] sm:$0x1]
        %v3413 = vlaneseq
        %v3414 = vshrl.u32 %v3413, 7
        %v3415 = vsub.s32 0, %v3414
        %v3416 = vrot.slane %v3411, %v3415
        %v3450 = vunpack.c.l.b16 %v3379
        %v3451 = vunpack.c.l.b16 %v3380
        %v3452 = vunpack.c.l.b16 %v3381
        %v3453 = vunpack.c.l.b16 %v3382
        %v3454 = vunpack.c.l.b16 %v3383
        %v3455 = vunpack.c.l.b16 %v3384
        %v3456 = vunpack.c.l.b16 %v3385
        %v3457 = vunpack.c.l.b16 %v3386
        %v3458 = vunpack.c.l.b16 %v3387
        %v3459 = vunpack.c.l.b16 %v3388
        %v3460 = vunpack.c.l.b16 %v3389
        %v3461 = vunpack.c.l.b16 %v3390
        %v3462 = vunpack.c.l.b16 %v3391
        %v3463 = vunpack.c.l.b16 %v3392
        %v3464 = vunpack.c.l.b16 %v3393
        %v3465 = vunpack.c.l.b16 %v3394
        %v3466 = vunpack.c.l.b16 %v3395
        %v3467 = vunpack.c.l.b16 %v3396
        %v3468 = vunpack.c.l.b16 %v3397
        %v3469 = vunpack.c.l.b16 %v3398
        %v3470 = vunpack.c.l.b16 %v3399
        %v3471 = vunpack.c.l.b16 %v3400
        %v3472 = vunpack.c.l.b16 %v3401
        %v3473 = vunpack.c.l.b16 %v3402
        %v3474 = vunpack.c.l.b16 %v3403
        %v3475 = vunpack.c.l.b16 %v3404
        %v3476 = vunpack.c.l.b16 %v3405
        %v3477 = vunpack.c.l.b16 %v3406
        %v3478 = vunpack.c.l.b16 %v3407
        %v3479 = vunpack.c.l.b16 %v3408
        %v3480 = vunpack.c.l.b16 %v3409
        %v3481 = vunpack.c.l.b16 %v3410
        %v3482 = vpack.c.b16 %v3451, %v3450
        %v3483 = vpack.c.b16 %v3453, %v3452
        %v3484 = vpack.c.b16 %v3455, %v3454
        %v3485 = vpack.c.b16 %v3457, %v3456
        %v3486 = vpack.c.b16 %v3459, %v3458
        %v3487 = vpack.c.b16 %v3461, %v3460
        %v3488 = vpack.c.b16 %v3463, %v3462
        %v3489 = vpack.c.b16 %v3465, %v3464
        %v3490 = vpack.c.b16 %v3467, %v3466
        %v3491 = vpack.c.b16 %v3469, %v3468
        %v3492 = vpack.c.b16 %v3471, %v3470
        %v3493 = vpack.c.b16 %v3473, %v3472
        %v3494 = vpack.c.b16 %v3475, %v3474
        %v3495 = vpack.c.b16 %v3477, %v3476
        %v3496 = vpack.c.b16 %v3479, %v3478
        %v3497 = vpack.c.b16 %v3481, %v3480
        %3514 = vmatprep.subr.bf16.mxu0 0
        %3515 = vmatpush1.bf16.msra.mxu0 %v3489
        %3516 = vmatprep.subr.bf16.mxu0 0
        %3517 = vmatpush1.bf16.msra.mxu0 %v3488
        %3518 = vmatprep.subr.bf16.mxu0 0
        %3519 = vmatpush1.bf16.msra.mxu0 %v3487
        %3520 = vmatprep.subr.bf16.mxu0 0
        %3521 = vmatpush1.bf16.msra.mxu0 %v3486
        %3522 = vmatprep.subr.bf16.mxu0 0
        %3523 = vmatpush1.bf16.msra.mxu0 %v3485
        %3524 = vmatprep.subr.bf16.mxu0 0
        %3525 = vmatpush1.bf16.msra.mxu0 %v3484
        %3526 = vmatprep.subr.bf16.mxu0 0
        %3527 = vmatpush1.bf16.msra.mxu0 %v3483
        %3528 = vmatprep.subr.bf16.mxu0 0
        %3529 = vmatpush1.bf16.msra.mxu0 %v3482
        %3530 = vmatprep.subr.bf16.mxu0 0
        %3531 = vmatpush2.bf16.msra.mxu0 %v3497
        %3532 = vmatprep.subr.bf16.mxu0 0
        %3533 = vmatpush2.bf16.msra.mxu0 %v3496
        %3534 = vmatprep.subr.bf16.mxu0 0
        %3535 = vmatpush2.bf16.msra.mxu0 %v3495
        %3536 = vmatprep.subr.bf16.mxu0 0
        %3537 = vmatpush2.bf16.msra.mxu0 %v3494
        %3538 = vmatprep.subr.bf16.mxu0 0
        %3539 = vmatpush2.bf16.msra.mxu0 %v3493
        %3540 = vmatprep.subr.bf16.mxu0 0
        %3541 = vmatpush2.bf16.msra.mxu0 %v3492
        %3542 = vmatprep.subr.bf16.mxu0 0
        %3543 = vmatpush2.bf16.msra.mxu0 %v3491
        %3544 = vmatprep.subr.bf16.mxu0 0
        %3545 = vmatpush2.bf16.msra.mxu0 %v3490
        %3546 = vmatprep.mubr.bf16.mxu0 %v3364
        %3547 = vmatmul.mubr.bf16.gmra.mxu0 %v3363
        %v3548 = vpop.f32.mrf.mxu0
        %v3549 = vadd.f32 %v3416, %v3548
        %v3550 = vpop.f32.mrf.mxu0
        %v3551 = vpop.f32.mrf.mxu0
        %v3552 = vadd.f32 %v3416, %v3551
        %v3553 = vpop.f32.mrf.mxu0
        %3554 = vmatprep.mubr.bf16.mxu0 %v3366
        %3555 = vmatmul.mubr.bf16.gmra.mxu0 %v3365
        %v3556 = vpop.f32.mrf.mxu0
        %v3557 = vadd.f32 %v3416, %v3556
        %v3558 = vpop.f32.mrf.mxu0
        %v3559 = vpop.f32.mrf.mxu0
        %v3560 = vadd.f32 %v3416, %v3559
        %v3561 = vpop.f32.mrf.mxu0
        %3562 = vmatprep.mubr.bf16.mxu0 %v3368
        %3563 = vmatmul.mubr.bf16.gmra.mxu0 %v3367
        %v3564 = vpop.f32.mrf.mxu0
        %v3565 = vadd.f32 %v3416, %v3564
        %v3566 = vpop.f32.mrf.mxu0
        %v3567 = vpop.f32.mrf.mxu0
        %v3568 = vadd.f32 %v3416, %v3567
        %v3569 = vpop.f32.mrf.mxu0
        %3570 = vmatprep.mubr.bf16.mxu0 %v3370
        %3571 = vmatmul.mubr.bf16.gmra.mxu0 %v3369
        %v3572 = vpop.f32.mrf.mxu0
        %v3573 = vadd.f32 %v3416, %v3572
        %v3574 = vpop.f32.mrf.mxu0
        %v3575 = vpop.f32.mrf.mxu0
        %v3576 = vadd.f32 %v3416, %v3575
        %v3577 = vpop.f32.mrf.mxu0
        %3578 = vmatprep.mubr.bf16.mxu0 %v3372
        %3579 = vmatmul.mubr.bf16.gmra.mxu0 %v3371
        %v3580 = vpop.f32.mrf.mxu0
        %v3581 = vadd.f32 %v3416, %v3580
        %v3582 = vpop.f32.mrf.mxu0
        %v3583 = vpop.f32.mrf.mxu0
        %v3584 = vadd.f32 %v3416, %v3583
        %v3585 = vpop.f32.mrf.mxu0
        %3586 = vmatprep.mubr.bf16.mxu0 %v3374
        %3587 = vmatmul.mubr.bf16.gmra.mxu0 %v3373
        %v3588 = vpop.f32.mrf.mxu0
        %v3589 = vadd.f32 %v3416, %v3588
        %v3590 = vpop.f32.mrf.mxu0
        %v3591 = vpop.f32.mrf.mxu0
        %v3592 = vadd.f32 %v3416, %v3591
        %v3593 = vpop.f32.mrf.mxu0
        %3594 = vmatprep.mubr.bf16.mxu0 %v3376
        %3595 = vmatmul.mubr.bf16.gmra.mxu0 %v3375
        %v3596 = vpop.f32.mrf.mxu0
        %v3597 = vadd.f32 %v3416, %v3596
        %v3598 = vpop.f32.mrf.mxu0
        %v3599 = vpop.f32.mrf.mxu0
        %v3600 = vadd.f32 %v3416, %v3599
        %v3601 = vpop.f32.mrf.mxu0
        %3602 = vmatprep.mubr.bf16.mxu0 %v3378
        %3603 = vmatmul.mubr.bf16.gmra.mxu0 %v3377
        %v3604 = vpop.f32.mrf.mxu0
        %v3605 = vadd.f32 %v3416, %v3604
        %v3606 = vpop.f32.mrf.mxu0
        %v3607 = vpop.f32.mrf.mxu0
        %v3608 = vadd.f32 %v3416, %v3607
        %v3609 = vpop.f32.mrf.mxu0
        %3610 = vdwg.mxu0
        %v3611 = vadd.f32 %v2622, %v3549
        %v3612 = vadd.f32 %v2623, %v3552
        %v3613 = vadd.f32 %v2624, %v3557
        %v3614 = vadd.f32 %v2625, %v3560
        %v3615 = vadd.f32 %v2626, %v3565
        %v3616 = vadd.f32 %v2627, %v3568
        %v3617 = vadd.f32 %v2628, %v3573
        %v3618 = vadd.f32 %v2629, %v3576
        %v3619 = vadd.f32 %v2630, %v3581
        %v3620 = vadd.f32 %v2631, %v3584
        %v3621 = vadd.f32 %v2632, %v3589
        %v3622 = vadd.f32 %v2633, %v3592
        %v3623 = vadd.f32 %v2634, %v3597
        %v3624 = vadd.f32 %v2635, %v3600
        %v3625 = vadd.f32 %v2636, %v3605
        %v3626 = vadd.f32 %v2637, %v3608
        %s3627 = scalar_lea.vmem %s366, 128 [#allocation7]
        %3628 = vst [vmem:[%s3627] sm:$0xff] %v3611
        %3629 = vst [vmem:[%s3627 + $0x8] sm:$0xff] %v3612
        %3630 = vst [vmem:[%s3627 + $0x10] sm:$0xff] %v3613
        %3631 = vst [vmem:[%s3627 + $0x18] sm:$0xff] %v3614
        %3632 = vst [vmem:[%s3627 + $0x20] sm:$0xff] %v3615
        %3633 = vst [vmem:[%s3627 + $0x28] sm:$0xff] %v3616
        %3634 = vst [vmem:[%s3627 + $0x30] sm:$0xff] %v3617
        %3635 = vst [vmem:[%s3627 + $0x38] sm:$0xff] %v3618
        %3636 = vst [vmem:[%s3627 + $0x40] sm:$0xff] %v3619
        %3637 = vst [vmem:[%s3627 + $0x48] sm:$0xff] %v3620
        %3638 = vst [vmem:[%s3627 + $0x50] sm:$0xff] %v3621
        %3639 = vst [vmem:[%s3627 + $0x58] sm:$0xff] %v3622
        %3640 = vst [vmem:[%s3627 + $0x60] sm:$0xff] %v3623
        %3641 = vst [vmem:[%s3627 + $0x68] sm:$0xff] %v3624
        %3642 = vst [vmem:[%s3627 + $0x70] sm:$0xff] %v3625
        %3643 = vst [vmem:[%s3627 + $0x78] sm:$0xff] %v3626
        %s3644 = sand.u32 %s229, 1
        %s3645 = scalar_lea.sflag [#allocation4], %s3644
        %s3646 = sand.u32 %s229, 1
        %s3647 = smul.addr %s3646, 256
        %s3648 = scalar_lea.vmem [#allocation7], %s3647
        // Predicated region
        $region65: #{tpu_custom_call.1} parent=55 // pred_check
          %p3649 = pneg %p239
        $region66: #{tpu_custom_call.1} parent=55 // pred_check_branch
          %3651 = sbr.rel (%p3649) target = $region68
        $region67: #{tpu_custom_call.1} parent=55 // pred_region
          %s3652 = smul.u32 2, %s27
          %s3654 = ssub.s32 4096, 4096
          %3655 = vsyncadd %s3645, %s3654
          %s3656 = smul.addr %s3652, 16
          %s3657 = smul.addr %s3656, 128
          %s3658 = scalar_lea.hbm %s9, %s3657
          %s3659 = sshll.u32 %s3648, 4
          %s3660 = int_to_ptr.vmem [resolvable:$true] %s3659
          %3665 = dma.vmem_to_hbm [thread:$0]  %s3660, 4096, %s3658, %s3645, 128, 128, 8
        $region68: #{tpu_custom_call.1} parent=55 // pred_fallthru
          _
      $region56: #{tpu_custom_call.1} parent=5 // pred_fallthru
        _
      %p3666 = scmp.le.s32.totalorder 2, %s22
      // Predicated region
      $region69: #{tpu_custom_call.1} parent=5 // pred_check
        %p3667 = pneg %p3666
      $region70: #{tpu_custom_call.1} parent=5 // pred_check_branch
        %3669 = sbr.rel (%p3667) target = $region72
      $region71: #{tpu_custom_call.1} parent=5 // pred_region
        %s3670 = ssub.s32 %s22, 2
        // Predicated region
        $region73: #{tpu_custom_call.1} parent=71 // pred_check
          %p3671 = pneg %p245
        $region74: #{tpu_custom_call.1} parent=71 // pred_check_branch
          %3673 = sbr.rel (%p3671) target = $region76
        $region75: #{tpu_custom_call.1} parent=71 // pred_region
          %s3674 = sand.u32 %s230, 1
          %s3675 = scalar_lea.sflag [#allocation4], %s3674
          %s3676 = sand.u32 %s230, 1
          %s3677 = smul.addr %s3676, 256
          %s3678 = scalar_lea.vmem [#allocation7], %s3677
          %3679 = dma.done %s3675, 4096
        $region76: #{tpu_custom_call.1} parent=71 // pred_fallthru
          _
      $region72: #{tpu_custom_call.1} parent=5 // pred_fallthru
        _
    $region6: #{tpu_custom_call.1} parent=1 // loop_footer
      %s26 = sadd.s32 1, %s22
    $region7: #{tpu_custom_call.1} parent=1 // loop_footer_branch
      %21 = sbr.rel target = $region3
    $region8: #{tpu_custom_call.1} parent=1 // loop_exit
      _
    %3680 = vsyncpa [#allocation3], 1
    %s3681 = scalar_lea.sflag [#allocation3], 1
    %3682 = vsyncpa %s3681, 1
    %3683 = vsyncpa [#allocation6], 1
    %3684 = vsyncpa [#allocation4], 1
    %s3685 = scalar_lea.sflag [#allocation4], 1
    %3686 = vsyncpa %s3685, 1

</llo_original>
